<compile_context>
chip_gen: v6e
topology: v6e:2x2x1
jax: 0.10.0
libtpu: 0.0.40
codegen_flags: <defaults>
</compile_context>

<pallas_src>
import math

import jax
import jax.numpy as jnp
from jax.experimental import pallas as pl
from jax.experimental.pallas import tpu as pltpu

# ---- model config (matches the PyTorch module at small scale) ----
BATCH = 2
SEQ = 16
HIDDEN = 64
NUM_Q_HEADS = 8
NUM_KV_HEADS = 4
HEAD_DIM = HIDDEN // NUM_Q_HEADS          # 8
KV_REP = NUM_Q_HEADS // NUM_KV_HEADS      # 2
KV_DIM = HEAD_DIM * NUM_KV_HEADS          # 32
QKV_OUT = HIDDEN + 2 * KV_DIM             # 128 (fused q|k|v projection width)
INTERMEDIATE = 128
HP = 128                                  # hidden padded to a full 128-lane vreg
EPS = 1e-6
INV_H = 1.0 / HIDDEN
SCALE = 1.0 / math.sqrt(HEAD_DIM)
NEG_INF = -1e30
INV_SQRT2 = 1.0 / math.sqrt(2.0)


def transformer_layer_kernel(x_ref, mask_ref, ln1w_ref, wqkv_ref, bqkv_ref,
                             wo_ref, bo_ref, ln2w_ref,
                             w1_ref, b1_ref, w2_ref, b2_ref, out_ref):
    """One grid step processes `nb` batch rows' full [S, HP] sequences (nb is 1 on
    2-TensorCore chips, B on single-TC chips)."""
    nb = x_ref.shape[0]                                       # static
    rows = nb * SEQ
    x = x_ref[...].reshape(rows, HP)                          # leading-dim merge (free)

    # ---- RMSNorm 1 (divide by true hidden size; pad lanes contribute 0) ----
    inv_rms1 = jax.lax.rsqrt(jnp.sum(x * x, axis=-1, keepdims=True) * INV_H + EPS)
    xn = ln1w_ref[...] * (x * inv_rms1)                       # [rows, HP], pad lanes zero

    # ---- fused Q|K|V projection: one lane-dense [rows,128]x[128,128] matmul ----
    # 1/sqrt(d) is already folded into the q columns of wqkv/bqkv (init-time).
    qkv = jnp.dot(xn, wqkv_ref[...], preferred_element_type=jnp.float32) + bqkv_ref[...]

    mask = mask_ref[...]                                      # [S,S] additive causal (resident)

    # ---- GQA attention: grouped per kv-head, 4 batched MXU pushes with M=KV_REP*S=32 ----
    ctx_rows = []
    for b in range(nb):                                       # static unroll, nb in {1,2}
        qkv_t = qkv[b * SEQ:(b + 1) * SEQ].T                  # feature-major [128, S]
        # leading-dim feature splits (layout preserving): q feature = (g*KV_REP+rep)*D+d
        q_grds = qkv_t[:HIDDEN].reshape(NUM_KV_HEADS, KV_REP, HEAD_DIM, SEQ)        # [4,2,8,S]
        k_gds = qkv_t[HIDDEN:HIDDEN + KV_DIM].reshape(NUM_KV_HEADS, HEAD_DIM, SEQ)  # [4,8,S]
        v_gds = qkv_t[HIDDEN + KV_DIM:].reshape(NUM_KV_HEADS, HEAD_DIM, SEQ)        # [4,8,S]

        q_grsd = jnp.swapaxes(q_grds, 2, 3)                   # [4,2,S,8]  minor-2 swap
        k_gsd = jnp.swapaxes(k_gds, 1, 2)                     # [4,S,8]    minor-2 swap

        # scores: contraction on the minor dim, natural dot_general output order
        s = jnp.einsum("grqd,gkd->grqk", q_grsd, k_gsd,
                       preferred_element_type=jnp.float32) + mask[None, None]       # [4,2,S,S]
        m = jnp.max(s, axis=-1, keepdims=True)
        e = jnp.exp(s - m)
        # exact reciprocal: approx=True (~2^-12 rel err) is borderline vs the 1e-4 check
        p = e * pl.reciprocal(jnp.sum(e, axis=-1, keepdims=True), approx=False)

        # PV in the natural output order (g, d, rep, q) -> feature = (g*D+d)*KV_REP+rep;
        # Wo's rows were permuted at init to this order, so no extra transpose is needed.
        ctx = jnp.einsum("gdk,grqk->gdrq", v_gds, p,
                         preferred_element_type=jnp.float32)                         # [4,8,2,S]
        ctx_rows.append(ctx.reshape(HIDDEN, SEQ).T)           # [S, 64]
    ctx_all = ctx_rows[0] if nb == 1 else jnp.concatenate(ctx_rows, axis=0)          # [rows,64]

    attn_out = jnp.dot(ctx_all, wo_ref[...], preferred_element_type=jnp.float32) + bo_ref[...]
    h1 = x + attn_out                                         # [rows, HP]; pad lanes stay zero

    # ---- RMSNorm 2 ----
    inv_rms2 = jax.lax.rsqrt(jnp.sum(h1 * h1, axis=-1, keepdims=True) * INV_H + EPS)
    h1n = ln2w_ref[...] * (h1 * inv_rms2)

    # ---- FFN: fc1 -> exact GELU (erf, matches nn.GELU()) -> fc2 ----
    f1 = jnp.dot(h1n, w1_ref[...], preferred_element_type=jnp.float32) + b1_ref[...]
    g = 0.5 * f1 * (1.0 + jax.lax.erf(f1 * INV_SQRT2))
    f2 = jnp.dot(g, w2_ref[...], preferred_element_type=jnp.float32) + b2_ref[...]

    out_ref[...] = (h1 + f2).reshape(nb, SEQ, HP)             # lane-dense [*,128] store


def _cores_per_chip():
    """2 on chips with two TensorCores (v7x / megacore), else 1.  Detection failure
    falls back to the single-core (collapsed-grid) path, which is correct everywhere."""
    try:
        kind = (jax.devices()[0].device_kind or "").lower()
    except Exception:
        kind = ""
    return 2 if any(t in kind for t in ("v7", "7x", "v4", "v5p")) else 1


def make_transformer_layer(params, batch=BATCH):
    """One-time weight prep + cached pallas_call.  Returns a jitted forward(x)."""
    pad_h = HP - HIDDEN

    # fused Q|K|V with the attention scale folded into the q columns; explicit zero pad.
    wqkv = jnp.concatenate([params["wq"] * SCALE, params["wk"], params["wv"]], axis=1)  # [64,128]
    wqkv = jnp.pad(wqkv, ((0, pad_h), (0, 0)))                                          # [128,128]
    bqkv = jnp.concatenate([params["bq"] * SCALE, params["bk"], params["bv"]], axis=1)  # [1,128]

    # permute Wo's input rows from torch order f=(g*KV_REP+rep)*D+d to the kernel's
    # ctx feature order f'=(g*D+d)*KV_REP+rep  (ctx @ wo_perm == ctx_torch @ wo).
    fp = jnp.arange(HIDDEN)
    g_idx = fp // (HEAD_DIM * KV_REP)
    d_idx = (fp // KV_REP) % HEAD_DIM
    rep_idx = fp % KV_REP
    perm = (g_idx * KV_REP + rep_idx) * HEAD_DIM + d_idx
    wo = jnp.pad(params["wo"][perm, :], ((0, 0), (0, pad_h)))                           # [64,128]

    ln1w = jnp.pad(params["ln1_w"], ((0, 0), (0, pad_h)))                               # [1,128]
    ln2w = jnp.pad(params["ln2_w"], ((0, 0), (0, pad_h)))                               # [1,128]
    bo = jnp.pad(params["bo"], ((0, 0), (0, pad_h)))                                    # [1,128]
    w1 = jnp.pad(params["w1"], ((0, pad_h), (0, 0)))                                    # [128,128]
    b1 = params["b1"]                                                                   # [1,128]
    w2 = jnp.pad(params["w2"], ((0, 0), (0, pad_h)))                                    # [128,128]
    b2 = jnp.pad(params["b2"], ((0, 0), (0, pad_h)))                                    # [1,128]

    # resident additive causal mask (built once, ~1 KiB VMEM)
    row = jax.lax.broadcasted_iota(jnp.int32, (SEQ, SEQ), 0)
    col = jax.lax.broadcasted_iota(jnp.int32, (SEQ, SEQ), 1)
    mask = jnp.where(col > row, jnp.float32(NEG_INF), jnp.float32(0.0))

    weights = (mask, ln1w, wqkv, bqkv, wo, bo, ln2w, w1, b1, w2, b2)

    # grid: one batch row per step on 2-TC chips (parallel over cores); collapsed to a
    # single step on single-TC chips (saves a grid step, doubles matmul M-occupancy).
    num_steps = batch if (_cores_per_chip() >= 2 and batch > 1) else 1
    nb = batch // num_steps

    def resident(shape):
        nd = len(shape)
        return pl.BlockSpec(shape, lambda i, nd=nd: (0,) * nd)

    in_specs = [
        pl.BlockSpec((nb, SEQ, HP), lambda i: (i, 0, 0)),         # x
        resident((SEQ, SEQ)),                                     # causal mask
        resident((1, HP)),                                        # ln1 weight
        resident((HP, QKV_OUT)), resident((1, QKV_OUT)),          # fused Wqkv, bqkv
        resident((HIDDEN, HP)), resident((1, HP)),                # Wo (row-permuted), bo
        resident((1, HP)),                                        # ln2 weight
        resident((HP, INTERMEDIATE)), resident((1, INTERMEDIATE)),  # W1, b1
        resident((INTERMEDIATE, HP)), resident((1, HP)),          # W2, b2
    ]
    # TODO(synk): at realistic HIDDEN/SEQ the resident weight specs must be tiled over K/N,
    # single-buffered (pipeline_mode=pl.Buffered(1)), operands cast to bf16 for the MXU,
    # and vmem_limit_bytes capped (v7x has 64 MiB physical VMEM).

    call = pl.pallas_call(
        transformer_layer_kernel,
        out_shape=jax.ShapeDtypeStruct((batch, SEQ, HP), jnp.float32),
        grid=(num_steps,),
        in_specs=in_specs,
        out_specs=pl.BlockSpec((nb, SEQ, HP), lambda i: (i, 0, 0)),
        compiler_params=pltpu.CompilerParams(dimension_semantics=("parallel",)),
    )

    @jax.jit
    def forward(x):
        x_pad = jnp.pad(x, ((0, 0), (0, 0), (0, pad_h)))          # [B,S,128]
        out_pad = call(x_pad, *weights)
        # TODO(synk): drop this slice if downstream consumers accept the padded [B,S,128] layout.
        return out_pad[:, :, :HIDDEN]

    return forward


# ---------------- pure-JAX reference (for correctness check) ----------------
def ref_forward(x, p):
    def rmsnorm(x, w):
        rms = jnp.sqrt(jnp.mean(x * x, axis=-1, keepdims=True) + EPS)
        return w * (x / rms)

    B, S, H = x.shape
    xn = rmsnorm(x, p["ln1_w"][0])
    q = xn @ p["wq"] + p["bq"][0]
    k = xn @ p["wk"] + p["bk"][0]
    v = xn @ p["wv"] + p["bv"][0]
    q = q.reshape(B, S, NUM_Q_HEADS, HEAD_DIM).transpose(0, 2, 1, 3)
    k = k.reshape(B, S, NUM_KV_HEADS, HEAD_DIM).transpose(0, 2, 1, 3)
    v = v.reshape(B, S, NUM_KV_HEADS, HEAD_DIM).transpose(0, 2, 1, 3)
    k = jnp.repeat(k, KV_REP, axis=1)
    v = jnp.repeat(v, KV_REP, axis=1)
    s = jnp.einsum("bhqd,bhkd->bhqk", q, k) / math.sqrt(HEAD_DIM)
    causal = jnp.triu(jnp.ones((S, S), dtype=bool), k=1)
    s = jnp.where(causal[None, None], -jnp.inf, s)
    probs = jax.nn.softmax(s, axis=-1)
    ctx = jnp.einsum("bhqk,bhkd->bhqd", probs, v)
    ctx = ctx.transpose(0, 2, 1, 3).reshape(B, S, H)
    attn_out = ctx @ p["wo"] + p["bo"][0]
    h1 = x + attn_out
    h1n = rmsnorm(h1, p["ln2_w"][0])
    f1 = h1n @ p["w1"] + p["b1"][0]
    g = 0.5 * f1 * (1.0 + jax.lax.erf(f1 / math.sqrt(2.0)))
    f2 = g @ p["w2"] + p["b2"][0]
    return h1 + f2


def init_params(key):
    """Deterministic init, PyTorch-Linear-style uniform(+-1/sqrt(fan_in)).
    Weights are stored pre-transposed as [in, out]."""
    keys = jax.random.split(key, 16)

    def lin(kw, kb, fan_in, fan_out):
        bound = 1.0 / math.sqrt(fan_in)
        w = jax.random.uniform(kw, (fan_in, fan_out), jnp.float32, -bound, bound)
        b = jax.random.uniform(kb, (1, fan_out), jnp.float32, -bound, bound)
        return w, b

    wq, bq = lin(keys[0], keys[1], HIDDEN, HIDDEN)
    wk, bk = lin(keys[2], keys[3], HIDDEN, KV_DIM)
    wv, bv = lin(keys[4], keys[5], HIDDEN, KV_DIM)
    wo, bo = lin(keys[6], keys[7], HIDDEN, HIDDEN)
    w1, b1 = lin(keys[8], keys[9], HIDDEN, INTERMEDIATE)
    w2, b2 = lin(keys[10], keys[11], INTERMEDIATE, HIDDEN)
    return {
        "ln1_w": jnp.ones((1, HIDDEN), jnp.float32),
        "ln2_w": jnp.ones((1, HIDDEN), jnp.float32),
        "wq": wq, "bq": bq, "wk": wk, "bk": bk, "wv": wv, "bv": bv,
        "wo": wo, "bo": bo, "w1": w1, "b1": b1, "w2": w2, "b2": b2,
    }


if __name__ == "__main__":
    key = jax.random.PRNGKey(0)
    k_x, k_p = jax.random.split(key)
    x = jax.random.normal(k_x, (BATCH, SEQ, HIDDEN), dtype=jnp.float32)
    params = init_params(k_p)

    forward = make_transformer_layer(params)   # one-time weight prep / fusion / padding
    out = jax.block_until_ready(forward(x))

    ref = ref_forward(x, params)
    assert out.shape == (BATCH, SEQ, HIDDEN)
    assert jnp.allclose(out, ref, atol=1e-4, rtol=1e-4), \
        f"max abs err {jnp.max(jnp.abs(out - ref))}"
    # TODO(synk): dropout is treated as identity (eval mode); no RNG-matched train-mode dropout.
    print("KERNEL_OK")
</pallas_src>

<mosaic_0001>
module attributes {stable_mosaic.version = 11 : i64} {
  func.func @transformer_layer_kernel(%arg0: i32, %arg1: memref<2x16x128xf32, #tpu.memory_space<vmem>>, %arg2: memref<16x16xf32, #tpu.memory_space<vmem>>, %arg3: memref<1x128xf32, #tpu.memory_space<vmem>>, %arg4: memref<128x128xf32, #tpu.memory_space<vmem>>, %arg5: memref<1x128xf32, #tpu.memory_space<vmem>>, %arg6: memref<64x128xf32, #tpu.memory_space<vmem>>, %arg7: memref<1x128xf32, #tpu.memory_space<vmem>>, %arg8: memref<1x128xf32, #tpu.memory_space<vmem>>, %arg9: memref<128x128xf32, #tpu.memory_space<vmem>>, %arg10: memref<1x128xf32, #tpu.memory_space<vmem>>, %arg11: memref<128x128xf32, #tpu.memory_space<vmem>>, %arg12: memref<1x128xf32, #tpu.memory_space<vmem>>, %arg13: memref<2x16x128xf32, #tpu.memory_space<vmem>>) attributes {dimension_semantics = [#tpu.dimension_semantics<parallel>], iteration_bounds = array<i64: 1>, scalar_prefetch = 0 : i64, scratch_operands = 0 : i64, tpu.core_type = #tpu.core_type<tc>, window_params = [{transform_indices = @transform_0, window_bounds = array<i64: 2, 16, 128>}, {pipeline_mode = #tpu.pipeline_mode<synchronous>, transform_indices = @transform_1, window_bounds = array<i64: 16, 16>}, {pipeline_mode = #tpu.pipeline_mode<synchronous>, transform_indices = @transform_2, window_bounds = array<i64: 1, 128>}, {pipeline_mode = #tpu.pipeline_mode<synchronous>, transform_indices = @transform_3, window_bounds = array<i64: 128, 128>}, {pipeline_mode = #tpu.pipeline_mode<synchronous>, transform_indices = @transform_4, window_bounds = array<i64: 1, 128>}, {pipeline_mode = #tpu.pipeline_mode<synchronous>, transform_indices = @transform_5, window_bounds = array<i64: 64, 128>}, {pipeline_mode = #tpu.pipeline_mode<synchronous>, transform_indices = @transform_6, window_bounds = array<i64: 1, 128>}, {pipeline_mode = #tpu.pipeline_mode<synchronous>, transform_indices = @transform_7, window_bounds = array<i64: 1, 128>}, {pipeline_mode = #tpu.pipeline_mode<synchronous>, transform_indices = @transform_8, window_bounds = array<i64: 128, 128>}, {pipeline_mode = #tpu.pipeline_mode<synchronous>, transform_indices = @transform_9, window_bounds = array<i64: 1, 128>}, {pipeline_mode = #tpu.pipeline_mode<synchronous>, transform_indices = @transform_10, window_bounds = array<i64: 128, 128>}, {pipeline_mode = #tpu.pipeline_mode<synchronous>, transform_indices = @transform_11, window_bounds = array<i64: 1, 128>}, {transform_indices = @transform_12, window_bounds = array<i64: 2, 16, 128>}]} {
    %c0 = arith.constant 0 : index
    %c0_0 = arith.constant 0 : index
    %c0_1 = arith.constant 0 : index
    %0 = vector.load %arg1[%c0, %c0_0, %c0_1] : memref<2x16x128xf32, #tpu.memory_space<vmem>>, vector<2x16x128xf32>
    %1 = vector.shape_cast %0 : vector<2x16x128xf32> to vector<32x128xf32>
    %2 = arith.mulf %1, %1 : vector<32x128xf32>
    %cst = arith.constant dense<0.000000e+00> : vector<32xf32>
    %3 = vector.multi_reduction <add>, %2, %cst [1] : vector<32x128xf32> to vector<32xf32>
    %4 = vector.shape_cast %3 : vector<32xf32> to vector<32x1xf32>
    %cst_2 = arith.constant 1.562500e-02 : f32
    %5 = vector.broadcast %cst_2 : f32 to vector<32x1xf32>
    %6 = arith.mulf %4, %5 : vector<32x1xf32>
    %cst_3 = arith.constant 9.99999997E-7 : f32
    %7 = vector.broadcast %cst_3 : f32 to vector<32x1xf32>
    %8 = arith.addf %6, %7 : vector<32x1xf32>
    %9 = math.rsqrt %8 : vector<32x1xf32>
    %c0_4 = arith.constant 0 : index
    %c0_5 = arith.constant 0 : index
    %10 = vector.load %arg3[%c0_4, %c0_5] : memref<1x128xf32, #tpu.memory_space<vmem>>, vector<1x128xf32>
    %11 = vector.broadcast %9 : vector<32x1xf32> to vector<32x128xf32>
    %12 = arith.mulf %1, %11 : vector<32x128xf32>
    %13 = vector.broadcast %10 : vector<1x128xf32> to vector<32x128xf32>
    %14 = arith.mulf %13, %12 : vector<32x128xf32>
    %c0_6 = arith.constant 0 : index
    %c0_7 = arith.constant 0 : index
    %15 = vector.load %arg4[%c0_6, %c0_7] : memref<128x128xf32, #tpu.memory_space<vmem>>, vector<128x128xf32>
    %cst_8 = arith.constant dense<0.000000e+00> : vector<32x128xf32>
    %16 = tpu.matmul %14, %15, %cst_8 {dimension_numbers = #tpu.dot_dimension_numbers<[1], [0], [0], [1], [0, 0, 1, 1], [], []>} : vector<32x128xf32>, vector<128x128xf32>, vector<32x128xf32> -> vector<32x128xf32>
    %c0_9 = arith.constant 0 : index
    %c0_10 = arith.constant 0 : index
    %17 = vector.load %arg5[%c0_9, %c0_10] : memref<1x128xf32, #tpu.memory_space<vmem>>, vector<1x128xf32>
    %18 = vector.broadcast %17 : vector<1x128xf32> to vector<32x128xf32>
    %19 = arith.addf %16, %18 : vector<32x128xf32>
    %c0_11 = arith.constant 0 : index
    %c0_12 = arith.constant 0 : index
    %20 = vector.load %arg2[%c0_11, %c0_12] : memref<16x16xf32, #tpu.memory_space<vmem>>, vector<16x16xf32>
    %21 = vector.extract_strided_slice %19 {offsets = [0, 0], sizes = [16, 128], strides = [1, 1]} : vector<32x128xf32> to vector<16x128xf32>
    %22 = tpu.transpose %21, [1, 0] : vector<16x128xf32> -> vector<128x16xf32>
    %23 = vector.extract_strided_slice %22 {offsets = [0, 0], sizes = [64, 16], strides = [1, 1]} : vector<128x16xf32> to vector<64x16xf32>
    %24 = vector.shape_cast %23 : vector<64x16xf32> to vector<4x2x8x16xf32>
    %25 = vector.extract_strided_slice %22 {offsets = [64, 0], sizes = [32, 16], strides = [1, 1]} : vector<128x16xf32> to vector<32x16xf32>
    %26 = vector.shape_cast %25 : vector<32x16xf32> to vector<4x8x16xf32>
    %27 = vector.extract_strided_slice %22 {offsets = [96, 0], sizes = [32, 16], strides = [1, 1]} : vector<128x16xf32> to vector<32x16xf32>
    %28 = vector.shape_cast %27 : vector<32x16xf32> to vector<4x8x16xf32>
    %29 = tpu.transpose %24, [0, 1, 3, 2] : vector<4x2x8x16xf32> -> vector<4x2x16x8xf32>
    %30 = tpu.transpose %26, [0, 2, 1] : vector<4x8x16xf32> -> vector<4x16x8xf32>
    "tpu.trace_start"() <{level = 10 : i32, message = "grqd,gkd->grqk"}> : () -> ()
    %cst_13 = arith.constant dense<0.000000e+00> : vector<4x2x16x16xf32>
    %31 = tpu.matmul %29, %30, %cst_13 {dimension_numbers = #tpu.dot_dimension_numbers<[3], [2], [1, 2], [1], [0, 0, 0, 1, 0, 2, 1, 1], [0], [0]>} : vector<4x2x16x8xf32>, vector<4x16x8xf32>, vector<4x2x16x16xf32> -> vector<4x2x16x16xf32>
    "tpu.trace_stop"() : () -> ()
    %32 = vector.shape_cast %20 : vector<16x16xf32> to vector<1x1x16x16xf32>
    %33 = vector.broadcast %32 : vector<1x1x16x16xf32> to vector<4x2x16x16xf32>
    %34 = arith.addf %31, %33 : vector<4x2x16x16xf32>
    %cst_14 = arith.constant dense<0xFF800000> : vector<4x2x16xf32>
    %35 = vector.multi_reduction <maximumf>, %34, %cst_14 [3] : vector<4x2x16x16xf32> to vector<4x2x16xf32>
    %36 = vector.shape_cast %35 : vector<4x2x16xf32> to vector<4x2x16x1xf32>
    %37 = vector.broadcast %36 : vector<4x2x16x1xf32> to vector<4x2x16x16xf32>
    %38 = arith.subf %34, %37 : vector<4x2x16x16xf32>
    %39 = math.exp %38 : vector<4x2x16x16xf32>
    %cst_15 = arith.constant dense<0.000000e+00> : vector<4x2x16xf32>
    %40 = vector.multi_reduction <add>, %39, %cst_15 [3] : vector<4x2x16x16xf32> to vector<4x2x16xf32>
    %41 = vector.shape_cast %40 : vector<4x2x16xf32> to vector<4x2x16x1xf32>
    %42 = tpu.reciprocal %41 : vector<4x2x16x1xf32> -> vector<4x2x16x1xf32>
    %43 = vector.broadcast %42 : vector<4x2x16x1xf32> to vector<4x2x16x16xf32>
    %44 = arith.mulf %39, %43 : vector<4x2x16x16xf32>
    "tpu.trace_start"() <{level = 10 : i32, message = "gdk,grqk->gdrq"}> : () -> ()
    %cst_16 = arith.constant dense<0.000000e+00> : vector<4x8x2x16xf32>
    %45 = tpu.matmul %28, %44, %cst_16 {dimension_numbers = #tpu.dot_dimension_numbers<[2], [3], [1], [1, 2], [0, 0, 0, 1, 1, 1, 1, 2], [0], [0]>} : vector<4x8x16xf32>, vector<4x2x16x16xf32>, vector<4x8x2x16xf32> -> vector<4x8x2x16xf32>
    "tpu.trace_stop"() : () -> ()
    %46 = vector.shape_cast %45 : vector<4x8x2x16xf32> to vector<64x16xf32>
    %47 = tpu.transpose %46, [1, 0] : vector<64x16xf32> -> vector<16x64xf32>
    %48 = vector.extract_strided_slice %19 {offsets = [16, 0], sizes = [16, 128], strides = [1, 1]} : vector<32x128xf32> to vector<16x128xf32>
    %49 = tpu.transpose %48, [1, 0] : vector<16x128xf32> -> vector<128x16xf32>
    %50 = vector.extract_strided_slice %49 {offsets = [0, 0], sizes = [64, 16], strides = [1, 1]} : vector<128x16xf32> to vector<64x16xf32>
    %51 = vector.shape_cast %50 : vector<64x16xf32> to vector<4x2x8x16xf32>
    %52 = vector.extract_strided_slice %49 {offsets = [64, 0], sizes = [32, 16], strides = [1, 1]} : vector<128x16xf32> to vector<32x16xf32>
    %53 = vector.shape_cast %52 : vector<32x16xf32> to vector<4x8x16xf32>
    %54 = vector.extract_strided_slice %49 {offsets = [96, 0], sizes = [32, 16], strides = [1, 1]} : vector<128x16xf32> to vector<32x16xf32>
    %55 = vector.shape_cast %54 : vector<32x16xf32> to vector<4x8x16xf32>
    %56 = tpu.transpose %51, [0, 1, 3, 2] : vector<4x2x8x16xf32> -> vector<4x2x16x8xf32>
    %57 = tpu.transpose %53, [0, 2, 1] : vector<4x8x16xf32> -> vector<4x16x8xf32>
    "tpu.trace_start"() <{level = 10 : i32, message = "grqd,gkd->grqk"}> : () -> ()
    %cst_17 = arith.constant dense<0.000000e+00> : vector<4x2x16x16xf32>
    %58 = tpu.matmul %56, %57, %cst_17 {dimension_numbers = #tpu.dot_dimension_numbers<[3], [2], [1, 2], [1], [0, 0, 0, 1, 0, 2, 1, 1], [0], [0]>} : vector<4x2x16x8xf32>, vector<4x16x8xf32>, vector<4x2x16x16xf32> -> vector<4x2x16x16xf32>
    "tpu.trace_stop"() : () -> ()
    %59 = vector.shape_cast %20 : vector<16x16xf32> to vector<1x1x16x16xf32>
    %60 = vector.broadcast %59 : vector<1x1x16x16xf32> to vector<4x2x16x16xf32>
    %61 = arith.addf %58, %60 : vector<4x2x16x16xf32>
    %cst_18 = arith.constant dense<0xFF800000> : vector<4x2x16xf32>
    %62 = vector.multi_reduction <maximumf>, %61, %cst_18 [3] : vector<4x2x16x16xf32> to vector<4x2x16xf32>
    %63 = vector.shape_cast %62 : vector<4x2x16xf32> to vector<4x2x16x1xf32>
    %64 = vector.broadcast %63 : vector<4x2x16x1xf32> to vector<4x2x16x16xf32>
    %65 = arith.subf %61, %64 : vector<4x2x16x16xf32>
    %66 = math.exp %65 : vector<4x2x16x16xf32>
    %cst_19 = arith.constant dense<0.000000e+00> : vector<4x2x16xf32>
    %67 = vector.multi_reduction <add>, %66, %cst_19 [3] : vector<4x2x16x16xf32> to vector<4x2x16xf32>
    %68 = vector.shape_cast %67 : vector<4x2x16xf32> to vector<4x2x16x1xf32>
    %69 = tpu.reciprocal %68 : vector<4x2x16x1xf32> -> vector<4x2x16x1xf32>
    %70 = vector.broadcast %69 : vector<4x2x16x1xf32> to vector<4x2x16x16xf32>
    %71 = arith.mulf %66, %70 : vector<4x2x16x16xf32>
    "tpu.trace_start"() <{level = 10 : i32, message = "gdk,grqk->gdrq"}> : () -> ()
    %cst_20 = arith.constant dense<0.000000e+00> : vector<4x8x2x16xf32>
    %72 = tpu.matmul %55, %71, %cst_20 {dimension_numbers = #tpu.dot_dimension_numbers<[2], [3], [1], [1, 2], [0, 0, 0, 1, 1, 1, 1, 2], [0], [0]>} : vector<4x8x16xf32>, vector<4x2x16x16xf32>, vector<4x8x2x16xf32> -> vector<4x8x2x16xf32>
    "tpu.trace_stop"() : () -> ()
    %73 = vector.shape_cast %72 : vector<4x8x2x16xf32> to vector<64x16xf32>
    %74 = tpu.transpose %73, [1, 0] : vector<64x16xf32> -> vector<16x64xf32>
    %75 = tpu.concatenate %47, %74 in 0 : vector<16x64xf32>, vector<16x64xf32> -> vector<32x64xf32>
    %c0_21 = arith.constant 0 : index
    %c0_22 = arith.constant 0 : index
    %76 = vector.load %arg6[%c0_21, %c0_22] : memref<64x128xf32, #tpu.memory_space<vmem>>, vector<64x128xf32>
    %cst_23 = arith.constant dense<0.000000e+00> : vector<32x128xf32>
    %77 = tpu.matmul %75, %76, %cst_23 {dimension_numbers = #tpu.dot_dimension_numbers<[1], [0], [0], [1], [0, 0, 1, 1], [], []>} : vector<32x64xf32>, vector<64x128xf32>, vector<32x128xf32> -> vector<32x128xf32>
    %c0_24 = arith.constant 0 : index
    %c0_25 = arith.constant 0 : index
    %78 = vector.load %arg7[%c0_24, %c0_25] : memref<1x128xf32, #tpu.memory_space<vmem>>, vector<1x128xf32>
    %79 = vector.broadcast %78 : vector<1x128xf32> to vector<32x128xf32>
    %80 = arith.addf %77, %79 : vector<32x128xf32>
    %81 = arith.addf %1, %80 : vector<32x128xf32>
    %82 = arith.mulf %81, %81 : vector<32x128xf32>
    %cst_26 = arith.constant dense<0.000000e+00> : vector<32xf32>
    %83 = vector.multi_reduction <add>, %82, %cst_26 [1] : vector<32x128xf32> to vector<32xf32>
    %84 = vector.shape_cast %83 : vector<32xf32> to vector<32x1xf32>
    %cst_27 = arith.constant 1.562500e-02 : f32
    %85 = vector.broadcast %cst_27 : f32 to vector<32x1xf32>
    %86 = arith.mulf %84, %85 : vector<32x1xf32>
    %cst_28 = arith.constant 9.99999997E-7 : f32
    %87 = vector.broadcast %cst_28 : f32 to vector<32x1xf32>
    %88 = arith.addf %86, %87 : vector<32x1xf32>
    %89 = math.rsqrt %88 : vector<32x1xf32>
    %c0_29 = arith.constant 0 : index
    %c0_30 = arith.constant 0 : index
    %90 = vector.load %arg8[%c0_29, %c0_30] : memref<1x128xf32, #tpu.memory_space<vmem>>, vector<1x128xf32>
    %91 = vector.broadcast %89 : vector<32x1xf32> to vector<32x128xf32>
    %92 = arith.mulf %81, %91 : vector<32x128xf32>
    %93 = vector.broadcast %90 : vector<1x128xf32> to vector<32x128xf32>
    %94 = arith.mulf %93, %92 : vector<32x128xf32>
    %c0_31 = arith.constant 0 : index
    %c0_32 = arith.constant 0 : index
    %95 = vector.load %arg9[%c0_31, %c0_32] : memref<128x128xf32, #tpu.memory_space<vmem>>, vector<128x128xf32>
    %cst_33 = arith.constant dense<0.000000e+00> : vector<32x128xf32>
    %96 = tpu.matmul %94, %95, %cst_33 {dimension_numbers = #tpu.dot_dimension_numbers<[1], [0], [0], [1], [0, 0, 1, 1], [], []>} : vector<32x128xf32>, vector<128x128xf32>, vector<32x128xf32> -> vector<32x128xf32>
    %c0_34 = arith.constant 0 : index
    %c0_35 = arith.constant 0 : index
    %97 = vector.load %arg10[%c0_34, %c0_35] : memref<1x128xf32, #tpu.memory_space<vmem>>, vector<1x128xf32>
    %98 = vector.broadcast %97 : vector<1x128xf32> to vector<32x128xf32>
    %99 = arith.addf %96, %98 : vector<32x128xf32>
    %cst_36 = arith.constant 5.000000e-01 : f32
    %100 = vector.broadcast %cst_36 : f32 to vector<32x128xf32>
    %101 = arith.mulf %100, %99 : vector<32x128xf32>
    %cst_37 = arith.constant 0.707106769 : f32
    %102 = vector.broadcast %cst_37 : f32 to vector<32x128xf32>
    %103 = arith.mulf %99, %102 : vector<32x128xf32>
    %104 = math.erf %103 : vector<32x128xf32>
    %cst_38 = arith.constant 1.000000e+00 : f32
    %105 = vector.broadcast %cst_38 : f32 to vector<32x128xf32>
    %106 = arith.addf %105, %104 : vector<32x128xf32>
    %107 = arith.mulf %101, %106 : vector<32x128xf32>
    %c0_39 = arith.constant 0 : index
    %c0_40 = arith.constant 0 : index
    %108 = vector.load %arg11[%c0_39, %c0_40] : memref<128x128xf32, #tpu.memory_space<vmem>>, vector<128x128xf32>
    %cst_41 = arith.constant dense<0.000000e+00> : vector<32x128xf32>
    %109 = tpu.matmul %107, %108, %cst_41 {dimension_numbers = #tpu.dot_dimension_numbers<[1], [0], [0], [1], [0, 0, 1, 1], [], []>} : vector<32x128xf32>, vector<128x128xf32>, vector<32x128xf32> -> vector<32x128xf32>
    %c0_42 = arith.constant 0 : index
    %c0_43 = arith.constant 0 : index
    %110 = vector.load %arg12[%c0_42, %c0_43] : memref<1x128xf32, #tpu.memory_space<vmem>>, vector<1x128xf32>
    %111 = vector.broadcast %110 : vector<1x128xf32> to vector<32x128xf32>
    %112 = arith.addf %109, %111 : vector<32x128xf32>
    %113 = arith.addf %81, %112 : vector<32x128xf32>
    %114 = vector.shape_cast %113 : vector<32x128xf32> to vector<2x16x128xf32>
    %c0_44 = arith.constant 0 : index
    %c0_45 = arith.constant 0 : index
    %c0_46 = arith.constant 0 : index
    %115 = vector.load %arg13[%c0_44, %c0_45, %c0_46] : memref<2x16x128xf32, #tpu.memory_space<vmem>>, vector<2x16x128xf32>
    tpu.vector_store %arg13[%c0_44, %c0_45, %c0_46], %114 {strides = array<i32>} : memref<2x16x128xf32, #tpu.memory_space<vmem>>, vector<2x16x128xf32>,
    return
  }
  func.func @transform_0(%arg0: i32) -> (i32, i32, i32) {
    %c0_i32 = arith.constant 0 : i32
    %c0_i32_0 = arith.constant 0 : i32
    %c0_i32_1 = arith.constant 0 : i32
    return %arg0, %c0_i32, %c0_i32_0 : i32, i32, i32
  }
  func.func @transform_1(%arg0: i32) -> (i32, i32) {
    %c0_i32 = arith.constant 0 : i32
    %c0_i32_0 = arith.constant 0 : i32
    %c0_i32_1 = arith.constant 0 : i32
    return %c0_i32, %c0_i32_0 : i32, i32
  }
  func.func @transform_2(%arg0: i32) -> (i32, i32) {
    %c0_i32 = arith.constant 0 : i32
    %c0_i32_0 = arith.constant 0 : i32
    %c0_i32_1 = arith.constant 0 : i32
    return %c0_i32, %c0_i32_0 : i32, i32
  }
  func.func @transform_3(%arg0: i32) -> (i32, i32) {
    %c0_i32 = arith.constant 0 : i32
    %c0_i32_0 = arith.constant 0 : i32
    %c0_i32_1 = arith.constant 0 : i32
    return %c0_i32, %c0_i32_0 : i32, i32
  }
  func.func @transform_4(%arg0: i32) -> (i32, i32) {
    %c0_i32 = arith.constant 0 : i32
    %c0_i32_0 = arith.constant 0 : i32
    %c0_i32_1 = arith.constant 0 : i32
    return %c0_i32, %c0_i32_0 : i32, i32
  }
  func.func @transform_5(%arg0: i32) -> (i32, i32) {
    %c0_i32 = arith.constant 0 : i32
    %c0_i32_0 = arith.constant 0 : i32
    %c0_i32_1 = arith.constant 0 : i32
    return %c0_i32, %c0_i32_0 : i32, i32
  }
  func.func @transform_6(%arg0: i32) -> (i32, i32) {
    %c0_i32 = arith.constant 0 : i32
    %c0_i32_0 = arith.constant 0 : i32
    %c0_i32_1 = arith.constant 0 : i32
    return %c0_i32, %c0_i32_0 : i32, i32
  }
  func.func @transform_7(%arg0: i32) -> (i32, i32) {
    %c0_i32 = arith.constant 0 : i32
    %c0_i32_0 = arith.constant 0 : i32
    %c0_i32_1 = arith.constant 0 : i32
    return %c0_i32, %c0_i32_0 : i32, i32
  }
  func.func @transform_8(%arg0: i32) -> (i32, i32) {
    %c0_i32 = arith.constant 0 : i32
    %c0_i32_0 = arith.constant 0 : i32
    %c0_i32_1 = arith.constant 0 : i32
    return %c0_i32, %c0_i32_0 : i32, i32
  }
  func.func @transform_9(%arg0: i32) -> (i32, i32) {
    %c0_i32 = arith.constant 0 : i32
    %c0_i32_0 = arith.constant 0 : i32
    %c0_i32_1 = arith.constant 0 : i32
    return %c0_i32, %c0_i32_0 : i32, i32
  }
  func.func @transform_10(%arg0: i32) -> (i32, i32) {
    %c0_i32 = arith.constant 0 : i32
    %c0_i32_0 = arith.constant 0 : i32
    %c0_i32_1 = arith.constant 0 : i32
    return %c0_i32, %c0_i32_0 : i32, i32
  }
  func.func @transform_11(%arg0: i32) -> (i32, i32) {
    %c0_i32 = arith.constant 0 : i32
    %c0_i32_0 = arith.constant 0 : i32
    %c0_i32_1 = arith.constant 0 : i32
    return %c0_i32, %c0_i32_0 : i32, i32
  }
  func.func @transform_12(%arg0: i32) -> (i32, i32, i32) {
    %c0_i32 = arith.constant 0 : i32
    %c0_i32_0 = arith.constant 0 : i32
    %c0_i32_1 = arith.constant 0 : i32
    return %arg0, %c0_i32, %c0_i32_0 : i32, i32, i32
  }
}

</mosaic_0001>

<llo_original>
// kernel: forward.1
$region0: #{forward.1}
  #allocation0 [shape = 'u32[]', space=smem, size = 0x4, offset = 0x4, fixed_abs, tag = 'smem constant byte address 0x4 - core index']
  #allocation1 [shape = 'u32[144,128]{1,0:T(1,128)}', space=vmem, size = 0x12000, scoped, tag = 'internal scratch']
  %s0 = inlined_call_operand.vmem [shape: f32[2,16,128], index: 0, kind: input, shape index: {}]
  %s1 = inlined_call_operand.hbm [shape: f32[16,16], index: 1, kind: input, shape index: {}]
  %s2 = inlined_call_operand.vmem [shape: f32[1,128], index: 2, kind: input, shape index: {}, may-alias: {2,7}]
  %s3 = inlined_call_operand.hbm [shape: f32[128,128], index: 3, kind: input, shape index: {}]
  %s4 = inlined_call_operand.vmem [shape: f32[1,128], index: 4, kind: input, shape index: {}]
  %s5 = inlined_call_operand.vmem [shape: f32[64,128], index: 5, kind: input, shape index: {}]
  %s6 = inlined_call_operand.vmem [shape: f32[1,128], index: 6, kind: input, shape index: {}]
  %s7 = inlined_call_operand.vmem [shape: f32[1,128], index: 7, kind: input, shape index: {}, may-alias: {2,7}]
  %s8 = inlined_call_operand.hbm [shape: f32[128,128], index: 8, kind: input, shape index: {}]
  %s9 = inlined_call_operand.vmem [shape: f32[1,128], index: 9, kind: input, shape index: {}]
  %s10 = inlined_call_operand.hbm [shape: f32[128,128], index: 10, kind: input, shape index: {}]
  %s11 = inlined_call_operand.vmem [shape: f32[1,128], index: 11, kind: input, shape index: {}]
  %s12 = inlined_call_operand.hbm [shape: f32[2,16,128], index: 12, kind: output, shape index: {}]
  %s13 = sld [smem:[#allocation0]]
  $region74: #{forward.1} parent=0
    _
  %s15 = ssub.s32 1, %s13
  %s16 = scalar_select 0, %s15, %s13
  $region1: #{forward.1} parent=0
    #allocation2 [shape = 'u8[8192]{0}', space=vmem, size = 0x2000, scoped, tag = 'input window, operand 1, single buffered']
    #allocation3 [shape = 's32[1]{0}', space=sflag, size = 0x4, scoped, tag = 'scoped memory for forward.1']
    #allocation4 [shape = 's32[1]{0}', space=sflag, size = 0x4, scoped, tag = 'scoped memory for forward.1']
    #allocation5 [shape = 'u8[65536]{0}', space=vmem, size = 0x10000, scoped, tag = 'input window, operand 3, single buffered']
    #allocation6 [shape = 's32[1]{0}', space=sflag, size = 0x4, scoped, tag = 'scoped memory for forward.1']
    #allocation7 [shape = 'u8[65536]{0}', space=vmem, size = 0x10000, scoped, tag = 'input window, operand 8, single buffered']
    #allocation8 [shape = 'u8[65536]{0}', space=vmem, size = 0x10000, scoped, tag = 'input window, operand 10, single buffered']
    #allocation9 [shape = 's32[1]{0}', space=sflag, size = 0x4, scoped, tag = 'scoped memory for forward.1']
    #allocation10 [shape = 'u8[16384]{0}', space=vmem, size = 0x4000, scoped, tag = 'output window, operand 0, single buffered']
    %17 = vsyncpa [#allocation3], 0
    %18 = vsyncpa [#allocation6], 0
    %19 = vsyncpa [#allocation9], 0
    %20 = vsyncpa [#allocation4], 0
    // Predicated region
    $region2: #{forward.1} parent=1 // pred_check
      _
    $region3: #{forward.1} parent=1 // pred_check_branch
      %22 = sbr.rel (0) target = $region5
    $region4: #{forward.1} parent=1 // pred_region
      _
    $region5: #{forward.1} parent=1 // pred_fallthru
      _
    // Predicated region
    $region6: #{forward.1} parent=1 // pred_check
      _
    $region7: #{forward.1} parent=1 // pred_check_branch
      %24 = sbr.rel (0) target = $region9
    $region8: #{forward.1} parent=1 // pred_region
      %s26 = ssub.s32 256, 256
      %27 = vsyncadd [#allocation3], %s26
      %s28 = sshll.u32 [#allocation2], 4
      %s29 = int_to_ptr.vmem [resolvable:$true] %s28
      %34 = dma.hbm_to_vmem [thread:$0]  %s1, 256, %s29, [#allocation3], 128, 128, 8
    $region9: #{forward.1} parent=1 // pred_fallthru
      _
    // Predicated region
    $region10: #{forward.1} parent=1 // pred_check
      _
    $region11: #{forward.1} parent=1 // pred_check_branch
      %36 = sbr.rel (0) target = $region13
    $region12: #{forward.1} parent=1 // pred_region
      _
    $region13: #{forward.1} parent=1 // pred_fallthru
      _
    // Predicated region
    $region14: #{forward.1} parent=1 // pred_check
      _
    $region15: #{forward.1} parent=1 // pred_check_branch
      %38 = sbr.rel (0) target = $region17
    $region16: #{forward.1} parent=1 // pred_region
      %s40 = ssub.s32 2048, 2048
      %41 = vsyncadd [#allocation6], %s40
      %s42 = sshll.u32 [#allocation5], 4
      %s43 = int_to_ptr.vmem [resolvable:$true] %s42
      %48 = dma.hbm_to_vmem [thread:$0]  %s3, 2048, %s43, [#allocation6], 128, 128, 8
    $region17: #{forward.1} parent=1 // pred_fallthru
      _
    // Predicated region
    $region18: #{forward.1} parent=1 // pred_check
      _
    $region19: #{forward.1} parent=1 // pred_check_branch
      %50 = sbr.rel (0) target = $region21
    $region20: #{forward.1} parent=1 // pred_region
      _
    $region21: #{forward.1} parent=1 // pred_fallthru
      _
    // Predicated region
    $region22: #{forward.1} parent=1 // pred_check
      _
    $region23: #{forward.1} parent=1 // pred_check_branch
      %52 = sbr.rel (0) target = $region25
    $region24: #{forward.1} parent=1 // pred_region
      _
    $region25: #{forward.1} parent=1 // pred_fallthru
      _
    // Predicated region
    $region26: #{forward.1} parent=1 // pred_check
      _
    $region27: #{forward.1} parent=1 // pred_check_branch
      %54 = sbr.rel (0) target = $region29
    $region28: #{forward.1} parent=1 // pred_region
      _
    $region29: #{forward.1} parent=1 // pred_fallthru
      _
    // Predicated region
    $region30: #{forward.1} parent=1 // pred_check
      _
    $region31: #{forward.1} parent=1 // pred_check_branch
      %56 = sbr.rel (0) target = $region33
    $region32: #{forward.1} parent=1 // pred_region
      _
    $region33: #{forward.1} parent=1 // pred_fallthru
      _
    // Predicated region
    $region34: #{forward.1} parent=1 // pred_check
      _
    $region35: #{forward.1} parent=1 // pred_check_branch
      %58 = sbr.rel (0) target = $region37
    $region36: #{forward.1} parent=1 // pred_region
      %s60 = ssub.s32 2048, 2048
      %61 = vsyncadd [#allocation6], %s60
      %s62 = sshll.u32 [#allocation7], 4
      %s63 = int_to_ptr.vmem [resolvable:$true] %s62
      %68 = dma.hbm_to_vmem [thread:$0]  %s8, 2048, %s63, [#allocation6], 128, 128, 8
    $region37: #{forward.1} parent=1 // pred_fallthru
      _
    // Predicated region
    $region38: #{forward.1} parent=1 // pred_check
      _
    $region39: #{forward.1} parent=1 // pred_check_branch
      %70 = sbr.rel (0) target = $region41
    $region40: #{forward.1} parent=1 // pred_region
      _
    $region41: #{forward.1} parent=1 // pred_fallthru
      _
    // Predicated region
    $region42: #{forward.1} parent=1 // pred_check
      _
    $region43: #{forward.1} parent=1 // pred_check_branch
      %72 = sbr.rel (0) target = $region45
    $region44: #{forward.1} parent=1 // pred_region
      %s74 = ssub.s32 2048, 2048
      %75 = vsyncadd [#allocation9], %s74
      %s76 = sshll.u32 [#allocation8], 4
      %s77 = int_to_ptr.vmem [resolvable:$true] %s76
      %82 = dma.hbm_to_vmem [thread:$0]  %s10, 2048, %s77, [#allocation9], 128, 128, 8
    $region45: #{forward.1} parent=1 // pred_fallthru
      _
    // Predicated region
    $region46: #{forward.1} parent=1 // pred_check
      _
    $region47: #{forward.1} parent=1 // pred_check_branch
      %84 = sbr.rel (0) target = $region49
    $region48: #{forward.1} parent=1 // pred_region
      _
    $region49: #{forward.1} parent=1 // pred_fallthru
      _
    // Predicated region
    $region50: #{forward.1} parent=1 // pred_check
      _
    $region51: #{forward.1} parent=1 // pred_check_branch
      %86 = sbr.rel (0) target = $region53
    $region52: #{forward.1} parent=1 // pred_region
      %87 = dma.done [#allocation3], 256
    $region53: #{forward.1} parent=1 // pred_fallthru
      _
    // Predicated region
    $region54: #{forward.1} parent=1 // pred_check
      _
    $region55: #{forward.1} parent=1 // pred_check_branch
      %89 = sbr.rel (0) target = $region57
    $region56: #{forward.1} parent=1 // pred_region
      %90 = dma.done [#allocation6], 2048
    $region57: #{forward.1} parent=1 // pred_fallthru
      _
    // Predicated region
    $region58: #{forward.1} parent=1 // pred_check
      _
    $region59: #{forward.1} parent=1 // pred_check_branch
      %92 = sbr.rel (0) target = $region61
    $region60: #{forward.1} parent=1 // pred_region
      %93 = dma.done [#allocation6], 2048
    $region61: #{forward.1} parent=1 // pred_fallthru
      _
    // Predicated region
    $region62: #{forward.1} parent=1 // pred_check
      _
    $region63: #{forward.1} parent=1 // pred_check_branch
      %95 = sbr.rel (0) target = $region65
    $region64: #{forward.1} parent=1 // pred_region
      %96 = dma.done [#allocation9], 2048
    $region65: #{forward.1} parent=1 // pred_fallthru
      _
    %v97 = vld [vmem:[%s0] sm:$0xff]
    %v98 = vld [vmem:[%s0 + $0x8] sm:$0xff]
    %v99 = vld [vmem:[%s0 + $0x10] sm:$0xff]
    %v100 = vld [vmem:[%s0 + $0x18] sm:$0xff]
    %v101 = vmul.f32 %v97, %v97
    %v102 = vmul.f32 %v98, %v98
    %v103 = vmul.f32 %v99, %v99
    %v104 = vmul.f32 %v100, %v100
    %105 = vadd.xlane.f32.xlu0 %v101
    %v106 = vpop.xlane.xlu0 %105
    %107 = vadd.xlane.f32.xlu0 %v102
    %v108 = vpop.xlane.xlu0 %107
    %109 = vadd.xlane.f32.xlu0 %v103
    %v110 = vpop.xlane.xlu0 %109
    %111 = vadd.xlane.f32.xlu0 %v104
    %v112 = vpop.xlane.xlu0 %111
    %v113 = vmul.f32 %v106, 0.015625
    %v114 = vmul.f32 %v108, 0.015625
    %v115 = vmul.f32 %v110, 0.015625
    %v116 = vmul.f32 %v112, 0.015625
    %v117 = vadd.f32 %v113, 1e-06
    %v118 = vadd.f32 %v114, 1e-06
    %v119 = vadd.f32 %v115, 1e-06
    %v120 = vadd.f32 %v116, 1e-06
    %v121 = vrsqrt.pop %v117
    %v122 = vrsqrt.pop %v118
    %v123 = vrsqrt.pop %v119
    %v124 = vrsqrt.pop %v120
    %v125 = vld [vmem:[%s2] sm:$0x1]
    %v126 = vmul.f32 %v97, %v121
    %v127 = vmul.f32 %v98, %v122
    %v128 = vmul.f32 %v99, %v123
    %v129 = vmul.f32 %v100, %v124
    %v131 = vlaneseq
    %v132 = vshrl.u32 %v131, 7
    %v133 = vsub.s32 0, %v132
    %v134 = vrot.slane %v125, %v133
    %v136 = vmul.f32 %v134, %v126
    %v137 = vmul.f32 %v134, %v127
    %v138 = vmul.f32 %v134, %v128
    %v139 = vmul.f32 %v134, %v129
    %v140 = vld [vmem:[#allocation5] sm:$0xff]
    %v141 = vld [vmem:[#allocation5 + $0x8] sm:$0xff]
    %v142 = vld [vmem:[#allocation5 + $0x10] sm:$0xff]
    %v143 = vld [vmem:[#allocation5 + $0x18] sm:$0xff]
    %v144 = vld [vmem:[#allocation5 + $0x20] sm:$0xff]
    %v145 = vld [vmem:[#allocation5 + $0x28] sm:$0xff]
    %v146 = vld [vmem:[#allocation5 + $0x30] sm:$0xff]
    %v147 = vld [vmem:[#allocation5 + $0x38] sm:$0xff]
    %v148 = vld [vmem:[#allocation5 + $0x40] sm:$0xff]
    %v149 = vld [vmem:[#allocation5 + $0x48] sm:$0xff]
    %v150 = vld [vmem:[#allocation5 + $0x50] sm:$0xff]
    %v151 = vld [vmem:[#allocation5 + $0x58] sm:$0xff]
    %v152 = vld [vmem:[#allocation5 + $0x60] sm:$0xff]
    %v153 = vld [vmem:[#allocation5 + $0x68] sm:$0xff]
    %v154 = vld [vmem:[#allocation5 + $0x70] sm:$0xff]
    %v155 = vld [vmem:[#allocation5 + $0x78] sm:$0xff]
    %v156 = vld [vmem:[%s4] sm:$0x1]
    %v158 = vlaneseq
    %v159 = vshrl.u32 %v158, 7
    %v160 = vsub.s32 0, %v159
    %v161 = vrot.slane %v156, %v160
    %163 = vmatprep.subr.mxu0 0.0
    %164 = vmatpush1.msra.mxu0 %v155
    %165 = vmatprep.subr.mxu0 0.0
    %166 = vmatpush1.msra.mxu0 %v154
    %167 = vmatprep.subr.mxu0 0.0
    %168 = vmatpush1.msra.mxu0 %v153
    %169 = vmatprep.subr.mxu0 0.0
    %170 = vmatpush1.msra.mxu0 %v152
    %171 = vmatprep.subr.mxu0 0.0
    %172 = vmatpush1.msra.mxu0 %v151
    %173 = vmatprep.subr.mxu0 0.0
    %174 = vmatpush1.msra.mxu0 %v150
    %175 = vmatprep.subr.mxu0 0.0
    %176 = vmatpush1.msra.mxu0 %v149
    %177 = vmatprep.subr.mxu0 0.0
    %178 = vmatpush1.msra.mxu0 %v148
    %179 = vmatprep.subr.mxu0 0.0
    %180 = vmatpush1.msra.mxu0 %v147
    %181 = vmatprep.subr.mxu0 0.0
    %182 = vmatpush1.msra.mxu0 %v146
    %183 = vmatprep.subr.mxu0 0.0
    %184 = vmatpush1.msra.mxu0 %v145
    %185 = vmatprep.subr.mxu0 0.0
    %186 = vmatpush1.msra.mxu0 %v144
    %187 = vmatprep.subr.mxu0 0.0
    %188 = vmatpush1.msra.mxu0 %v143
    %189 = vmatprep.subr.mxu0 0.0
    %190 = vmatpush1.msra.mxu0 %v142
    %191 = vmatprep.subr.mxu0 0.0
    %192 = vmatpush1.msra.mxu0 %v141
    %193 = vmatprep.subr.mxu0 0.0
    %194 = vmatpush1.msra.mxu0 %v140
    %195 = vmatprep.subr.mxu0 0.0
    %196 = vmatpush2.msra.mxu0 0.0
    %197 = vmatprep.subr.mxu0 0.0
    %198 = vmatpush2.msra.mxu0 0.0
    %199 = vmatprep.subr.mxu0 0.0
    %200 = vmatpush2.msra.mxu0 0.0
    %201 = vmatprep.subr.mxu0 0.0
    %202 = vmatpush2.msra.mxu0 0.0
    %203 = vmatprep.subr.mxu0 0.0
    %204 = vmatpush2.msra.mxu0 0.0
    %205 = vmatprep.subr.mxu0 0.0
    %206 = vmatpush2.msra.mxu0 0.0
    %207 = vmatprep.subr.mxu0 0.0
    %208 = vmatpush2.msra.mxu0 0.0
    %209 = vmatprep.subr.mxu0 0.0
    %210 = vmatpush2.msra.mxu0 0.0
    %211 = vmatprep.subr.mxu0 0.0
    %212 = vmatpush2.msra.mxu0 0.0
    %213 = vmatprep.subr.mxu0 0.0
    %214 = vmatpush2.msra.mxu0 0.0
    %215 = vmatprep.subr.mxu0 0.0
    %216 = vmatpush2.msra.mxu0 0.0
    %217 = vmatprep.subr.mxu0 0.0
    %218 = vmatpush2.msra.mxu0 0.0
    %219 = vmatprep.subr.mxu0 0.0
    %220 = vmatpush2.msra.mxu0 0.0
    %221 = vmatprep.subr.mxu0 0.0
    %222 = vmatpush2.msra.mxu0 0.0
    %223 = vmatprep.subr.mxu0 0.0
    %224 = vmatpush2.msra.mxu0 0.0
    %225 = vmatprep.subr.mxu0 0.0
    %226 = vmatpush2.msra.mxu0 0.0
    %227 = vmatprep.mubr.f32.mxu0 0.0
    %228 = vmatmul.mubr.f32.gmra.mxu0 %v136
    %v229 = vpop.f32.mrf.mxu0
    %v230 = vadd.f32 %v161, %v229
    %v231 = vpop.f32.mrf.mxu0
    %232 = vmatprep.mubr.f32.mxu0 0.0
    %233 = vmatmul.mubr.f32.gmra.mxu0 %v137
    %v234 = vpop.f32.mrf.mxu0
    %v235 = vadd.f32 %v161, %v234
    %v236 = vpop.f32.mrf.mxu0
    %237 = vmatprep.mubr.f32.mxu0 0.0
    %238 = vmatmul.mubr.f32.gmra.mxu0 %v138
    %v239 = vpop.f32.mrf.mxu0
    %v240 = vadd.f32 %v161, %v239
    %v241 = vpop.f32.mrf.mxu0
    %242 = vmatprep.mubr.f32.mxu0 0.0
    %243 = vmatmul.mubr.f32.gmra.mxu0 %v139
    %v244 = vpop.f32.mrf.mxu0
    %v245 = vadd.f32 %v161, %v244
    %v246 = vpop.f32.mrf.mxu0
    %247 = vdwg.mxu0
    %v248 = vld [vmem:[#allocation2] sm:$0xff]
    %v249 = vld [vmem:[#allocation2 + $0x8] sm:$0xff]
    %250 = vxpose.xlu0.b32.start [1/16] %v230, 128
    %251 = vxpose.xlu0.b32.cont [2/16] %v235, 128
    %252 = vxpose.xlu0.b32.cont [3/16] 0.0, 128
    %253 = vxpose.xlu0.b32.cont [4/16] 0.0, 128
    %254 = vxpose.xlu0.b32.cont [5/16] 0.0, 128
    %255 = vxpose.xlu0.b32.cont [6/16] 0.0, 128
    %256 = vxpose.xlu0.b32.cont [7/16] 0.0, 128
    %257 = vxpose.xlu0.b32.cont [8/16] 0.0, 128
    %258 = vxpose.xlu0.b32.cont [9/16] 0.0, 128
    %259 = vxpose.xlu0.b32.cont [10/16] 0.0, 128
    %260 = vxpose.xlu0.b32.cont [11/16] 0.0, 128
    %261 = vxpose.xlu0.b32.cont [12/16] 0.0, 128
    %262 = vxpose.xlu0.b32.cont [13/16] 0.0, 128
    %263 = vxpose.xlu0.b32.cont [14/16] 0.0, 128
    %264 = vxpose.xlu0.b32.cont [15/16] 0.0, 128
    %265 = vxpose.xlu0.b32.end [16/16] 0.0, 128
    %v266 = vpop.trf.xlu0
    %v267 = vpop.trf.xlu0
    %v268 = vpop.trf.xlu0
    %v269 = vpop.trf.xlu0
    %v270 = vpop.trf.xlu0
    %v271 = vpop.trf.xlu0
    %v272 = vpop.trf.xlu0
    %v273 = vpop.trf.xlu0
    %v274 = vpop.trf.xlu0
    %v275 = vpop.trf.xlu0
    %v276 = vpop.trf.xlu0
    %v277 = vpop.trf.xlu0
    %v278 = vpop.trf.xlu0
    %v279 = vpop.trf.xlu0
    %v280 = vpop.trf.xlu0
    %v281 = vpop.trf.xlu0
    %282 = vxpose.xlu0.b32.start [1/16] %v266, 128
    %283 = vxpose.xlu0.b32.cont [2/16] 0.0, 128
    %284 = vxpose.xlu0.b32.cont [3/16] 0.0, 128
    %285 = vxpose.xlu0.b32.cont [4/16] 0.0, 128
    %286 = vxpose.xlu0.b32.cont [5/16] 0.0, 128
    %287 = vxpose.xlu0.b32.cont [6/16] 0.0, 128
    %288 = vxpose.xlu0.b32.cont [7/16] 0.0, 128
    %289 = vxpose.xlu0.b32.cont [8/16] 0.0, 128
    %290 = vxpose.xlu0.b32.cont [9/16] 0.0, 128
    %291 = vxpose.xlu0.b32.cont [10/16] 0.0, 128
    %292 = vxpose.xlu0.b32.cont [11/16] 0.0, 128
    %293 = vxpose.xlu0.b32.cont [12/16] 0.0, 128
    %294 = vxpose.xlu0.b32.cont [13/16] 0.0, 128
    %295 = vxpose.xlu0.b32.cont [14/16] 0.0, 128
    %296 = vxpose.xlu0.b32.cont [15/16] 0.0, 128
    %297 = vxpose.xlu0.b32.end [16/16] 0.0, 128
    %v298 = vpop.trf.xlu0
    %v299 = vpop.trf.xlu0
    %v300 = vpop.trf.xlu0
    %v301 = vpop.trf.xlu0
    %v302 = vpop.trf.xlu0
    %v303 = vpop.trf.xlu0
    %v304 = vpop.trf.xlu0
    %v305 = vpop.trf.xlu0
    %v306 = vpop.trf.xlu0
    %v307 = vpop.trf.xlu0
    %v308 = vpop.trf.xlu0
    %v309 = vpop.trf.xlu0
    %v310 = vpop.trf.xlu0
    %v311 = vpop.trf.xlu0
    %v312 = vpop.trf.xlu0
    %v313 = vpop.trf.xlu0
    %314 = vxpose.xlu0.b32.start [1/16] %v267, 128
    %315 = vxpose.xlu0.b32.cont [2/16] 0.0, 128
    %316 = vxpose.xlu0.b32.cont [3/16] 0.0, 128
    %317 = vxpose.xlu0.b32.cont [4/16] 0.0, 128
    %318 = vxpose.xlu0.b32.cont [5/16] 0.0, 128
    %319 = vxpose.xlu0.b32.cont [6/16] 0.0, 128
    %320 = vxpose.xlu0.b32.cont [7/16] 0.0, 128
    %321 = vxpose.xlu0.b32.cont [8/16] 0.0, 128
    %322 = vxpose.xlu0.b32.cont [9/16] 0.0, 128
    %323 = vxpose.xlu0.b32.cont [10/16] 0.0, 128
    %324 = vxpose.xlu0.b32.cont [11/16] 0.0, 128
    %325 = vxpose.xlu0.b32.cont [12/16] 0.0, 128
    %326 = vxpose.xlu0.b32.cont [13/16] 0.0, 128
    %327 = vxpose.xlu0.b32.cont [14/16] 0.0, 128
    %328 = vxpose.xlu0.b32.cont [15/16] 0.0, 128
    %329 = vxpose.xlu0.b32.end [16/16] 0.0, 128
    %v330 = vpop.trf.xlu0
    %v331 = vpop.trf.xlu0
    %v332 = vpop.trf.xlu0
    %v333 = vpop.trf.xlu0
    %v334 = vpop.trf.xlu0
    %v335 = vpop.trf.xlu0
    %v336 = vpop.trf.xlu0
    %v337 = vpop.trf.xlu0
    %v338 = vpop.trf.xlu0
    %v339 = vpop.trf.xlu0
    %v340 = vpop.trf.xlu0
    %v341 = vpop.trf.xlu0
    %v342 = vpop.trf.xlu0
    %v343 = vpop.trf.xlu0
    %v344 = vpop.trf.xlu0
    %v345 = vpop.trf.xlu0
    %346 = vxpose.xlu0.b32.start [1/16] %v268, 128
    %347 = vxpose.xlu0.b32.cont [2/16] 0.0, 128
    %348 = vxpose.xlu0.b32.cont [3/16] 0.0, 128
    %349 = vxpose.xlu0.b32.cont [4/16] 0.0, 128
    %350 = vxpose.xlu0.b32.cont [5/16] 0.0, 128
    %351 = vxpose.xlu0.b32.cont [6/16] 0.0, 128
    %352 = vxpose.xlu0.b32.cont [7/16] 0.0, 128
    %353 = vxpose.xlu0.b32.cont [8/16] 0.0, 128
    %354 = vxpose.xlu0.b32.cont [9/16] 0.0, 128
    %355 = vxpose.xlu0.b32.cont [10/16] 0.0, 128
    %356 = vxpose.xlu0.b32.cont [11/16] 0.0, 128
    %357 = vxpose.xlu0.b32.cont [12/16] 0.0, 128
    %358 = vxpose.xlu0.b32.cont [13/16] 0.0, 128
    %359 = vxpose.xlu0.b32.cont [14/16] 0.0, 128
    %360 = vxpose.xlu0.b32.cont [15/16] 0.0, 128
    %361 = vxpose.xlu0.b32.end [16/16] 0.0, 128
    %v362 = vpop.trf.xlu0
    %v363 = vpop.trf.xlu0
    %v364 = vpop.trf.xlu0
    %v365 = vpop.trf.xlu0
    %v366 = vpop.trf.xlu0
    %v367 = vpop.trf.xlu0
    %v368 = vpop.trf.xlu0
    %v369 = vpop.trf.xlu0
    %v370 = vpop.trf.xlu0
    %v371 = vpop.trf.xlu0
    %v372 = vpop.trf.xlu0
    %v373 = vpop.trf.xlu0
    %v374 = vpop.trf.xlu0
    %v375 = vpop.trf.xlu0
    %v376 = vpop.trf.xlu0
    %v377 = vpop.trf.xlu0
    %378 = vxpose.xlu0.b32.start [1/16] %v269, 128
    %379 = vxpose.xlu0.b32.cont [2/16] 0.0, 128
    %380 = vxpose.xlu0.b32.cont [3/16] 0.0, 128
    %381 = vxpose.xlu0.b32.cont [4/16] 0.0, 128
    %382 = vxpose.xlu0.b32.cont [5/16] 0.0, 128
    %383 = vxpose.xlu0.b32.cont [6/16] 0.0, 128
    %384 = vxpose.xlu0.b32.cont [7/16] 0.0, 128
    %385 = vxpose.xlu0.b32.cont [8/16] 0.0, 128
    %386 = vxpose.xlu0.b32.cont [9/16] 0.0, 128
    %387 = vxpose.xlu0.b32.cont [10/16] 0.0, 128
    %388 = vxpose.xlu0.b32.cont [11/16] 0.0, 128
    %389 = vxpose.xlu0.b32.cont [12/16] 0.0, 128
    %390 = vxpose.xlu0.b32.cont [13/16] 0.0, 128
    %391 = vxpose.xlu0.b32.cont [14/16] 0.0, 128
    %392 = vxpose.xlu0.b32.cont [15/16] 0.0, 128
    %393 = vxpose.xlu0.b32.end [16/16] 0.0, 128
    %v394 = vpop.trf.xlu0
    %v395 = vpop.trf.xlu0
    %v396 = vpop.trf.xlu0
    %v397 = vpop.trf.xlu0
    %v398 = vpop.trf.xlu0
    %v399 = vpop.trf.xlu0
    %v400 = vpop.trf.xlu0
    %v401 = vpop.trf.xlu0
    %v402 = vpop.trf.xlu0
    %v403 = vpop.trf.xlu0
    %v404 = vpop.trf.xlu0
    %v405 = vpop.trf.xlu0
    %v406 = vpop.trf.xlu0
    %v407 = vpop.trf.xlu0
    %v408 = vpop.trf.xlu0
    %v409 = vpop.trf.xlu0
    %410 = vxpose.xlu0.b32.start [1/16] %v270, 128
    %411 = vxpose.xlu0.b32.cont [2/16] 0.0, 128
    %412 = vxpose.xlu0.b32.cont [3/16] 0.0, 128
    %413 = vxpose.xlu0.b32.cont [4/16] 0.0, 128
    %414 = vxpose.xlu0.b32.cont [5/16] 0.0, 128
    %415 = vxpose.xlu0.b32.cont [6/16] 0.0, 128
    %416 = vxpose.xlu0.b32.cont [7/16] 0.0, 128
    %417 = vxpose.xlu0.b32.cont [8/16] 0.0, 128
    %418 = vxpose.xlu0.b32.cont [9/16] 0.0, 128
    %419 = vxpose.xlu0.b32.cont [10/16] 0.0, 128
    %420 = vxpose.xlu0.b32.cont [11/16] 0.0, 128
    %421 = vxpose.xlu0.b32.cont [12/16] 0.0, 128
    %422 = vxpose.xlu0.b32.cont [13/16] 0.0, 128
    %423 = vxpose.xlu0.b32.cont [14/16] 0.0, 128
    %424 = vxpose.xlu0.b32.cont [15/16] 0.0, 128
    %425 = vxpose.xlu0.b32.end [16/16] 0.0, 128
    %v426 = vpop.trf.xlu0
    %v427 = vpop.trf.xlu0
    %v428 = vpop.trf.xlu0
    %v429 = vpop.trf.xlu0
    %v430 = vpop.trf.xlu0
    %v431 = vpop.trf.xlu0
    %v432 = vpop.trf.xlu0
    %v433 = vpop.trf.xlu0
    %v434 = vpop.trf.xlu0
    %v435 = vpop.trf.xlu0
    %v436 = vpop.trf.xlu0
    %v437 = vpop.trf.xlu0
    %v438 = vpop.trf.xlu0
    %v439 = vpop.trf.xlu0
    %v440 = vpop.trf.xlu0
    %v441 = vpop.trf.xlu0
    %442 = vxpose.xlu0.b32.start [1/16] %v271, 128
    %443 = vxpose.xlu0.b32.cont [2/16] 0.0, 128
    %444 = vxpose.xlu0.b32.cont [3/16] 0.0, 128
    %445 = vxpose.xlu0.b32.cont [4/16] 0.0, 128
    %446 = vxpose.xlu0.b32.cont [5/16] 0.0, 128
    %447 = vxpose.xlu0.b32.cont [6/16] 0.0, 128
    %448 = vxpose.xlu0.b32.cont [7/16] 0.0, 128
    %449 = vxpose.xlu0.b32.cont [8/16] 0.0, 128
    %450 = vxpose.xlu0.b32.cont [9/16] 0.0, 128
    %451 = vxpose.xlu0.b32.cont [10/16] 0.0, 128
    %452 = vxpose.xlu0.b32.cont [11/16] 0.0, 128
    %453 = vxpose.xlu0.b32.cont [12/16] 0.0, 128
    %454 = vxpose.xlu0.b32.cont [13/16] 0.0, 128
    %455 = vxpose.xlu0.b32.cont [14/16] 0.0, 128
    %456 = vxpose.xlu0.b32.cont [15/16] 0.0, 128
    %457 = vxpose.xlu0.b32.end [16/16] 0.0, 128
    %v458 = vpop.trf.xlu0
    %v459 = vpop.trf.xlu0
    %v460 = vpop.trf.xlu0
    %v461 = vpop.trf.xlu0
    %v462 = vpop.trf.xlu0
    %v463 = vpop.trf.xlu0
    %v464 = vpop.trf.xlu0
    %v465 = vpop.trf.xlu0
    %v466 = vpop.trf.xlu0
    %v467 = vpop.trf.xlu0
    %v468 = vpop.trf.xlu0
    %v469 = vpop.trf.xlu0
    %v470 = vpop.trf.xlu0
    %v471 = vpop.trf.xlu0
    %v472 = vpop.trf.xlu0
    %v473 = vpop.trf.xlu0
    %474 = vxpose.xlu0.b32.start [1/16] %v272, 128
    %475 = vxpose.xlu0.b32.cont [2/16] 0.0, 128
    %476 = vxpose.xlu0.b32.cont [3/16] 0.0, 128
    %477 = vxpose.xlu0.b32.cont [4/16] 0.0, 128
    %478 = vxpose.xlu0.b32.cont [5/16] 0.0, 128
    %479 = vxpose.xlu0.b32.cont [6/16] 0.0, 128
    %480 = vxpose.xlu0.b32.cont [7/16] 0.0, 128
    %481 = vxpose.xlu0.b32.cont [8/16] 0.0, 128
    %482 = vxpose.xlu0.b32.cont [9/16] 0.0, 128
    %483 = vxpose.xlu0.b32.cont [10/16] 0.0, 128
    %484 = vxpose.xlu0.b32.cont [11/16] 0.0, 128
    %485 = vxpose.xlu0.b32.cont [12/16] 0.0, 128
    %486 = vxpose.xlu0.b32.cont [13/16] 0.0, 128
    %487 = vxpose.xlu0.b32.cont [14/16] 0.0, 128
    %488 = vxpose.xlu0.b32.cont [15/16] 0.0, 128
    %489 = vxpose.xlu0.b32.end [16/16] 0.0, 128
    %v490 = vpop.trf.xlu0
    %v491 = vpop.trf.xlu0
    %v492 = vpop.trf.xlu0
    %v493 = vpop.trf.xlu0
    %v494 = vpop.trf.xlu0
    %v495 = vpop.trf.xlu0
    %v496 = vpop.trf.xlu0
    %v497 = vpop.trf.xlu0
    %v498 = vpop.trf.xlu0
    %v499 = vpop.trf.xlu0
    %v500 = vpop.trf.xlu0
    %v501 = vpop.trf.xlu0
    %v502 = vpop.trf.xlu0
    %v503 = vpop.trf.xlu0
    %v504 = vpop.trf.xlu0
    %v505 = vpop.trf.xlu0
    %506 = vxpose.xlu0.b32.start [1/16] %v273, 128
    %507 = vxpose.xlu0.b32.cont [2/16] 0.0, 128
    %508 = vxpose.xlu0.b32.cont [3/16] 0.0, 128
    %509 = vxpose.xlu0.b32.cont [4/16] 0.0, 128
    %510 = vxpose.xlu0.b32.cont [5/16] 0.0, 128
    %511 = vxpose.xlu0.b32.cont [6/16] 0.0, 128
    %512 = vxpose.xlu0.b32.cont [7/16] 0.0, 128
    %513 = vxpose.xlu0.b32.cont [8/16] 0.0, 128
    %514 = vxpose.xlu0.b32.cont [9/16] 0.0, 128
    %515 = vxpose.xlu0.b32.cont [10/16] 0.0, 128
    %516 = vxpose.xlu0.b32.cont [11/16] 0.0, 128
    %517 = vxpose.xlu0.b32.cont [12/16] 0.0, 128
    %518 = vxpose.xlu0.b32.cont [13/16] 0.0, 128
    %519 = vxpose.xlu0.b32.cont [14/16] 0.0, 128
    %520 = vxpose.xlu0.b32.cont [15/16] 0.0, 128
    %521 = vxpose.xlu0.b32.end [16/16] 0.0, 128
    %v522 = vpop.trf.xlu0
    %v523 = vpop.trf.xlu0
    %v524 = vpop.trf.xlu0
    %v525 = vpop.trf.xlu0
    %v526 = vpop.trf.xlu0
    %v527 = vpop.trf.xlu0
    %v528 = vpop.trf.xlu0
    %v529 = vpop.trf.xlu0
    %v530 = vpop.trf.xlu0
    %v531 = vpop.trf.xlu0
    %v532 = vpop.trf.xlu0
    %v533 = vpop.trf.xlu0
    %v534 = vpop.trf.xlu0
    %v535 = vpop.trf.xlu0
    %v536 = vpop.trf.xlu0
    %v537 = vpop.trf.xlu0
    %vm538 = vcmask 64512
    %v540 = vsel %vm538, %v298, 0
    %v543 = vsel %vm538, %v299, 0
    %v546 = vsel %vm538, %v330, 0
    %v549 = vsel %vm538, %v331, 0
    %551 = vmatprep.subr.mxu0 0.0
    %552 = vmatpush1.msra.mxu0 0.0
    %553 = vmatprep.subr.mxu0 0.0
    %554 = vmatpush1.msra.mxu0 0.0
    %555 = vmatprep.subr.mxu0 0.0
    %556 = vmatpush1.msra.mxu0 0.0
    %557 = vmatprep.subr.mxu0 0.0
    %558 = vmatpush1.msra.mxu0 0.0
    %559 = vmatprep.subr.mxu0 0.0
    %560 = vmatpush1.msra.mxu0 0.0
    %561 = vmatprep.subr.mxu0 0.0
    %562 = vmatpush1.msra.mxu0 0.0
    %563 = vmatprep.subr.mxu0 0.0
    %564 = vmatpush1.msra.mxu0 0.0
    %565 = vmatprep.subr.mxu0 0.0
    %566 = vmatpush1.msra.mxu0 0.0
    %567 = vmatprep.subr.mxu0 0.0
    %568 = vmatpush1.msra.mxu0 0.0
    %569 = vmatprep.subr.mxu0 0.0
    %570 = vmatpush1.msra.mxu0 0.0
    %571 = vmatprep.subr.mxu0 0.0
    %572 = vmatpush1.msra.mxu0 0.0
    %573 = vmatprep.subr.mxu0 0.0
    %574 = vmatpush1.msra.mxu0 0.0
    %575 = vmatprep.subr.mxu0 0.0
    %576 = vmatpush1.msra.mxu0 0.0
    %577 = vmatprep.subr.mxu0 0.0
    %578 = vmatpush1.msra.mxu0 0.0
    %579 = vmatprep.subr.mxu0 0.0
    %580 = vmatpush1.msra.mxu0 0.0
    %581 = vmatprep.subr.mxu0 0.0
    %582 = vmatpush1.msra.mxu0 %v274
    %583 = vmatprep.subr.mxu0 0.0
    %584 = vmatpush2.msra.mxu0 0.0
    %585 = vmatprep.subr.mxu0 0.0
    %586 = vmatpush2.msra.mxu0 0.0
    %587 = vmatprep.subr.mxu0 0.0
    %588 = vmatpush2.msra.mxu0 0.0
    %589 = vmatprep.subr.mxu0 0.0
    %590 = vmatpush2.msra.mxu0 0.0
    %591 = vmatprep.subr.mxu0 0.0
    %592 = vmatpush2.msra.mxu0 0.0
    %593 = vmatprep.subr.mxu0 0.0
    %594 = vmatpush2.msra.mxu0 0.0
    %595 = vmatprep.subr.mxu0 0.0
    %596 = vmatpush2.msra.mxu0 0.0
    %597 = vmatprep.subr.mxu0 0.0
    %598 = vmatpush2.msra.mxu0 0.0
    %599 = vmatprep.subr.mxu0 0.0
    %600 = vmatpush2.msra.mxu0 0.0
    %601 = vmatprep.subr.mxu0 0.0
    %602 = vmatpush2.msra.mxu0 0.0
    %603 = vmatprep.subr.mxu0 0.0
    %604 = vmatpush2.msra.mxu0 0.0
    %605 = vmatprep.subr.mxu0 0.0
    %606 = vmatpush2.msra.mxu0 0.0
    %607 = vmatprep.subr.mxu0 0.0
    %608 = vmatpush2.msra.mxu0 0.0
    %609 = vmatprep.subr.mxu0 0.0
    %610 = vmatpush2.msra.mxu0 0.0
    %611 = vmatprep.subr.mxu0 0.0
    %612 = vmatpush2.msra.mxu0 0.0
    %613 = vmatprep.subr.mxu0 0.0
    %614 = vmatpush2.msra.mxu0 0.0
    %615 = vmatprep.mubr.f32.mxu0 0.0
    %616 = vmatmul.mubr.f32.gmra.mxu0 %v540
    %v617 = vpop.f32.mrf.mxu0
    %v618 = vadd.f32 %v248, %v617
    %v619 = vpop.f32.mrf.mxu0
    %620 = vmatprep.mubr.f32.mxu0 0.0
    %621 = vmatmul.mubr.f32.gmra.mxu0 %v543
    %v622 = vpop.f32.mrf.mxu0
    %v623 = vadd.f32 %v249, %v622
    %v624 = vpop.f32.mrf.mxu0
    %625 = vmatprep.mubr.f32.mxu0 0.0
    %626 = vmatmul.mubr.f32.gmra.mxu0 %v546
    %v627 = vpop.f32.mrf.mxu0
    %v628 = vadd.f32 %v248, %v627
    %v629 = vpop.f32.mrf.mxu0
    %630 = vmatprep.mubr.f32.mxu0 0.0
    %631 = vmatmul.mubr.f32.gmra.mxu0 %v549
    %v632 = vpop.f32.mrf.mxu0
    %v633 = vadd.f32 %v249, %v632
    %v634 = vpop.f32.mrf.mxu0
    %635 = vdwg.mxu0
    %v637 = vsel %vm538, %v362, 0
    %v640 = vsel %vm538, %v363, 0
    %v643 = vsel %vm538, %v394, 0
    %v646 = vsel %vm538, %v395, 0
    %648 = vmatprep.subr.mxu0 0.0
    %649 = vmatpush1.msra.mxu0 0.0
    %650 = vmatprep.subr.mxu0 0.0
    %651 = vmatpush1.msra.mxu0 0.0
    %652 = vmatprep.subr.mxu0 0.0
    %653 = vmatpush1.msra.mxu0 0.0
    %654 = vmatprep.subr.mxu0 0.0
    %655 = vmatpush1.msra.mxu0 0.0
    %656 = vmatprep.subr.mxu0 0.0
    %657 = vmatpush1.msra.mxu0 0.0
    %658 = vmatprep.subr.mxu0 0.0
    %659 = vmatpush1.msra.mxu0 0.0
    %660 = vmatprep.subr.mxu0 0.0
    %661 = vmatpush1.msra.mxu0 0.0
    %662 = vmatprep.subr.mxu0 0.0
    %663 = vmatpush1.msra.mxu0 0.0
    %664 = vmatprep.subr.mxu0 0.0
    %665 = vmatpush1.msra.mxu0 0.0
    %666 = vmatprep.subr.mxu0 0.0
    %667 = vmatpush1.msra.mxu0 0.0
    %668 = vmatprep.subr.mxu0 0.0
    %669 = vmatpush1.msra.mxu0 0.0
    %670 = vmatprep.subr.mxu0 0.0
    %671 = vmatpush1.msra.mxu0 0.0
    %672 = vmatprep.subr.mxu0 0.0
    %673 = vmatpush1.msra.mxu0 0.0
    %674 = vmatprep.subr.mxu0 0.0
    %675 = vmatpush1.msra.mxu0 0.0
    %676 = vmatprep.subr.mxu0 0.0
    %677 = vmatpush1.msra.mxu0 0.0
    %678 = vmatprep.subr.mxu0 0.0
    %679 = vmatpush1.msra.mxu0 %v275
    %680 = vmatprep.subr.mxu0 0.0
    %681 = vmatpush2.msra.mxu0 0.0
    %682 = vmatprep.subr.mxu0 0.0
    %683 = vmatpush2.msra.mxu0 0.0
    %684 = vmatprep.subr.mxu0 0.0
    %685 = vmatpush2.msra.mxu0 0.0
    %686 = vmatprep.subr.mxu0 0.0
    %687 = vmatpush2.msra.mxu0 0.0
    %688 = vmatprep.subr.mxu0 0.0
    %689 = vmatpush2.msra.mxu0 0.0
    %690 = vmatprep.subr.mxu0 0.0
    %691 = vmatpush2.msra.mxu0 0.0
    %692 = vmatprep.subr.mxu0 0.0
    %693 = vmatpush2.msra.mxu0 0.0
    %694 = vmatprep.subr.mxu0 0.0
    %695 = vmatpush2.msra.mxu0 0.0
    %696 = vmatprep.subr.mxu0 0.0
    %697 = vmatpush2.msra.mxu0 0.0
    %698 = vmatprep.subr.mxu0 0.0
    %699 = vmatpush2.msra.mxu0 0.0
    %700 = vmatprep.subr.mxu0 0.0
    %701 = vmatpush2.msra.mxu0 0.0
    %702 = vmatprep.subr.mxu0 0.0
    %703 = vmatpush2.msra.mxu0 0.0
    %704 = vmatprep.subr.mxu0 0.0
    %705 = vmatpush2.msra.mxu0 0.0
    %706 = vmatprep.subr.mxu0 0.0
    %707 = vmatpush2.msra.mxu0 0.0
    %708 = vmatprep.subr.mxu0 0.0
    %709 = vmatpush2.msra.mxu0 0.0
    %710 = vmatprep.subr.mxu0 0.0
    %711 = vmatpush2.msra.mxu0 0.0
    %712 = vmatprep.mubr.f32.mxu0 0.0
    %713 = vmatmul.mubr.f32.gmra.mxu0 %v637
    %v714 = vpop.f32.mrf.mxu0
    %v715 = vadd.f32 %v248, %v714
    %v716 = vpop.f32.mrf.mxu0
    %717 = vmatprep.mubr.f32.mxu0 0.0
    %718 = vmatmul.mubr.f32.gmra.mxu0 %v640
    %v719 = vpop.f32.mrf.mxu0
    %v720 = vadd.f32 %v249, %v719
    %v721 = vpop.f32.mrf.mxu0
    %722 = vmatprep.mubr.f32.mxu0 0.0
    %723 = vmatmul.mubr.f32.gmra.mxu0 %v643
    %v724 = vpop.f32.mrf.mxu0
    %v725 = vadd.f32 %v248, %v724
    %v726 = vpop.f32.mrf.mxu0
    %727 = vmatprep.mubr.f32.mxu0 0.0
    %728 = vmatmul.mubr.f32.gmra.mxu0 %v646
    %v729 = vpop.f32.mrf.mxu0
    %v730 = vadd.f32 %v249, %v729
    %v731 = vpop.f32.mrf.mxu0
    %732 = vdwg.mxu0
    %v734 = vsel %vm538, %v426, 0
    %v737 = vsel %vm538, %v427, 0
    %v740 = vsel %vm538, %v458, 0
    %v743 = vsel %vm538, %v459, 0
    %745 = vmatprep.subr.mxu0 0.0
    %746 = vmatpush1.msra.mxu0 0.0
    %747 = vmatprep.subr.mxu0 0.0
    %748 = vmatpush1.msra.mxu0 0.0
    %749 = vmatprep.subr.mxu0 0.0
    %750 = vmatpush1.msra.mxu0 0.0
    %751 = vmatprep.subr.mxu0 0.0
    %752 = vmatpush1.msra.mxu0 0.0
    %753 = vmatprep.subr.mxu0 0.0
    %754 = vmatpush1.msra.mxu0 0.0
    %755 = vmatprep.subr.mxu0 0.0
    %756 = vmatpush1.msra.mxu0 0.0
    %757 = vmatprep.subr.mxu0 0.0
    %758 = vmatpush1.msra.mxu0 0.0
    %759 = vmatprep.subr.mxu0 0.0
    %760 = vmatpush1.msra.mxu0 0.0
    %761 = vmatprep.subr.mxu0 0.0
    %762 = vmatpush1.msra.mxu0 0.0
    %763 = vmatprep.subr.mxu0 0.0
    %764 = vmatpush1.msra.mxu0 0.0
    %765 = vmatprep.subr.mxu0 0.0
    %766 = vmatpush1.msra.mxu0 0.0
    %767 = vmatprep.subr.mxu0 0.0
    %768 = vmatpush1.msra.mxu0 0.0
    %769 = vmatprep.subr.mxu0 0.0
    %770 = vmatpush1.msra.mxu0 0.0
    %771 = vmatprep.subr.mxu0 0.0
    %772 = vmatpush1.msra.mxu0 0.0
    %773 = vmatprep.subr.mxu0 0.0
    %774 = vmatpush1.msra.mxu0 0.0
    %775 = vmatprep.subr.mxu0 0.0
    %776 = vmatpush1.msra.mxu0 %v276
    %777 = vmatprep.subr.mxu0 0.0
    %778 = vmatpush2.msra.mxu0 0.0
    %779 = vmatprep.subr.mxu0 0.0
    %780 = vmatpush2.msra.mxu0 0.0
    %781 = vmatprep.subr.mxu0 0.0
    %782 = vmatpush2.msra.mxu0 0.0
    %783 = vmatprep.subr.mxu0 0.0
    %784 = vmatpush2.msra.mxu0 0.0
    %785 = vmatprep.subr.mxu0 0.0
    %786 = vmatpush2.msra.mxu0 0.0
    %787 = vmatprep.subr.mxu0 0.0
    %788 = vmatpush2.msra.mxu0 0.0
    %789 = vmatprep.subr.mxu0 0.0
    %790 = vmatpush2.msra.mxu0 0.0
    %791 = vmatprep.subr.mxu0 0.0
    %792 = vmatpush2.msra.mxu0 0.0
    %793 = vmatprep.subr.mxu0 0.0
    %794 = vmatpush2.msra.mxu0 0.0
    %795 = vmatprep.subr.mxu0 0.0
    %796 = vmatpush2.msra.mxu0 0.0
    %797 = vmatprep.subr.mxu0 0.0
    %798 = vmatpush2.msra.mxu0 0.0
    %799 = vmatprep.subr.mxu0 0.0
    %800 = vmatpush2.msra.mxu0 0.0
    %801 = vmatprep.subr.mxu0 0.0
    %802 = vmatpush2.msra.mxu0 0.0
    %803 = vmatprep.subr.mxu0 0.0
    %804 = vmatpush2.msra.mxu0 0.0
    %805 = vmatprep.subr.mxu0 0.0
    %806 = vmatpush2.msra.mxu0 0.0
    %807 = vmatprep.subr.mxu0 0.0
    %808 = vmatpush2.msra.mxu0 0.0
    %809 = vmatprep.mubr.f32.mxu0 0.0
    %810 = vmatmul.mubr.f32.gmra.mxu0 %v734
    %v811 = vpop.f32.mrf.mxu0
    %v812 = vadd.f32 %v248, %v811
    %v813 = vpop.f32.mrf.mxu0
    %814 = vmatprep.mubr.f32.mxu0 0.0
    %815 = vmatmul.mubr.f32.gmra.mxu0 %v737
    %v816 = vpop.f32.mrf.mxu0
    %v817 = vadd.f32 %v249, %v816
    %v818 = vpop.f32.mrf.mxu0
    %819 = vmatprep.mubr.f32.mxu0 0.0
    %820 = vmatmul.mubr.f32.gmra.mxu0 %v740
    %v821 = vpop.f32.mrf.mxu0
    %v822 = vadd.f32 %v248, %v821
    %v823 = vpop.f32.mrf.mxu0
    %824 = vmatprep.mubr.f32.mxu0 0.0
    %825 = vmatmul.mubr.f32.gmra.mxu0 %v743
    %v826 = vpop.f32.mrf.mxu0
    %v827 = vadd.f32 %v249, %v826
    %v828 = vpop.f32.mrf.mxu0
    %829 = vdwg.mxu0
    %v831 = vsel %vm538, %v490, 0
    %v834 = vsel %vm538, %v491, 0
    %v837 = vsel %vm538, %v522, 0
    %v840 = vsel %vm538, %v523, 0
    %842 = vmatprep.subr.mxu0 0.0
    %843 = vmatpush1.msra.mxu0 0.0
    %844 = vmatprep.subr.mxu0 0.0
    %845 = vmatpush1.msra.mxu0 0.0
    %846 = vmatprep.subr.mxu0 0.0
    %847 = vmatpush1.msra.mxu0 0.0
    %848 = vmatprep.subr.mxu0 0.0
    %849 = vmatpush1.msra.mxu0 0.0
    %850 = vmatprep.subr.mxu0 0.0
    %851 = vmatpush1.msra.mxu0 0.0
    %852 = vmatprep.subr.mxu0 0.0
    %853 = vmatpush1.msra.mxu0 0.0
    %854 = vmatprep.subr.mxu0 0.0
    %855 = vmatpush1.msra.mxu0 0.0
    %856 = vmatprep.subr.mxu0 0.0
    %857 = vmatpush1.msra.mxu0 0.0
    %858 = vmatprep.subr.mxu0 0.0
    %859 = vmatpush1.msra.mxu0 0.0
    %860 = vmatprep.subr.mxu0 0.0
    %861 = vmatpush1.msra.mxu0 0.0
    %862 = vmatprep.subr.mxu0 0.0
    %863 = vmatpush1.msra.mxu0 0.0
    %864 = vmatprep.subr.mxu0 0.0
    %865 = vmatpush1.msra.mxu0 0.0
    %866 = vmatprep.subr.mxu0 0.0
    %867 = vmatpush1.msra.mxu0 0.0
    %868 = vmatprep.subr.mxu0 0.0
    %869 = vmatpush1.msra.mxu0 0.0
    %870 = vmatprep.subr.mxu0 0.0
    %871 = vmatpush1.msra.mxu0 0.0
    %872 = vmatprep.subr.mxu0 0.0
    %873 = vmatpush1.msra.mxu0 %v277
    %874 = vmatprep.subr.mxu0 0.0
    %875 = vmatpush2.msra.mxu0 0.0
    %876 = vmatprep.subr.mxu0 0.0
    %877 = vmatpush2.msra.mxu0 0.0
    %878 = vmatprep.subr.mxu0 0.0
    %879 = vmatpush2.msra.mxu0 0.0
    %880 = vmatprep.subr.mxu0 0.0
    %881 = vmatpush2.msra.mxu0 0.0
    %882 = vmatprep.subr.mxu0 0.0
    %883 = vmatpush2.msra.mxu0 0.0
    %884 = vmatprep.subr.mxu0 0.0
    %885 = vmatpush2.msra.mxu0 0.0
    %886 = vmatprep.subr.mxu0 0.0
    %887 = vmatpush2.msra.mxu0 0.0
    %888 = vmatprep.subr.mxu0 0.0
    %889 = vmatpush2.msra.mxu0 0.0
    %890 = vmatprep.subr.mxu0 0.0
    %891 = vmatpush2.msra.mxu0 0.0
    %892 = vmatprep.subr.mxu0 0.0
    %893 = vmatpush2.msra.mxu0 0.0
    %894 = vmatprep.subr.mxu0 0.0
    %895 = vmatpush2.msra.mxu0 0.0
    %896 = vmatprep.subr.mxu0 0.0
    %897 = vmatpush2.msra.mxu0 0.0
    %898 = vmatprep.subr.mxu0 0.0
    %899 = vmatpush2.msra.mxu0 0.0
    %900 = vmatprep.subr.mxu0 0.0
    %901 = vmatpush2.msra.mxu0 0.0
    %902 = vmatprep.subr.mxu0 0.0
    %903 = vmatpush2.msra.mxu0 0.0
    %904 = vmatprep.subr.mxu0 0.0
    %905 = vmatpush2.msra.mxu0 0.0
    %906 = vmatprep.mubr.f32.mxu0 0.0
    %907 = vmatmul.mubr.f32.gmra.mxu0 %v831
    %v908 = vpop.f32.mrf.mxu0
    %v909 = vadd.f32 %v248, %v908
    %v910 = vpop.f32.mrf.mxu0
    %911 = vmatprep.mubr.f32.mxu0 0.0
    %912 = vmatmul.mubr.f32.gmra.mxu0 %v834
    %v913 = vpop.f32.mrf.mxu0
    %v914 = vadd.f32 %v249, %v913
    %v915 = vpop.f32.mrf.mxu0
    %916 = vmatprep.mubr.f32.mxu0 0.0
    %917 = vmatmul.mubr.f32.gmra.mxu0 %v837
    %v918 = vpop.f32.mrf.mxu0
    %v919 = vadd.f32 %v248, %v918
    %v920 = vpop.f32.mrf.mxu0
    %921 = vmatprep.mubr.f32.mxu0 0.0
    %922 = vmatmul.mubr.f32.gmra.mxu0 %v840
    %v923 = vpop.f32.mrf.mxu0
    %v924 = vadd.f32 %v249, %v923
    %v925 = vpop.f32.mrf.mxu0
    %926 = vdwg.mxu0
    %vm927 = vcmask 130048
    %v928 = vsel %vm927, %v618, -inf
    %929 = vmax.xlane.f32.xlu0 %v928
    %v930 = vpop.xlane.xlu0 %929
    %v931 = vsel %vm927, %v623, -inf
    %932 = vmax.xlane.f32.xlu0 %v931
    %v933 = vpop.xlane.xlu0 %932
    %v934 = vsel %vm927, %v628, -inf
    %935 = vmax.xlane.f32.xlu0 %v934
    %v936 = vpop.xlane.xlu0 %935
    %v937 = vsel %vm927, %v633, -inf
    %938 = vmax.xlane.f32.xlu0 %v937
    %v939 = vpop.xlane.xlu0 %938
    %v940 = vsel %vm927, %v715, -inf
    %941 = vmax.xlane.f32.xlu0 %v940
    %v942 = vpop.xlane.xlu0 %941
    %v943 = vsel %vm927, %v720, -inf
    %944 = vmax.xlane.f32.xlu0 %v943
    %v945 = vpop.xlane.xlu0 %944
    %v946 = vsel %vm927, %v725, -inf
    %947 = vmax.xlane.f32.xlu0 %v946
    %v948 = vpop.xlane.xlu0 %947
    %v949 = vsel %vm927, %v730, -inf
    %950 = vmax.xlane.f32.xlu0 %v949
    %v951 = vpop.xlane.xlu0 %950
    %v952 = vsel %vm927, %v812, -inf
    %953 = vmax.xlane.f32.xlu0 %v952
    %v954 = vpop.xlane.xlu0 %953
    %v955 = vsel %vm927, %v817, -inf
    %956 = vmax.xlane.f32.xlu0 %v955
    %v957 = vpop.xlane.xlu0 %956
    %v958 = vsel %vm927, %v822, -inf
    %959 = vmax.xlane.f32.xlu0 %v958
    %v960 = vpop.xlane.xlu0 %959
    %v961 = vsel %vm927, %v827, -inf
    %962 = vmax.xlane.f32.xlu0 %v961
    %v963 = vpop.xlane.xlu0 %962
    %v964 = vsel %vm927, %v909, -inf
    %965 = vmax.xlane.f32.xlu0 %v964
    %v966 = vpop.xlane.xlu0 %965
    %v967 = vsel %vm927, %v914, -inf
    %968 = vmax.xlane.f32.xlu0 %v967
    %v969 = vpop.xlane.xlu0 %968
    %v970 = vsel %vm927, %v919, -inf
    %971 = vmax.xlane.f32.xlu0 %v970
    %v972 = vpop.xlane.xlu0 %971
    %v973 = vsel %vm927, %v924, -inf
    %974 = vmax.xlane.f32.xlu0 %v973
    %v975 = vpop.xlane.xlu0 %974
    %v976 = vsub.f32 %v618, %v930
    %v977 = vsub.f32 %v623, %v933
    %v978 = vsub.f32 %v628, %v936
    %v979 = vsub.f32 %v633, %v939
    %v980 = vsub.f32 %v715, %v942
    %v981 = vsub.f32 %v720, %v945
    %v982 = vsub.f32 %v725, %v948
    %v983 = vsub.f32 %v730, %v951
    %v984 = vsub.f32 %v812, %v954
    %v985 = vsub.f32 %v817, %v957
    %v986 = vsub.f32 %v822, %v960
    %v987 = vsub.f32 %v827, %v963
    %v988 = vsub.f32 %v909, %v966
    %v989 = vsub.f32 %v914, %v969
    %v990 = vsub.f32 %v919, %v972
    %v991 = vsub.f32 %v924, %v975
    %v992 = vmul.f32 %v976, 1.442695
    %v993 = vpow.pop %v992
    %v994 = vmul.f32 %v977, 1.442695
    %v995 = vpow.pop %v994
    %v996 = vmul.f32 %v978, 1.442695
    %v997 = vpow.pop %v996
    %v998 = vmul.f32 %v979, 1.442695
    %v999 = vpow.pop %v998
    %v1000 = vmul.f32 %v980, 1.442695
    %v1001 = vpow.pop %v1000
    %v1002 = vmul.f32 %v981, 1.442695
    %v1003 = vpow.pop %v1002
    %v1004 = vmul.f32 %v982, 1.442695
    %v1005 = vpow.pop %v1004
    %v1006 = vmul.f32 %v983, 1.442695
    %v1007 = vpow.pop %v1006
    %v1008 = vmul.f32 %v984, 1.442695
    %v1009 = vpow.pop %v1008
    %v1010 = vmul.f32 %v985, 1.442695
    %v1011 = vpow.pop %v1010
    %v1012 = vmul.f32 %v986, 1.442695
    %v1013 = vpow.pop %v1012
    %v1014 = vmul.f32 %v987, 1.442695
    %v1015 = vpow.pop %v1014
    %v1016 = vmul.f32 %v988, 1.442695
    %v1017 = vpow.pop %v1016
    %v1018 = vmul.f32 %v989, 1.442695
    %v1019 = vpow.pop %v1018
    %v1020 = vmul.f32 %v990, 1.442695
    %v1021 = vpow.pop %v1020
    %v1022 = vmul.f32 %v991, 1.442695
    %v1023 = vpow.pop %v1022
    %v1024 = vsel %vm927, %v993, 0.0
    %1025 = vadd.xlane.f32.xlu0 %v1024
    %v1026 = vpop.xlane.xlu0 %1025
    %v1027 = vsel %vm927, %v995, 0.0
    %1028 = vadd.xlane.f32.xlu0 %v1027
    %v1029 = vpop.xlane.xlu0 %1028
    %v1030 = vsel %vm927, %v997, 0.0
    %1031 = vadd.xlane.f32.xlu0 %v1030
    %v1032 = vpop.xlane.xlu0 %1031
    %v1033 = vsel %vm927, %v999, 0.0
    %1034 = vadd.xlane.f32.xlu0 %v1033
    %v1035 = vpop.xlane.xlu0 %1034
    %v1036 = vsel %vm927, %v1001, 0.0
    %1037 = vadd.xlane.f32.xlu0 %v1036
    %v1038 = vpop.xlane.xlu0 %1037
    %v1039 = vsel %vm927, %v1003, 0.0
    %1040 = vadd.xlane.f32.xlu0 %v1039
    %v1041 = vpop.xlane.xlu0 %1040
    %v1042 = vsel %vm927, %v1005, 0.0
    %1043 = vadd.xlane.f32.xlu0 %v1042
    %v1044 = vpop.xlane.xlu0 %1043
    %v1045 = vsel %vm927, %v1007, 0.0
    %1046 = vadd.xlane.f32.xlu0 %v1045
    %v1047 = vpop.xlane.xlu0 %1046
    %v1048 = vsel %vm927, %v1009, 0.0
    %1049 = vadd.xlane.f32.xlu0 %v1048
    %v1050 = vpop.xlane.xlu0 %1049
    %v1051 = vsel %vm927, %v1011, 0.0
    %1052 = vadd.xlane.f32.xlu0 %v1051
    %v1053 = vpop.xlane.xlu0 %1052
    %v1054 = vsel %vm927, %v1013, 0.0
    %1055 = vadd.xlane.f32.xlu0 %v1054
    %v1056 = vpop.xlane.xlu0 %1055
    %v1057 = vsel %vm927, %v1015, 0.0
    %1058 = vadd.xlane.f32.xlu0 %v1057
    %v1059 = vpop.xlane.xlu0 %1058
    %v1060 = vsel %vm927, %v1017, 0.0
    %1061 = vadd.xlane.f32.xlu0 %v1060
    %v1062 = vpop.xlane.xlu0 %1061
    %v1063 = vsel %vm927, %v1019, 0.0
    %1064 = vadd.xlane.f32.xlu0 %v1063
    %v1065 = vpop.xlane.xlu0 %1064
    %v1066 = vsel %vm927, %v1021, 0.0
    %1067 = vadd.xlane.f32.xlu0 %v1066
    %v1068 = vpop.xlane.xlu0 %1067
    %v1069 = vsel %vm927, %v1023, 0.0
    %1070 = vadd.xlane.f32.xlu0 %v1069
    %v1071 = vpop.xlane.xlu0 %1070
    %v1072 = vrcp.pop %v1026
    %v1073 = vrcp.pop %v1029
    %v1074 = vrcp.pop %v1032
    %v1075 = vrcp.pop %v1035
    %v1076 = vrcp.pop %v1038
    %v1077 = vrcp.pop %v1041
    %v1078 = vrcp.pop %v1044
    %v1079 = vrcp.pop %v1047
    %v1080 = vrcp.pop %v1050
    %v1081 = vrcp.pop %v1053
    %v1082 = vrcp.pop %v1056
    %v1083 = vrcp.pop %v1059
    %v1084 = vrcp.pop %v1062
    %v1085 = vrcp.pop %v1065
    %v1086 = vrcp.pop %v1068
    %v1087 = vrcp.pop %v1071
    %v1088 = vmul.f32 %v993, %v1072
    %v1089 = vmul.f32 %v995, %v1073
    %v1090 = vmul.f32 %v997, %v1074
    %v1091 = vmul.f32 %v999, %v1075
    %v1092 = vmul.f32 %v1001, %v1076
    %v1093 = vmul.f32 %v1003, %v1077
    %v1094 = vmul.f32 %v1005, %v1078
    %v1095 = vmul.f32 %v1007, %v1079
    %v1096 = vmul.f32 %v1009, %v1080
    %v1097 = vmul.f32 %v1011, %v1081
    %v1098 = vmul.f32 %v1013, %v1082
    %v1099 = vmul.f32 %v1015, %v1083
    %v1100 = vmul.f32 %v1017, %v1084
    %v1101 = vmul.f32 %v1019, %v1085
    %v1102 = vmul.f32 %v1021, %v1086
    %v1103 = vmul.f32 %v1023, %v1087
    %v1104 = vcombine.low 0.0, 0.0
    %v1106 = vunpack.c.l.s4 1983009808
    %v1107 = vunpack.c.0.s8 %v1106
    %v1108 = vlaneseq
    %v1109 = vshrl.u32 %v1108, 7
    %v1110 = vsub.s32 %v1107, %v1109
    %v1111 = vrot.slane %v1104, %v1110
    %v1112 = vcombine.low %v1111, %v1111
    %v1114 = vunpack.c.l.s4 1934713408
    %v1115 = vunpack.c.0.s8 %v1114
    %v1116 = vlaneseq
    %v1117 = vshrl.u32 %v1116, 7
    %v1118 = vsub.s32 %v1115, %v1117
    %v1119 = vrot.slane %v1112, %v1118
    %v1120 = vcombine.low %v1119, %v1119
    %v1121 = vcombine.high %v1119, %v1119
    %1123 = vrot.lane.b32.xlu0 %v1121, 16
    %v1124 = vpop.permute.xlu0 %1123
    %v1126 = vsel %vm927, %v1120, %v1124
    %v1128 = vsel %vm927, %v278, 0
    %v1131 = vsel %vm927, %v1088, 0
    %v1134 = vsel %vm927, %v1089, 0
    %v1137 = vsel %vm927, %v1090, 0
    %v1140 = vsel %vm927, %v1091, 0
    %1142 = vmatprep.subr.mxu0 0.0
    %1143 = vmatpush1.xpose.msra.mxu0 0.0
    %1144 = vmatprep.subr.mxu0 0.0
    %1145 = vmatpush1.xpose.msra.mxu0 0.0
    %1146 = vmatprep.subr.mxu0 0.0
    %1147 = vmatpush1.xpose.msra.mxu0 0.0
    %1148 = vmatprep.subr.mxu0 0.0
    %1149 = vmatpush1.xpose.msra.mxu0 0.0
    %1150 = vmatprep.subr.mxu0 0.0
    %1151 = vmatpush1.xpose.msra.mxu0 0.0
    %1152 = vmatprep.subr.mxu0 0.0
    %1153 = vmatpush1.xpose.msra.mxu0 0.0
    %1154 = vmatprep.subr.mxu0 0.0
    %1155 = vmatpush1.xpose.msra.mxu0 0.0
    %1156 = vmatprep.subr.mxu0 0.0
    %1157 = vmatpush1.xpose.msra.mxu0 0.0
    %1158 = vmatprep.subr.mxu0 0.0
    %1159 = vmatpush1.xpose.msra.mxu0 0.0
    %1160 = vmatprep.subr.mxu0 0.0
    %1161 = vmatpush1.xpose.msra.mxu0 0.0
    %1162 = vmatprep.subr.mxu0 0.0
    %1163 = vmatpush1.xpose.msra.mxu0 0.0
    %1164 = vmatprep.subr.mxu0 0.0
    %1165 = vmatpush1.xpose.msra.mxu0 0.0
    %1166 = vmatprep.subr.mxu0 0.0
    %1167 = vmatpush1.xpose.msra.mxu0 %v1140
    %1168 = vmatprep.subr.mxu0 0.0
    %1169 = vmatpush1.xpose.msra.mxu0 %v1137
    %1170 = vmatprep.subr.mxu0 0.0
    %1171 = vmatpush1.xpose.msra.mxu0 %v1134
    %1172 = vmatprep.subr.mxu0 0.0
    %1173 = vmatpush1.xpose.msra.mxu0 %v1131
    %1174 = vmatprep.subr.mxu0 0.0
    %1175 = vmatpush2.xpose.msra.mxu0 0.0
    %1176 = vmatprep.subr.mxu0 0.0
    %1177 = vmatpush2.xpose.msra.mxu0 0.0
    %1178 = vmatprep.subr.mxu0 0.0
    %1179 = vmatpush2.xpose.msra.mxu0 0.0
    %1180 = vmatprep.subr.mxu0 0.0
    %1181 = vmatpush2.xpose.msra.mxu0 0.0
    %1182 = vmatprep.subr.mxu0 0.0
    %1183 = vmatpush2.xpose.msra.mxu0 0.0
    %1184 = vmatprep.subr.mxu0 0.0
    %1185 = vmatpush2.xpose.msra.mxu0 0.0
    %1186 = vmatprep.subr.mxu0 0.0
    %1187 = vmatpush2.xpose.msra.mxu0 0.0
    %1188 = vmatprep.subr.mxu0 0.0
    %1189 = vmatpush2.xpose.msra.mxu0 0.0
    %1190 = vmatprep.subr.mxu0 0.0
    %1191 = vmatpush2.xpose.msra.mxu0 0.0
    %1192 = vmatprep.subr.mxu0 0.0
    %1193 = vmatpush2.xpose.msra.mxu0 0.0
    %1194 = vmatprep.subr.mxu0 0.0
    %1195 = vmatpush2.xpose.msra.mxu0 0.0
    %1196 = vmatprep.subr.mxu0 0.0
    %1197 = vmatpush2.xpose.msra.mxu0 0.0
    %1198 = vmatprep.subr.mxu0 0.0
    %1199 = vmatpush2.xpose.msra.mxu0 0.0
    %1200 = vmatprep.subr.mxu0 0.0
    %1201 = vmatpush2.xpose.msra.mxu0 0.0
    %1202 = vmatprep.subr.mxu0 0.0
    %1203 = vmatpush2.xpose.msra.mxu0 0.0
    %1204 = vmatprep.subr.mxu0 0.0
    %1205 = vmatpush2.xpose.msra.mxu0 0.0
    %1206 = vmatprep.mubr.f32.mxu0 0.0
    %1207 = vmatmul.mubr.f32.gmra.mxu0 %v1128
    %v1208 = vpop.f32.mrf.mxu0
    %v1209 = vadd.f32 %v1126, %v1208
    %v1210 = vpop.f32.mrf.mxu0
    %1211 = vdwg.mxu0
    %v1213 = vsel %vm927, %v279, 0
    %v1216 = vsel %vm927, %v1092, 0
    %v1219 = vsel %vm927, %v1093, 0
    %v1222 = vsel %vm927, %v1094, 0
    %v1225 = vsel %vm927, %v1095, 0
    %1227 = vmatprep.subr.mxu0 0.0
    %1228 = vmatpush1.xpose.msra.mxu0 0.0
    %1229 = vmatprep.subr.mxu0 0.0
    %1230 = vmatpush1.xpose.msra.mxu0 0.0
    %1231 = vmatprep.subr.mxu0 0.0
    %1232 = vmatpush1.xpose.msra.mxu0 0.0
    %1233 = vmatprep.subr.mxu0 0.0
    %1234 = vmatpush1.xpose.msra.mxu0 0.0
    %1235 = vmatprep.subr.mxu0 0.0
    %1236 = vmatpush1.xpose.msra.mxu0 0.0
    %1237 = vmatprep.subr.mxu0 0.0
    %1238 = vmatpush1.xpose.msra.mxu0 0.0
    %1239 = vmatprep.subr.mxu0 0.0
    %1240 = vmatpush1.xpose.msra.mxu0 0.0
    %1241 = vmatprep.subr.mxu0 0.0
    %1242 = vmatpush1.xpose.msra.mxu0 0.0
    %1243 = vmatprep.subr.mxu0 0.0
    %1244 = vmatpush1.xpose.msra.mxu0 0.0
    %1245 = vmatprep.subr.mxu0 0.0
    %1246 = vmatpush1.xpose.msra.mxu0 0.0
    %1247 = vmatprep.subr.mxu0 0.0
    %1248 = vmatpush1.xpose.msra.mxu0 0.0
    %1249 = vmatprep.subr.mxu0 0.0
    %1250 = vmatpush1.xpose.msra.mxu0 0.0
    %1251 = vmatprep.subr.mxu0 0.0
    %1252 = vmatpush1.xpose.msra.mxu0 %v1225
    %1253 = vmatprep.subr.mxu0 0.0
    %1254 = vmatpush1.xpose.msra.mxu0 %v1222
    %1255 = vmatprep.subr.mxu0 0.0
    %1256 = vmatpush1.xpose.msra.mxu0 %v1219
    %1257 = vmatprep.subr.mxu0 0.0
    %1258 = vmatpush1.xpose.msra.mxu0 %v1216
    %1259 = vmatprep.subr.mxu0 0.0
    %1260 = vmatpush2.xpose.msra.mxu0 0.0
    %1261 = vmatprep.subr.mxu0 0.0
    %1262 = vmatpush2.xpose.msra.mxu0 0.0
    %1263 = vmatprep.subr.mxu0 0.0
    %1264 = vmatpush2.xpose.msra.mxu0 0.0
    %1265 = vmatprep.subr.mxu0 0.0
    %1266 = vmatpush2.xpose.msra.mxu0 0.0
    %1267 = vmatprep.subr.mxu0 0.0
    %1268 = vmatpush2.xpose.msra.mxu0 0.0
    %1269 = vmatprep.subr.mxu0 0.0
    %1270 = vmatpush2.xpose.msra.mxu0 0.0
    %1271 = vmatprep.subr.mxu0 0.0
    %1272 = vmatpush2.xpose.msra.mxu0 0.0
    %1273 = vmatprep.subr.mxu0 0.0
    %1274 = vmatpush2.xpose.msra.mxu0 0.0
    %1275 = vmatprep.subr.mxu0 0.0
    %1276 = vmatpush2.xpose.msra.mxu0 0.0
    %1277 = vmatprep.subr.mxu0 0.0
    %1278 = vmatpush2.xpose.msra.mxu0 0.0
    %1279 = vmatprep.subr.mxu0 0.0
    %1280 = vmatpush2.xpose.msra.mxu0 0.0
    %1281 = vmatprep.subr.mxu0 0.0
    %1282 = vmatpush2.xpose.msra.mxu0 0.0
    %1283 = vmatprep.subr.mxu0 0.0
    %1284 = vmatpush2.xpose.msra.mxu0 0.0
    %1285 = vmatprep.subr.mxu0 0.0
    %1286 = vmatpush2.xpose.msra.mxu0 0.0
    %1287 = vmatprep.subr.mxu0 0.0
    %1288 = vmatpush2.xpose.msra.mxu0 0.0
    %1289 = vmatprep.subr.mxu0 0.0
    %1290 = vmatpush2.xpose.msra.mxu0 0.0
    %1291 = vmatprep.mubr.f32.mxu0 0.0
    %1292 = vmatmul.mubr.f32.gmra.mxu0 %v1213
    %v1293 = vpop.f32.mrf.mxu0
    %v1294 = vadd.f32 %v1126, %v1293
    %v1295 = vpop.f32.mrf.mxu0
    %1296 = vdwg.mxu0
    %v1298 = vsel %vm927, %v280, 0
    %v1301 = vsel %vm927, %v1096, 0
    %v1304 = vsel %vm927, %v1097, 0
    %v1307 = vsel %vm927, %v1098, 0
    %v1310 = vsel %vm927, %v1099, 0
    %1312 = vmatprep.subr.mxu0 0.0
    %1313 = vmatpush1.xpose.msra.mxu0 0.0
    %1314 = vmatprep.subr.mxu0 0.0
    %1315 = vmatpush1.xpose.msra.mxu0 0.0
    %1316 = vmatprep.subr.mxu0 0.0
    %1317 = vmatpush1.xpose.msra.mxu0 0.0
    %1318 = vmatprep.subr.mxu0 0.0
    %1319 = vmatpush1.xpose.msra.mxu0 0.0
    %1320 = vmatprep.subr.mxu0 0.0
    %1321 = vmatpush1.xpose.msra.mxu0 0.0
    %1322 = vmatprep.subr.mxu0 0.0
    %1323 = vmatpush1.xpose.msra.mxu0 0.0
    %1324 = vmatprep.subr.mxu0 0.0
    %1325 = vmatpush1.xpose.msra.mxu0 0.0
    %1326 = vmatprep.subr.mxu0 0.0
    %1327 = vmatpush1.xpose.msra.mxu0 0.0
    %1328 = vmatprep.subr.mxu0 0.0
    %1329 = vmatpush1.xpose.msra.mxu0 0.0
    %1330 = vmatprep.subr.mxu0 0.0
    %1331 = vmatpush1.xpose.msra.mxu0 0.0
    %1332 = vmatprep.subr.mxu0 0.0
    %1333 = vmatpush1.xpose.msra.mxu0 0.0
    %1334 = vmatprep.subr.mxu0 0.0
    %1335 = vmatpush1.xpose.msra.mxu0 0.0
    %1336 = vmatprep.subr.mxu0 0.0
    %1337 = vmatpush1.xpose.msra.mxu0 %v1310
    %1338 = vmatprep.subr.mxu0 0.0
    %1339 = vmatpush1.xpose.msra.mxu0 %v1307
    %1340 = vmatprep.subr.mxu0 0.0
    %1341 = vmatpush1.xpose.msra.mxu0 %v1304
    %1342 = vmatprep.subr.mxu0 0.0
    %1343 = vmatpush1.xpose.msra.mxu0 %v1301
    %1344 = vmatprep.subr.mxu0 0.0
    %1345 = vmatpush2.xpose.msra.mxu0 0.0
    %1346 = vmatprep.subr.mxu0 0.0
    %1347 = vmatpush2.xpose.msra.mxu0 0.0
    %1348 = vmatprep.subr.mxu0 0.0
    %1349 = vmatpush2.xpose.msra.mxu0 0.0
    %1350 = vmatprep.subr.mxu0 0.0
    %1351 = vmatpush2.xpose.msra.mxu0 0.0
    %1352 = vmatprep.subr.mxu0 0.0
    %1353 = vmatpush2.xpose.msra.mxu0 0.0
    %1354 = vmatprep.subr.mxu0 0.0
    %1355 = vmatpush2.xpose.msra.mxu0 0.0
    %1356 = vmatprep.subr.mxu0 0.0
    %1357 = vmatpush2.xpose.msra.mxu0 0.0
    %1358 = vmatprep.subr.mxu0 0.0
    %1359 = vmatpush2.xpose.msra.mxu0 0.0
    %1360 = vmatprep.subr.mxu0 0.0
    %1361 = vmatpush2.xpose.msra.mxu0 0.0
    %1362 = vmatprep.subr.mxu0 0.0
    %1363 = vmatpush2.xpose.msra.mxu0 0.0
    %1364 = vmatprep.subr.mxu0 0.0
    %1365 = vmatpush2.xpose.msra.mxu0 0.0
    %1366 = vmatprep.subr.mxu0 0.0
    %1367 = vmatpush2.xpose.msra.mxu0 0.0
    %1368 = vmatprep.subr.mxu0 0.0
    %1369 = vmatpush2.xpose.msra.mxu0 0.0
    %1370 = vmatprep.subr.mxu0 0.0
    %1371 = vmatpush2.xpose.msra.mxu0 0.0
    %1372 = vmatprep.subr.mxu0 0.0
    %1373 = vmatpush2.xpose.msra.mxu0 0.0
    %1374 = vmatprep.subr.mxu0 0.0
    %1375 = vmatpush2.xpose.msra.mxu0 0.0
    %1376 = vmatprep.mubr.f32.mxu0 0.0
    %1377 = vmatmul.mubr.f32.gmra.mxu0 %v1298
    %v1378 = vpop.f32.mrf.mxu0
    %v1379 = vadd.f32 %v1126, %v1378
    %v1380 = vpop.f32.mrf.mxu0
    %1381 = vdwg.mxu0
    %v1383 = vsel %vm927, %v281, 0
    %v1386 = vsel %vm927, %v1100, 0
    %v1389 = vsel %vm927, %v1101, 0
    %v1392 = vsel %vm927, %v1102, 0
    %v1395 = vsel %vm927, %v1103, 0
    %1397 = vmatprep.subr.mxu0 0.0
    %1398 = vmatpush1.xpose.msra.mxu0 0.0
    %1399 = vmatprep.subr.mxu0 0.0
    %1400 = vmatpush1.xpose.msra.mxu0 0.0
    %1401 = vmatprep.subr.mxu0 0.0
    %1402 = vmatpush1.xpose.msra.mxu0 0.0
    %1403 = vmatprep.subr.mxu0 0.0
    %1404 = vmatpush1.xpose.msra.mxu0 0.0
    %1405 = vmatprep.subr.mxu0 0.0
    %1406 = vmatpush1.xpose.msra.mxu0 0.0
    %1407 = vmatprep.subr.mxu0 0.0
    %1408 = vmatpush1.xpose.msra.mxu0 0.0
    %1409 = vmatprep.subr.mxu0 0.0
    %1410 = vmatpush1.xpose.msra.mxu0 0.0
    %1411 = vmatprep.subr.mxu0 0.0
    %1412 = vmatpush1.xpose.msra.mxu0 0.0
    %1413 = vmatprep.subr.mxu0 0.0
    %1414 = vmatpush1.xpose.msra.mxu0 0.0
    %1415 = vmatprep.subr.mxu0 0.0
    %1416 = vmatpush1.xpose.msra.mxu0 0.0
    %1417 = vmatprep.subr.mxu0 0.0
    %1418 = vmatpush1.xpose.msra.mxu0 0.0
    %1419 = vmatprep.subr.mxu0 0.0
    %1420 = vmatpush1.xpose.msra.mxu0 0.0
    %1421 = vmatprep.subr.mxu0 0.0
    %1422 = vmatpush1.xpose.msra.mxu0 %v1395
    %1423 = vmatprep.subr.mxu0 0.0
    %1424 = vmatpush1.xpose.msra.mxu0 %v1392
    %1425 = vmatprep.subr.mxu0 0.0
    %1426 = vmatpush1.xpose.msra.mxu0 %v1389
    %1427 = vmatprep.subr.mxu0 0.0
    %1428 = vmatpush1.xpose.msra.mxu0 %v1386
    %1429 = vmatprep.subr.mxu0 0.0
    %1430 = vmatpush2.xpose.msra.mxu0 0.0
    %1431 = vmatprep.subr.mxu0 0.0
    %1432 = vmatpush2.xpose.msra.mxu0 0.0
    %1433 = vmatprep.subr.mxu0 0.0
    %1434 = vmatpush2.xpose.msra.mxu0 0.0
    %1435 = vmatprep.subr.mxu0 0.0
    %1436 = vmatpush2.xpose.msra.mxu0 0.0
    %1437 = vmatprep.subr.mxu0 0.0
    %1438 = vmatpush2.xpose.msra.mxu0 0.0
    %1439 = vmatprep.subr.mxu0 0.0
    %1440 = vmatpush2.xpose.msra.mxu0 0.0
    %1441 = vmatprep.subr.mxu0 0.0
    %1442 = vmatpush2.xpose.msra.mxu0 0.0
    %1443 = vmatprep.subr.mxu0 0.0
    %1444 = vmatpush2.xpose.msra.mxu0 0.0
    %1445 = vmatprep.subr.mxu0 0.0
    %1446 = vmatpush2.xpose.msra.mxu0 0.0
    %1447 = vmatprep.subr.mxu0 0.0
    %1448 = vmatpush2.xpose.msra.mxu0 0.0
    %1449 = vmatprep.subr.mxu0 0.0
    %1450 = vmatpush2.xpose.msra.mxu0 0.0
    %1451 = vmatprep.subr.mxu0 0.0
    %1452 = vmatpush2.xpose.msra.mxu0 0.0
    %1453 = vmatprep.subr.mxu0 0.0
    %1454 = vmatpush2.xpose.msra.mxu0 0.0
    %1455 = vmatprep.subr.mxu0 0.0
    %1456 = vmatpush2.xpose.msra.mxu0 0.0
    %1457 = vmatprep.subr.mxu0 0.0
    %1458 = vmatpush2.xpose.msra.mxu0 0.0
    %1459 = vmatprep.subr.mxu0 0.0
    %1460 = vmatpush2.xpose.msra.mxu0 0.0
    %1461 = vmatprep.mubr.f32.mxu0 0.0
    %1462 = vmatmul.mubr.f32.gmra.mxu0 %v1383
    %v1463 = vpop.f32.mrf.mxu0
    %v1464 = vadd.f32 %v1126, %v1463
    %v1465 = vpop.f32.mrf.mxu0
    %1466 = vdwg.mxu0
    %1471 = vrot.lane.b32.xlu0 %v1209, 112
    %v1472 = vpop.permute.xlu0 %1471
    %1473 = vrot.lane.b32.xlu0 %v1294, 112
    %v1474 = vpop.permute.xlu0 %1473
    %1475 = vrot.lane.b32.xlu0 %v1379, 112
    %v1476 = vpop.permute.xlu0 %1475
    %1477 = vrot.lane.b32.xlu0 %v1464, 112
    %v1478 = vpop.permute.xlu0 %1477
    %v1483 = vcombine.high %v1209, 0.0
    %v1485 = vunpack.c.l.s4 1983009808
    %v1486 = vunpack.c.0.s8 %v1485
    %v1487 = vlaneseq
    %v1488 = vshrl.u32 %v1487, 7
    %v1489 = vsub.s32 %v1486, %v1488
    %v1490 = vrot.slane %v1209, %v1489
    %v1492 = vunpack.c.l.s4 1983009808
    %v1493 = vunpack.c.0.s8 %v1492
    %v1494 = vlaneseq
    %v1495 = vshrl.u32 %v1494, 7
    %v1496 = vsub.s32 %v1493, %v1495
    %v1497 = vrot.slane %v1483, %v1496
    %v1498 = vcombine.high %v1472, 0.0
    %v1500 = vunpack.c.l.s4 1983009808
    %v1501 = vunpack.c.0.s8 %v1500
    %v1502 = vlaneseq
    %v1503 = vshrl.u32 %v1502, 7
    %v1504 = vsub.s32 %v1501, %v1503
    %v1505 = vrot.slane %v1472, %v1504
    %v1507 = vunpack.c.l.s4 1983009808
    %v1508 = vunpack.c.0.s8 %v1507
    %v1509 = vlaneseq
    %v1510 = vshrl.u32 %v1509, 7
    %v1511 = vsub.s32 %v1508, %v1510
    %v1512 = vrot.slane %v1498, %v1511
    %v1513 = vcombine.low %v1490, %v1505
    %v1514 = vcombine.high %v1490, %v1505
    %v1516 = vunpack.c.l.s4 1934713408
    %v1517 = vunpack.c.0.s8 %v1516
    %v1518 = vlaneseq
    %v1519 = vshrl.u32 %v1518, 7
    %v1520 = vsub.s32 %v1517, %v1519
    %v1521 = vrot.slane %v1513, %v1520
    %v1523 = vunpack.c.l.s4 1934713408
    %v1524 = vunpack.c.0.s8 %v1523
    %v1525 = vlaneseq
    %v1526 = vshrl.u32 %v1525, 7
    %v1527 = vsub.s32 %v1524, %v1526
    %v1528 = vrot.slane %v1514, %v1527
    %v1529 = vcombine.low %v1497, %v1512
    %v1530 = vcombine.high %v1497, %v1512
    %v1532 = vunpack.c.l.s4 1934713408
    %v1533 = vunpack.c.0.s8 %v1532
    %v1534 = vlaneseq
    %v1535 = vshrl.u32 %v1534, 7
    %v1536 = vsub.s32 %v1533, %v1535
    %v1537 = vrot.slane %v1529, %v1536
    %v1539 = vunpack.c.l.s4 1934713408
    %v1540 = vunpack.c.0.s8 %v1539
    %v1541 = vlaneseq
    %v1542 = vshrl.u32 %v1541, 7
    %v1543 = vsub.s32 %v1540, %v1542
    %v1544 = vrot.slane %v1530, %v1543
    %v1545 = vcombine.high %v1521, 0.0
    %v1546 = vcombine.high %v1528, 0.0
    %v1547 = vcombine.high %v1537, 0.0
    %v1548 = vcombine.high %v1544, 0.0
    %v1549 = vcombine.high %v1294, 0.0
    %v1551 = vunpack.c.l.s4 1983009808
    %v1552 = vunpack.c.0.s8 %v1551
    %v1553 = vlaneseq
    %v1554 = vshrl.u32 %v1553, 7
    %v1555 = vsub.s32 %v1552, %v1554
    %v1556 = vrot.slane %v1294, %v1555
    %v1558 = vunpack.c.l.s4 1983009808
    %v1559 = vunpack.c.0.s8 %v1558
    %v1560 = vlaneseq
    %v1561 = vshrl.u32 %v1560, 7
    %v1562 = vsub.s32 %v1559, %v1561
    %v1563 = vrot.slane %v1549, %v1562
    %v1564 = vcombine.high %v1474, 0.0
    %v1566 = vunpack.c.l.s4 1983009808
    %v1567 = vunpack.c.0.s8 %v1566
    %v1568 = vlaneseq
    %v1569 = vshrl.u32 %v1568, 7
    %v1570 = vsub.s32 %v1567, %v1569
    %v1571 = vrot.slane %v1474, %v1570
    %v1573 = vunpack.c.l.s4 1983009808
    %v1574 = vunpack.c.0.s8 %v1573
    %v1575 = vlaneseq
    %v1576 = vshrl.u32 %v1575, 7
    %v1577 = vsub.s32 %v1574, %v1576
    %v1578 = vrot.slane %v1564, %v1577
    %v1579 = vcombine.low %v1556, %v1571
    %v1580 = vcombine.high %v1556, %v1571
    %v1582 = vunpack.c.l.s4 1934713408
    %v1583 = vunpack.c.0.s8 %v1582
    %v1584 = vlaneseq
    %v1585 = vshrl.u32 %v1584, 7
    %v1586 = vsub.s32 %v1583, %v1585
    %v1587 = vrot.slane %v1579, %v1586
    %v1589 = vunpack.c.l.s4 1934713408
    %v1590 = vunpack.c.0.s8 %v1589
    %v1591 = vlaneseq
    %v1592 = vshrl.u32 %v1591, 7
    %v1593 = vsub.s32 %v1590, %v1592
    %v1594 = vrot.slane %v1580, %v1593
    %v1595 = vcombine.low %v1563, %v1578
    %v1596 = vcombine.high %v1563, %v1578
    %v1598 = vunpack.c.l.s4 1934713408
    %v1599 = vunpack.c.0.s8 %v1598
    %v1600 = vlaneseq
    %v1601 = vshrl.u32 %v1600, 7
    %v1602 = vsub.s32 %v1599, %v1601
    %v1603 = vrot.slane %v1595, %v1602
    %v1605 = vunpack.c.l.s4 1934713408
    %v1606 = vunpack.c.0.s8 %v1605
    %v1607 = vlaneseq
    %v1608 = vshrl.u32 %v1607, 7
    %v1609 = vsub.s32 %v1606, %v1608
    %v1610 = vrot.slane %v1596, %v1609
    %v1611 = vcombine.high %v1587, 0.0
    %v1612 = vcombine.high %v1594, 0.0
    %v1613 = vcombine.high %v1603, 0.0
    %v1614 = vcombine.high %v1610, 0.0
    %v1615 = vcombine.high %v1379, 0.0
    %v1617 = vunpack.c.l.s4 1983009808
    %v1618 = vunpack.c.0.s8 %v1617
    %v1619 = vlaneseq
    %v1620 = vshrl.u32 %v1619, 7
    %v1621 = vsub.s32 %v1618, %v1620
    %v1622 = vrot.slane %v1379, %v1621
    %v1624 = vunpack.c.l.s4 1983009808
    %v1625 = vunpack.c.0.s8 %v1624
    %v1626 = vlaneseq
    %v1627 = vshrl.u32 %v1626, 7
    %v1628 = vsub.s32 %v1625, %v1627
    %v1629 = vrot.slane %v1615, %v1628
    %v1630 = vcombine.high %v1476, 0.0
    %v1632 = vunpack.c.l.s4 1983009808
    %v1633 = vunpack.c.0.s8 %v1632
    %v1634 = vlaneseq
    %v1635 = vshrl.u32 %v1634, 7
    %v1636 = vsub.s32 %v1633, %v1635
    %v1637 = vrot.slane %v1476, %v1636
    %v1639 = vunpack.c.l.s4 1983009808
    %v1640 = vunpack.c.0.s8 %v1639
    %v1641 = vlaneseq
    %v1642 = vshrl.u32 %v1641, 7
    %v1643 = vsub.s32 %v1640, %v1642
    %v1644 = vrot.slane %v1630, %v1643
    %v1645 = vcombine.low %v1622, %v1637
    %v1646 = vcombine.high %v1622, %v1637
    %v1648 = vunpack.c.l.s4 1934713408
    %v1649 = vunpack.c.0.s8 %v1648
    %v1650 = vlaneseq
    %v1651 = vshrl.u32 %v1650, 7
    %v1652 = vsub.s32 %v1649, %v1651
    %v1653 = vrot.slane %v1645, %v1652
    %v1655 = vunpack.c.l.s4 1934713408
    %v1656 = vunpack.c.0.s8 %v1655
    %v1657 = vlaneseq
    %v1658 = vshrl.u32 %v1657, 7
    %v1659 = vsub.s32 %v1656, %v1658
    %v1660 = vrot.slane %v1646, %v1659
    %v1661 = vcombine.low %v1629, %v1644
    %v1662 = vcombine.high %v1629, %v1644
    %v1664 = vunpack.c.l.s4 1934713408
    %v1665 = vunpack.c.0.s8 %v1664
    %v1666 = vlaneseq
    %v1667 = vshrl.u32 %v1666, 7
    %v1668 = vsub.s32 %v1665, %v1667
    %v1669 = vrot.slane %v1661, %v1668
    %v1671 = vunpack.c.l.s4 1934713408
    %v1672 = vunpack.c.0.s8 %v1671
    %v1673 = vlaneseq
    %v1674 = vshrl.u32 %v1673, 7
    %v1675 = vsub.s32 %v1672, %v1674
    %v1676 = vrot.slane %v1662, %v1675
    %v1677 = vcombine.high %v1653, 0.0
    %v1678 = vcombine.high %v1660, 0.0
    %v1679 = vcombine.high %v1669, 0.0
    %v1680 = vcombine.high %v1676, 0.0
    %v1681 = vcombine.high %v1464, 0.0
    %v1683 = vunpack.c.l.s4 1983009808
    %v1684 = vunpack.c.0.s8 %v1683
    %v1685 = vlaneseq
    %v1686 = vshrl.u32 %v1685, 7
    %v1687 = vsub.s32 %v1684, %v1686
    %v1688 = vrot.slane %v1464, %v1687
    %v1690 = vunpack.c.l.s4 1983009808
    %v1691 = vunpack.c.0.s8 %v1690
    %v1692 = vlaneseq
    %v1693 = vshrl.u32 %v1692, 7
    %v1694 = vsub.s32 %v1691, %v1693
    %v1695 = vrot.slane %v1681, %v1694
    %v1696 = vcombine.high %v1478, 0.0
    %v1698 = vunpack.c.l.s4 1983009808
    %v1699 = vunpack.c.0.s8 %v1698
    %v1700 = vlaneseq
    %v1701 = vshrl.u32 %v1700, 7
    %v1702 = vsub.s32 %v1699, %v1701
    %v1703 = vrot.slane %v1478, %v1702
    %v1705 = vunpack.c.l.s4 1983009808
    %v1706 = vunpack.c.0.s8 %v1705
    %v1707 = vlaneseq
    %v1708 = vshrl.u32 %v1707, 7
    %v1709 = vsub.s32 %v1706, %v1708
    %v1710 = vrot.slane %v1696, %v1709
    %v1711 = vcombine.low %v1688, %v1703
    %v1712 = vcombine.high %v1688, %v1703
    %v1714 = vunpack.c.l.s4 1934713408
    %v1715 = vunpack.c.0.s8 %v1714
    %v1716 = vlaneseq
    %v1717 = vshrl.u32 %v1716, 7
    %v1718 = vsub.s32 %v1715, %v1717
    %v1719 = vrot.slane %v1711, %v1718
    %v1721 = vunpack.c.l.s4 1934713408
    %v1722 = vunpack.c.0.s8 %v1721
    %v1723 = vlaneseq
    %v1724 = vshrl.u32 %v1723, 7
    %v1725 = vsub.s32 %v1722, %v1724
    %v1726 = vrot.slane %v1712, %v1725
    %v1727 = vcombine.low %v1695, %v1710
    %v1728 = vcombine.high %v1695, %v1710
    %v1730 = vunpack.c.l.s4 1934713408
    %v1731 = vunpack.c.0.s8 %v1730
    %v1732 = vlaneseq
    %v1733 = vshrl.u32 %v1732, 7
    %v1734 = vsub.s32 %v1731, %v1733
    %v1735 = vrot.slane %v1727, %v1734
    %v1737 = vunpack.c.l.s4 1934713408
    %v1738 = vunpack.c.0.s8 %v1737
    %v1739 = vlaneseq
    %v1740 = vshrl.u32 %v1739, 7
    %v1741 = vsub.s32 %v1738, %v1740
    %v1742 = vrot.slane %v1728, %v1741
    %v1743 = vcombine.high %v1719, 0.0
    %v1744 = vcombine.high %v1726, 0.0
    %v1745 = vcombine.high %v1735, 0.0
    %v1746 = vcombine.high %v1742, 0.0
    %v1779 = vcombine.low %v1521, %v1545
    %v1780 = vcombine.low %v1528, %v1546
    %v1782 = vunpack.c.l.s4 1983009808
    %v1783 = vunpack.c.0.s8 %v1782
    %v1784 = vlaneseq
    %v1785 = vshrl.u32 %v1784, 7
    %v1786 = vsub.s32 %v1783, %v1785
    %v1787 = vrot.slane %v1779, %v1786
    %v1789 = vunpack.c.l.s4 1983009808
    %v1790 = vunpack.c.0.s8 %v1789
    %v1791 = vlaneseq
    %v1792 = vshrl.u32 %v1791, 7
    %v1793 = vsub.s32 %v1790, %v1792
    %v1794 = vrot.slane %v1780, %v1793
    %v1795 = vcombine.low %v1787, %v1794
    %v1796 = vcombine.low %v1537, %v1547
    %v1797 = vcombine.low %v1544, %v1548
    %v1799 = vunpack.c.l.s4 1983009808
    %v1800 = vunpack.c.0.s8 %v1799
    %v1801 = vlaneseq
    %v1802 = vshrl.u32 %v1801, 7
    %v1803 = vsub.s32 %v1800, %v1802
    %v1804 = vrot.slane %v1796, %v1803
    %v1806 = vunpack.c.l.s4 1983009808
    %v1807 = vunpack.c.0.s8 %v1806
    %v1808 = vlaneseq
    %v1809 = vshrl.u32 %v1808, 7
    %v1810 = vsub.s32 %v1807, %v1809
    %v1811 = vrot.slane %v1797, %v1810
    %v1812 = vcombine.low %v1804, %v1811
    %v1813 = vcombine.low %v1587, %v1611
    %v1814 = vcombine.low %v1594, %v1612
    %v1816 = vunpack.c.l.s4 1983009808
    %v1817 = vunpack.c.0.s8 %v1816
    %v1818 = vlaneseq
    %v1819 = vshrl.u32 %v1818, 7
    %v1820 = vsub.s32 %v1817, %v1819
    %v1821 = vrot.slane %v1813, %v1820
    %v1823 = vunpack.c.l.s4 1983009808
    %v1824 = vunpack.c.0.s8 %v1823
    %v1825 = vlaneseq
    %v1826 = vshrl.u32 %v1825, 7
    %v1827 = vsub.s32 %v1824, %v1826
    %v1828 = vrot.slane %v1814, %v1827
    %v1829 = vcombine.low %v1821, %v1828
    %v1830 = vcombine.low %v1603, %v1613
    %v1831 = vcombine.low %v1610, %v1614
    %v1833 = vunpack.c.l.s4 1983009808
    %v1834 = vunpack.c.0.s8 %v1833
    %v1835 = vlaneseq
    %v1836 = vshrl.u32 %v1835, 7
    %v1837 = vsub.s32 %v1834, %v1836
    %v1838 = vrot.slane %v1830, %v1837
    %v1840 = vunpack.c.l.s4 1983009808
    %v1841 = vunpack.c.0.s8 %v1840
    %v1842 = vlaneseq
    %v1843 = vshrl.u32 %v1842, 7
    %v1844 = vsub.s32 %v1841, %v1843
    %v1845 = vrot.slane %v1831, %v1844
    %v1846 = vcombine.low %v1838, %v1845
    %v1847 = vcombine.low %v1653, %v1677
    %v1848 = vcombine.low %v1660, %v1678
    %v1850 = vunpack.c.l.s4 1983009808
    %v1851 = vunpack.c.0.s8 %v1850
    %v1852 = vlaneseq
    %v1853 = vshrl.u32 %v1852, 7
    %v1854 = vsub.s32 %v1851, %v1853
    %v1855 = vrot.slane %v1847, %v1854
    %v1857 = vunpack.c.l.s4 1983009808
    %v1858 = vunpack.c.0.s8 %v1857
    %v1859 = vlaneseq
    %v1860 = vshrl.u32 %v1859, 7
    %v1861 = vsub.s32 %v1858, %v1860
    %v1862 = vrot.slane %v1848, %v1861
    %v1863 = vcombine.low %v1855, %v1862
    %v1864 = vcombine.low %v1669, %v1679
    %v1865 = vcombine.low %v1676, %v1680
    %v1867 = vunpack.c.l.s4 1983009808
    %v1868 = vunpack.c.0.s8 %v1867
    %v1869 = vlaneseq
    %v1870 = vshrl.u32 %v1869, 7
    %v1871 = vsub.s32 %v1868, %v1870
    %v1872 = vrot.slane %v1864, %v1871
    %v1874 = vunpack.c.l.s4 1983009808
    %v1875 = vunpack.c.0.s8 %v1874
    %v1876 = vlaneseq
    %v1877 = vshrl.u32 %v1876, 7
    %v1878 = vsub.s32 %v1875, %v1877
    %v1879 = vrot.slane %v1865, %v1878
    %v1880 = vcombine.low %v1872, %v1879
    %v1881 = vcombine.low %v1719, %v1743
    %v1882 = vcombine.low %v1726, %v1744
    %v1884 = vunpack.c.l.s4 1983009808
    %v1885 = vunpack.c.0.s8 %v1884
    %v1886 = vlaneseq
    %v1887 = vshrl.u32 %v1886, 7
    %v1888 = vsub.s32 %v1885, %v1887
    %v1889 = vrot.slane %v1881, %v1888
    %v1891 = vunpack.c.l.s4 1983009808
    %v1892 = vunpack.c.0.s8 %v1891
    %v1893 = vlaneseq
    %v1894 = vshrl.u32 %v1893, 7
    %v1895 = vsub.s32 %v1892, %v1894
    %v1896 = vrot.slane %v1882, %v1895
    %v1897 = vcombine.low %v1889, %v1896
    %v1898 = vcombine.low %v1735, %v1745
    %v1899 = vcombine.low %v1742, %v1746
    %v1901 = vunpack.c.l.s4 1983009808
    %v1902 = vunpack.c.0.s8 %v1901
    %v1903 = vlaneseq
    %v1904 = vshrl.u32 %v1903, 7
    %v1905 = vsub.s32 %v1902, %v1904
    %v1906 = vrot.slane %v1898, %v1905
    %v1908 = vunpack.c.l.s4 1983009808
    %v1909 = vunpack.c.0.s8 %v1908
    %v1910 = vlaneseq
    %v1911 = vshrl.u32 %v1910, 7
    %v1912 = vsub.s32 %v1909, %v1911
    %v1913 = vrot.slane %v1899, %v1912
    %v1914 = vcombine.low %v1906, %v1913
    %1923 = vxpose.xlu0.b32.start [1/16] %v1795, 128
    %1924 = vxpose.xlu0.b32.cont [2/16] %v1812, 128
    %1925 = vxpose.xlu0.b32.cont [3/16] %v1829, 128
    %1926 = vxpose.xlu0.b32.cont [4/16] %v1846, 128
    %1927 = vxpose.xlu0.b32.cont [5/16] %v1863, 128
    %1928 = vxpose.xlu0.b32.cont [6/16] %v1880, 128
    %1929 = vxpose.xlu0.b32.cont [7/16] %v1897, 128
    %1930 = vxpose.xlu0.b32.cont [8/16] %v1914, 128
    %1931 = vxpose.xlu0.b32.cont [9/16] 0.0, 128
    %1932 = vxpose.xlu0.b32.cont [10/16] 0.0, 128
    %1933 = vxpose.xlu0.b32.cont [11/16] 0.0, 128
    %1934 = vxpose.xlu0.b32.cont [12/16] 0.0, 128
    %1935 = vxpose.xlu0.b32.cont [13/16] 0.0, 128
    %1936 = vxpose.xlu0.b32.cont [14/16] 0.0, 128
    %1937 = vxpose.xlu0.b32.cont [15/16] 0.0, 128
    %1938 = vxpose.xlu0.b32.end [16/16] 0.0, 128
    %v1939 = vpop.trf.xlu0
    %v1940 = vpop.trf.xlu0
    %v1941 = vpop.trf.xlu0
    %v1942 = vpop.trf.xlu0
    %v1943 = vpop.trf.xlu0
    %v1944 = vpop.trf.xlu0
    %v1945 = vpop.trf.xlu0
    %v1946 = vpop.trf.xlu0
    %v1947 = vpop.trf.xlu0
    %v1948 = vpop.trf.xlu0
    %v1949 = vpop.trf.xlu0
    %v1950 = vpop.trf.xlu0
    %v1951 = vpop.trf.xlu0
    %v1952 = vpop.trf.xlu0
    %v1953 = vpop.trf.xlu0
    %v1954 = vpop.trf.xlu0
    %1955 = vxpose.xlu0.b32.start [1/16] %v240, 128
    %1956 = vxpose.xlu0.b32.cont [2/16] %v245, 128
    %1957 = vxpose.xlu0.b32.cont [3/16] 0.0, 128
    %1958 = vxpose.xlu0.b32.cont [4/16] 0.0, 128
    %1959 = vxpose.xlu0.b32.cont [5/16] 0.0, 128
    %1960 = vxpose.xlu0.b32.cont [6/16] 0.0, 128
    %1961 = vxpose.xlu0.b32.cont [7/16] 0.0, 128
    %1962 = vxpose.xlu0.b32.cont [8/16] 0.0, 128
    %1963 = vxpose.xlu0.b32.cont [9/16] 0.0, 128
    %1964 = vxpose.xlu0.b32.cont [10/16] 0.0, 128
    %1965 = vxpose.xlu0.b32.cont [11/16] 0.0, 128
    %1966 = vxpose.xlu0.b32.cont [12/16] 0.0, 128
    %1967 = vxpose.xlu0.b32.cont [13/16] 0.0, 128
    %1968 = vxpose.xlu0.b32.cont [14/16] 0.0, 128
    %1969 = vxpose.xlu0.b32.cont [15/16] 0.0, 128
    %1970 = vxpose.xlu0.b32.end [16/16] 0.0, 128
    %v1971 = vpop.trf.xlu0
    %v1972 = vpop.trf.xlu0
    %v1973 = vpop.trf.xlu0
    %v1974 = vpop.trf.xlu0
    %v1975 = vpop.trf.xlu0
    %v1976 = vpop.trf.xlu0
    %v1977 = vpop.trf.xlu0
    %v1978 = vpop.trf.xlu0
    %v1979 = vpop.trf.xlu0
    %v1980 = vpop.trf.xlu0
    %v1981 = vpop.trf.xlu0
    %v1982 = vpop.trf.xlu0
    %v1983 = vpop.trf.xlu0
    %v1984 = vpop.trf.xlu0
    %v1985 = vpop.trf.xlu0
    %v1986 = vpop.trf.xlu0
    %1987 = vxpose.xlu0.b32.start [1/16] %v1971, 128
    %1988 = vxpose.xlu0.b32.cont [2/16] 0.0, 128
    %1989 = vxpose.xlu0.b32.cont [3/16] 0.0, 128
    %1990 = vxpose.xlu0.b32.cont [4/16] 0.0, 128
    %1991 = vxpose.xlu0.b32.cont [5/16] 0.0, 128
    %1992 = vxpose.xlu0.b32.cont [6/16] 0.0, 128
    %1993 = vxpose.xlu0.b32.cont [7/16] 0.0, 128
    %1994 = vxpose.xlu0.b32.cont [8/16] 0.0, 128
    %1995 = vxpose.xlu0.b32.cont [9/16] 0.0, 128
    %1996 = vxpose.xlu0.b32.cont [10/16] 0.0, 128
    %1997 = vxpose.xlu0.b32.cont [11/16] 0.0, 128
    %1998 = vxpose.xlu0.b32.cont [12/16] 0.0, 128
    %1999 = vxpose.xlu0.b32.cont [13/16] 0.0, 128
    %2000 = vxpose.xlu0.b32.cont [14/16] 0.0, 128
    %2001 = vxpose.xlu0.b32.cont [15/16] 0.0, 128
    %2002 = vxpose.xlu0.b32.end [16/16] 0.0, 128
    %v2003 = vpop.trf.xlu0
    %v2004 = vpop.trf.xlu0
    %v2005 = vpop.trf.xlu0
    %v2006 = vpop.trf.xlu0
    %v2007 = vpop.trf.xlu0
    %v2008 = vpop.trf.xlu0
    %v2009 = vpop.trf.xlu0
    %v2010 = vpop.trf.xlu0
    %v2011 = vpop.trf.xlu0
    %v2012 = vpop.trf.xlu0
    %v2013 = vpop.trf.xlu0
    %v2014 = vpop.trf.xlu0
    %v2015 = vpop.trf.xlu0
    %v2016 = vpop.trf.xlu0
    %v2017 = vpop.trf.xlu0
    %v2018 = vpop.trf.xlu0
    %2019 = vxpose.xlu0.b32.start [1/16] %v1972, 128
    %2020 = vxpose.xlu0.b32.cont [2/16] 0.0, 128
    %2021 = vxpose.xlu0.b32.cont [3/16] 0.0, 128
    %2022 = vxpose.xlu0.b32.cont [4/16] 0.0, 128
    %2023 = vxpose.xlu0.b32.cont [5/16] 0.0, 128
    %2024 = vxpose.xlu0.b32.cont [6/16] 0.0, 128
    %2025 = vxpose.xlu0.b32.cont [7/16] 0.0, 128
    %2026 = vxpose.xlu0.b32.cont [8/16] 0.0, 128
    %2027 = vxpose.xlu0.b32.cont [9/16] 0.0, 128
    %2028 = vxpose.xlu0.b32.cont [10/16] 0.0, 128
    %2029 = vxpose.xlu0.b32.cont [11/16] 0.0, 128
    %2030 = vxpose.xlu0.b32.cont [12/16] 0.0, 128
    %2031 = vxpose.xlu0.b32.cont [13/16] 0.0, 128
    %2032 = vxpose.xlu0.b32.cont [14/16] 0.0, 128
    %2033 = vxpose.xlu0.b32.cont [15/16] 0.0, 128
    %2034 = vxpose.xlu0.b32.end [16/16] 0.0, 128
    %v2035 = vpop.trf.xlu0
    %v2036 = vpop.trf.xlu0
    %v2037 = vpop.trf.xlu0
    %v2038 = vpop.trf.xlu0
    %v2039 = vpop.trf.xlu0
    %v2040 = vpop.trf.xlu0
    %v2041 = vpop.trf.xlu0
    %v2042 = vpop.trf.xlu0
    %v2043 = vpop.trf.xlu0
    %v2044 = vpop.trf.xlu0
    %v2045 = vpop.trf.xlu0
    %v2046 = vpop.trf.xlu0
    %v2047 = vpop.trf.xlu0
    %v2048 = vpop.trf.xlu0
    %v2049 = vpop.trf.xlu0
    %v2050 = vpop.trf.xlu0
    %2051 = vxpose.xlu0.b32.start [1/16] %v1973, 128
    %2052 = vxpose.xlu0.b32.cont [2/16] 0.0, 128
    %2053 = vxpose.xlu0.b32.cont [3/16] 0.0, 128
    %2054 = vxpose.xlu0.b32.cont [4/16] 0.0, 128
    %2055 = vxpose.xlu0.b32.cont [5/16] 0.0, 128
    %2056 = vxpose.xlu0.b32.cont [6/16] 0.0, 128
    %2057 = vxpose.xlu0.b32.cont [7/16] 0.0, 128
    %2058 = vxpose.xlu0.b32.cont [8/16] 0.0, 128
    %2059 = vxpose.xlu0.b32.cont [9/16] 0.0, 128
    %2060 = vxpose.xlu0.b32.cont [10/16] 0.0, 128
    %2061 = vxpose.xlu0.b32.cont [11/16] 0.0, 128
    %2062 = vxpose.xlu0.b32.cont [12/16] 0.0, 128
    %2063 = vxpose.xlu0.b32.cont [13/16] 0.0, 128
    %2064 = vxpose.xlu0.b32.cont [14/16] 0.0, 128
    %2065 = vxpose.xlu0.b32.cont [15/16] 0.0, 128
    %2066 = vxpose.xlu0.b32.end [16/16] 0.0, 128
    %v2067 = vpop.trf.xlu0
    %v2068 = vpop.trf.xlu0
    %v2069 = vpop.trf.xlu0
    %v2070 = vpop.trf.xlu0
    %v2071 = vpop.trf.xlu0
    %v2072 = vpop.trf.xlu0
    %v2073 = vpop.trf.xlu0
    %v2074 = vpop.trf.xlu0
    %v2075 = vpop.trf.xlu0
    %v2076 = vpop.trf.xlu0
    %v2077 = vpop.trf.xlu0
    %v2078 = vpop.trf.xlu0
    %v2079 = vpop.trf.xlu0
    %v2080 = vpop.trf.xlu0
    %v2081 = vpop.trf.xlu0
    %v2082 = vpop.trf.xlu0
    %2083 = vxpose.xlu0.b32.start [1/16] %v1974, 128
    %2084 = vxpose.xlu0.b32.cont [2/16] 0.0, 128
    %2085 = vxpose.xlu0.b32.cont [3/16] 0.0, 128
    %2086 = vxpose.xlu0.b32.cont [4/16] 0.0, 128
    %2087 = vxpose.xlu0.b32.cont [5/16] 0.0, 128
    %2088 = vxpose.xlu0.b32.cont [6/16] 0.0, 128
    %2089 = vxpose.xlu0.b32.cont [7/16] 0.0, 128
    %2090 = vxpose.xlu0.b32.cont [8/16] 0.0, 128
    %2091 = vxpose.xlu0.b32.cont [9/16] 0.0, 128
    %2092 = vxpose.xlu0.b32.cont [10/16] 0.0, 128
    %2093 = vxpose.xlu0.b32.cont [11/16] 0.0, 128
    %2094 = vxpose.xlu0.b32.cont [12/16] 0.0, 128
    %2095 = vxpose.xlu0.b32.cont [13/16] 0.0, 128
    %2096 = vxpose.xlu0.b32.cont [14/16] 0.0, 128
    %2097 = vxpose.xlu0.b32.cont [15/16] 0.0, 128
    %2098 = vxpose.xlu0.b32.end [16/16] 0.0, 128
    %v2099 = vpop.trf.xlu0
    %v2100 = vpop.trf.xlu0
    %v2101 = vpop.trf.xlu0
    %v2102 = vpop.trf.xlu0
    %v2103 = vpop.trf.xlu0
    %v2104 = vpop.trf.xlu0
    %v2105 = vpop.trf.xlu0
    %v2106 = vpop.trf.xlu0
    %v2107 = vpop.trf.xlu0
    %v2108 = vpop.trf.xlu0
    %v2109 = vpop.trf.xlu0
    %v2110 = vpop.trf.xlu0
    %v2111 = vpop.trf.xlu0
    %v2112 = vpop.trf.xlu0
    %v2113 = vpop.trf.xlu0
    %v2114 = vpop.trf.xlu0
    %2115 = vxpose.xlu0.b32.start [1/16] %v1975, 128
    %2116 = vxpose.xlu0.b32.cont [2/16] 0.0, 128
    %2117 = vxpose.xlu0.b32.cont [3/16] 0.0, 128
    %2118 = vxpose.xlu0.b32.cont [4/16] 0.0, 128
    %2119 = vxpose.xlu0.b32.cont [5/16] 0.0, 128
    %2120 = vxpose.xlu0.b32.cont [6/16] 0.0, 128
    %2121 = vxpose.xlu0.b32.cont [7/16] 0.0, 128
    %2122 = vxpose.xlu0.b32.cont [8/16] 0.0, 128
    %2123 = vxpose.xlu0.b32.cont [9/16] 0.0, 128
    %2124 = vxpose.xlu0.b32.cont [10/16] 0.0, 128
    %2125 = vxpose.xlu0.b32.cont [11/16] 0.0, 128
    %2126 = vxpose.xlu0.b32.cont [12/16] 0.0, 128
    %2127 = vxpose.xlu0.b32.cont [13/16] 0.0, 128
    %2128 = vxpose.xlu0.b32.cont [14/16] 0.0, 128
    %2129 = vxpose.xlu0.b32.cont [15/16] 0.0, 128
    %2130 = vxpose.xlu0.b32.end [16/16] 0.0, 128
    %v2131 = vpop.trf.xlu0
    %v2132 = vpop.trf.xlu0
    %v2133 = vpop.trf.xlu0
    %v2134 = vpop.trf.xlu0
    %v2135 = vpop.trf.xlu0
    %v2136 = vpop.trf.xlu0
    %v2137 = vpop.trf.xlu0
    %v2138 = vpop.trf.xlu0
    %v2139 = vpop.trf.xlu0
    %v2140 = vpop.trf.xlu0
    %v2141 = vpop.trf.xlu0
    %v2142 = vpop.trf.xlu0
    %v2143 = vpop.trf.xlu0
    %v2144 = vpop.trf.xlu0
    %v2145 = vpop.trf.xlu0
    %v2146 = vpop.trf.xlu0
    %2147 = vxpose.xlu0.b32.start [1/16] %v1976, 128
    %2148 = vxpose.xlu0.b32.cont [2/16] 0.0, 128
    %2149 = vxpose.xlu0.b32.cont [3/16] 0.0, 128
    %2150 = vxpose.xlu0.b32.cont [4/16] 0.0, 128
    %2151 = vxpose.xlu0.b32.cont [5/16] 0.0, 128
    %2152 = vxpose.xlu0.b32.cont [6/16] 0.0, 128
    %2153 = vxpose.xlu0.b32.cont [7/16] 0.0, 128
    %2154 = vxpose.xlu0.b32.cont [8/16] 0.0, 128
    %2155 = vxpose.xlu0.b32.cont [9/16] 0.0, 128
    %2156 = vxpose.xlu0.b32.cont [10/16] 0.0, 128
    %2157 = vxpose.xlu0.b32.cont [11/16] 0.0, 128
    %2158 = vxpose.xlu0.b32.cont [12/16] 0.0, 128
    %2159 = vxpose.xlu0.b32.cont [13/16] 0.0, 128
    %2160 = vxpose.xlu0.b32.cont [14/16] 0.0, 128
    %2161 = vxpose.xlu0.b32.cont [15/16] 0.0, 128
    %2162 = vxpose.xlu0.b32.end [16/16] 0.0, 128
    %v2163 = vpop.trf.xlu0
    %v2164 = vpop.trf.xlu0
    %v2165 = vpop.trf.xlu0
    %v2166 = vpop.trf.xlu0
    %v2167 = vpop.trf.xlu0
    %v2168 = vpop.trf.xlu0
    %v2169 = vpop.trf.xlu0
    %v2170 = vpop.trf.xlu0
    %v2171 = vpop.trf.xlu0
    %v2172 = vpop.trf.xlu0
    %v2173 = vpop.trf.xlu0
    %v2174 = vpop.trf.xlu0
    %v2175 = vpop.trf.xlu0
    %v2176 = vpop.trf.xlu0
    %v2177 = vpop.trf.xlu0
    %v2178 = vpop.trf.xlu0
    %2179 = vxpose.xlu0.b32.start [1/16] %v1977, 128
    %2180 = vxpose.xlu0.b32.cont [2/16] 0.0, 128
    %2181 = vxpose.xlu0.b32.cont [3/16] 0.0, 128
    %2182 = vxpose.xlu0.b32.cont [4/16] 0.0, 128
    %2183 = vxpose.xlu0.b32.cont [5/16] 0.0, 128
    %2184 = vxpose.xlu0.b32.cont [6/16] 0.0, 128
    %2185 = vxpose.xlu0.b32.cont [7/16] 0.0, 128
    %2186 = vxpose.xlu0.b32.cont [8/16] 0.0, 128
    %2187 = vxpose.xlu0.b32.cont [9/16] 0.0, 128
    %2188 = vxpose.xlu0.b32.cont [10/16] 0.0, 128
    %2189 = vxpose.xlu0.b32.cont [11/16] 0.0, 128
    %2190 = vxpose.xlu0.b32.cont [12/16] 0.0, 128
    %2191 = vxpose.xlu0.b32.cont [13/16] 0.0, 128
    %2192 = vxpose.xlu0.b32.cont [14/16] 0.0, 128
    %2193 = vxpose.xlu0.b32.cont [15/16] 0.0, 128
    %2194 = vxpose.xlu0.b32.end [16/16] 0.0, 128
    %v2195 = vpop.trf.xlu0
    %v2196 = vpop.trf.xlu0
    %v2197 = vpop.trf.xlu0
    %v2198 = vpop.trf.xlu0
    %v2199 = vpop.trf.xlu0
    %v2200 = vpop.trf.xlu0
    %v2201 = vpop.trf.xlu0
    %v2202 = vpop.trf.xlu0
    %v2203 = vpop.trf.xlu0
    %v2204 = vpop.trf.xlu0
    %v2205 = vpop.trf.xlu0
    %v2206 = vpop.trf.xlu0
    %v2207 = vpop.trf.xlu0
    %v2208 = vpop.trf.xlu0
    %v2209 = vpop.trf.xlu0
    %v2210 = vpop.trf.xlu0
    %2211 = vxpose.xlu0.b32.start [1/16] %v1978, 128
    %2212 = vxpose.xlu0.b32.cont [2/16] 0.0, 128
    %2213 = vxpose.xlu0.b32.cont [3/16] 0.0, 128
    %2214 = vxpose.xlu0.b32.cont [4/16] 0.0, 128
    %2215 = vxpose.xlu0.b32.cont [5/16] 0.0, 128
    %2216 = vxpose.xlu0.b32.cont [6/16] 0.0, 128
    %2217 = vxpose.xlu0.b32.cont [7/16] 0.0, 128
    %2218 = vxpose.xlu0.b32.cont [8/16] 0.0, 128
    %2219 = vxpose.xlu0.b32.cont [9/16] 0.0, 128
    %2220 = vxpose.xlu0.b32.cont [10/16] 0.0, 128
    %2221 = vxpose.xlu0.b32.cont [11/16] 0.0, 128
    %2222 = vxpose.xlu0.b32.cont [12/16] 0.0, 128
    %2223 = vxpose.xlu0.b32.cont [13/16] 0.0, 128
    %2224 = vxpose.xlu0.b32.cont [14/16] 0.0, 128
    %2225 = vxpose.xlu0.b32.cont [15/16] 0.0, 128
    %2226 = vxpose.xlu0.b32.end [16/16] 0.0, 128
    %v2227 = vpop.trf.xlu0
    %v2228 = vpop.trf.xlu0
    %v2229 = vpop.trf.xlu0
    %v2230 = vpop.trf.xlu0
    %v2231 = vpop.trf.xlu0
    %v2232 = vpop.trf.xlu0
    %v2233 = vpop.trf.xlu0
    %v2234 = vpop.trf.xlu0
    %v2235 = vpop.trf.xlu0
    %v2236 = vpop.trf.xlu0
    %v2237 = vpop.trf.xlu0
    %v2238 = vpop.trf.xlu0
    %v2239 = vpop.trf.xlu0
    %v2240 = vpop.trf.xlu0
    %v2241 = vpop.trf.xlu0
    %v2242 = vpop.trf.xlu0
    %v2244 = vsel %vm538, %v2003, 0
    %v2247 = vsel %vm538, %v2004, 0
    %v2250 = vsel %vm538, %v2035, 0
    %v2253 = vsel %vm538, %v2036, 0
    %2255 = vmatprep.subr.mxu0 0.0
    %2256 = vmatpush1.msra.mxu0 0.0
    %2257 = vmatprep.subr.mxu0 0.0
    %2258 = vmatpush1.msra.mxu0 0.0
    %2259 = vmatprep.subr.mxu0 0.0
    %2260 = vmatpush1.msra.mxu0 0.0
    %2261 = vmatprep.subr.mxu0 0.0
    %2262 = vmatpush1.msra.mxu0 0.0
    %2263 = vmatprep.subr.mxu0 0.0
    %2264 = vmatpush1.msra.mxu0 0.0
    %2265 = vmatprep.subr.mxu0 0.0
    %2266 = vmatpush1.msra.mxu0 0.0
    %2267 = vmatprep.subr.mxu0 0.0
    %2268 = vmatpush1.msra.mxu0 0.0
    %2269 = vmatprep.subr.mxu0 0.0
    %2270 = vmatpush1.msra.mxu0 0.0
    %2271 = vmatprep.subr.mxu0 0.0
    %2272 = vmatpush1.msra.mxu0 0.0
    %2273 = vmatprep.subr.mxu0 0.0
    %2274 = vmatpush1.msra.mxu0 0.0
    %2275 = vmatprep.subr.mxu0 0.0
    %2276 = vmatpush1.msra.mxu0 0.0
    %2277 = vmatprep.subr.mxu0 0.0
    %2278 = vmatpush1.msra.mxu0 0.0
    %2279 = vmatprep.subr.mxu0 0.0
    %2280 = vmatpush1.msra.mxu0 0.0
    %2281 = vmatprep.subr.mxu0 0.0
    %2282 = vmatpush1.msra.mxu0 0.0
    %2283 = vmatprep.subr.mxu0 0.0
    %2284 = vmatpush1.msra.mxu0 0.0
    %2285 = vmatprep.subr.mxu0 0.0
    %2286 = vmatpush1.msra.mxu0 %v1979
    %2287 = vmatprep.subr.mxu0 0.0
    %2288 = vmatpush2.msra.mxu0 0.0
    %2289 = vmatprep.subr.mxu0 0.0
    %2290 = vmatpush2.msra.mxu0 0.0
    %2291 = vmatprep.subr.mxu0 0.0
    %2292 = vmatpush2.msra.mxu0 0.0
    %2293 = vmatprep.subr.mxu0 0.0
    %2294 = vmatpush2.msra.mxu0 0.0
    %2295 = vmatprep.subr.mxu0 0.0
    %2296 = vmatpush2.msra.mxu0 0.0
    %2297 = vmatprep.subr.mxu0 0.0
    %2298 = vmatpush2.msra.mxu0 0.0
    %2299 = vmatprep.subr.mxu0 0.0
    %2300 = vmatpush2.msra.mxu0 0.0
    %2301 = vmatprep.subr.mxu0 0.0
    %2302 = vmatpush2.msra.mxu0 0.0
    %2303 = vmatprep.subr.mxu0 0.0
    %2304 = vmatpush2.msra.mxu0 0.0
    %2305 = vmatprep.subr.mxu0 0.0
    %2306 = vmatpush2.msra.mxu0 0.0
    %2307 = vmatprep.subr.mxu0 0.0
    %2308 = vmatpush2.msra.mxu0 0.0
    %2309 = vmatprep.subr.mxu0 0.0
    %2310 = vmatpush2.msra.mxu0 0.0
    %2311 = vmatprep.subr.mxu0 0.0
    %2312 = vmatpush2.msra.mxu0 0.0
    %2313 = vmatprep.subr.mxu0 0.0
    %2314 = vmatpush2.msra.mxu0 0.0
    %2315 = vmatprep.subr.mxu0 0.0
    %2316 = vmatpush2.msra.mxu0 0.0
    %2317 = vmatprep.subr.mxu0 0.0
    %2318 = vmatpush2.msra.mxu0 0.0
    %2319 = vmatprep.mubr.f32.mxu0 0.0
    %2320 = vmatmul.mubr.f32.gmra.mxu0 %v2244
    %v2321 = vpop.f32.mrf.mxu0
    %v2322 = vadd.f32 %v248, %v2321
    %v2323 = vpop.f32.mrf.mxu0
    %2324 = vmatprep.mubr.f32.mxu0 0.0
    %2325 = vmatmul.mubr.f32.gmra.mxu0 %v2247
    %v2326 = vpop.f32.mrf.mxu0
    %v2327 = vadd.f32 %v249, %v2326
    %v2328 = vpop.f32.mrf.mxu0
    %2329 = vmatprep.mubr.f32.mxu0 0.0
    %2330 = vmatmul.mubr.f32.gmra.mxu0 %v2250
    %v2331 = vpop.f32.mrf.mxu0
    %v2332 = vadd.f32 %v248, %v2331
    %v2333 = vpop.f32.mrf.mxu0
    %2334 = vmatprep.mubr.f32.mxu0 0.0
    %2335 = vmatmul.mubr.f32.gmra.mxu0 %v2253
    %v2336 = vpop.f32.mrf.mxu0
    %v2337 = vadd.f32 %v249, %v2336
    %v2338 = vpop.f32.mrf.mxu0
    %2339 = vdwg.mxu0
    %v2341 = vsel %vm538, %v2067, 0
    %v2344 = vsel %vm538, %v2068, 0
    %v2347 = vsel %vm538, %v2099, 0
    %v2350 = vsel %vm538, %v2100, 0
    %2352 = vmatprep.subr.mxu0 0.0
    %2353 = vmatpush1.msra.mxu0 0.0
    %2354 = vmatprep.subr.mxu0 0.0
    %2355 = vmatpush1.msra.mxu0 0.0
    %2356 = vmatprep.subr.mxu0 0.0
    %2357 = vmatpush1.msra.mxu0 0.0
    %2358 = vmatprep.subr.mxu0 0.0
    %2359 = vmatpush1.msra.mxu0 0.0
    %2360 = vmatprep.subr.mxu0 0.0
    %2361 = vmatpush1.msra.mxu0 0.0
    %2362 = vmatprep.subr.mxu0 0.0
    %2363 = vmatpush1.msra.mxu0 0.0
    %2364 = vmatprep.subr.mxu0 0.0
    %2365 = vmatpush1.msra.mxu0 0.0
    %2366 = vmatprep.subr.mxu0 0.0
    %2367 = vmatpush1.msra.mxu0 0.0
    %2368 = vmatprep.subr.mxu0 0.0
    %2369 = vmatpush1.msra.mxu0 0.0
    %2370 = vmatprep.subr.mxu0 0.0
    %2371 = vmatpush1.msra.mxu0 0.0
    %2372 = vmatprep.subr.mxu0 0.0
    %2373 = vmatpush1.msra.mxu0 0.0
    %2374 = vmatprep.subr.mxu0 0.0
    %2375 = vmatpush1.msra.mxu0 0.0
    %2376 = vmatprep.subr.mxu0 0.0
    %2377 = vmatpush1.msra.mxu0 0.0
    %2378 = vmatprep.subr.mxu0 0.0
    %2379 = vmatpush1.msra.mxu0 0.0
    %2380 = vmatprep.subr.mxu0 0.0
    %2381 = vmatpush1.msra.mxu0 0.0
    %2382 = vmatprep.subr.mxu0 0.0
    %2383 = vmatpush1.msra.mxu0 %v1980
    %2384 = vmatprep.subr.mxu0 0.0
    %2385 = vmatpush2.msra.mxu0 0.0
    %2386 = vmatprep.subr.mxu0 0.0
    %2387 = vmatpush2.msra.mxu0 0.0
    %2388 = vmatprep.subr.mxu0 0.0
    %2389 = vmatpush2.msra.mxu0 0.0
    %2390 = vmatprep.subr.mxu0 0.0
    %2391 = vmatpush2.msra.mxu0 0.0
    %2392 = vmatprep.subr.mxu0 0.0
    %2393 = vmatpush2.msra.mxu0 0.0
    %2394 = vmatprep.subr.mxu0 0.0
    %2395 = vmatpush2.msra.mxu0 0.0
    %2396 = vmatprep.subr.mxu0 0.0
    %2397 = vmatpush2.msra.mxu0 0.0
    %2398 = vmatprep.subr.mxu0 0.0
    %2399 = vmatpush2.msra.mxu0 0.0
    %2400 = vmatprep.subr.mxu0 0.0
    %2401 = vmatpush2.msra.mxu0 0.0
    %2402 = vmatprep.subr.mxu0 0.0
    %2403 = vmatpush2.msra.mxu0 0.0
    %2404 = vmatprep.subr.mxu0 0.0
    %2405 = vmatpush2.msra.mxu0 0.0
    %2406 = vmatprep.subr.mxu0 0.0
    %2407 = vmatpush2.msra.mxu0 0.0
    %2408 = vmatprep.subr.mxu0 0.0
    %2409 = vmatpush2.msra.mxu0 0.0
    %2410 = vmatprep.subr.mxu0 0.0
    %2411 = vmatpush2.msra.mxu0 0.0
    %2412 = vmatprep.subr.mxu0 0.0
    %2413 = vmatpush2.msra.mxu0 0.0
    %2414 = vmatprep.subr.mxu0 0.0
    %2415 = vmatpush2.msra.mxu0 0.0
    %2416 = vmatprep.mubr.f32.mxu0 0.0
    %2417 = vmatmul.mubr.f32.gmra.mxu0 %v2341
    %v2418 = vpop.f32.mrf.mxu0
    %v2419 = vadd.f32 %v248, %v2418
    %v2420 = vpop.f32.mrf.mxu0
    %2421 = vmatprep.mubr.f32.mxu0 0.0
    %2422 = vmatmul.mubr.f32.gmra.mxu0 %v2344
    %v2423 = vpop.f32.mrf.mxu0
    %v2424 = vadd.f32 %v249, %v2423
    %v2425 = vpop.f32.mrf.mxu0
    %2426 = vmatprep.mubr.f32.mxu0 0.0
    %2427 = vmatmul.mubr.f32.gmra.mxu0 %v2347
    %v2428 = vpop.f32.mrf.mxu0
    %v2429 = vadd.f32 %v248, %v2428
    %v2430 = vpop.f32.mrf.mxu0
    %2431 = vmatprep.mubr.f32.mxu0 0.0
    %2432 = vmatmul.mubr.f32.gmra.mxu0 %v2350
    %v2433 = vpop.f32.mrf.mxu0
    %v2434 = vadd.f32 %v249, %v2433
    %v2435 = vpop.f32.mrf.mxu0
    %2436 = vdwg.mxu0
    %v2438 = vsel %vm538, %v2131, 0
    %v2441 = vsel %vm538, %v2132, 0
    %v2444 = vsel %vm538, %v2163, 0
    %v2447 = vsel %vm538, %v2164, 0
    %2449 = vmatprep.subr.mxu0 0.0
    %2450 = vmatpush1.msra.mxu0 0.0
    %2451 = vmatprep.subr.mxu0 0.0
    %2452 = vmatpush1.msra.mxu0 0.0
    %2453 = vmatprep.subr.mxu0 0.0
    %2454 = vmatpush1.msra.mxu0 0.0
    %2455 = vmatprep.subr.mxu0 0.0
    %2456 = vmatpush1.msra.mxu0 0.0
    %2457 = vmatprep.subr.mxu0 0.0
    %2458 = vmatpush1.msra.mxu0 0.0
    %2459 = vmatprep.subr.mxu0 0.0
    %2460 = vmatpush1.msra.mxu0 0.0
    %2461 = vmatprep.subr.mxu0 0.0
    %2462 = vmatpush1.msra.mxu0 0.0
    %2463 = vmatprep.subr.mxu0 0.0
    %2464 = vmatpush1.msra.mxu0 0.0
    %2465 = vmatprep.subr.mxu0 0.0
    %2466 = vmatpush1.msra.mxu0 0.0
    %2467 = vmatprep.subr.mxu0 0.0
    %2468 = vmatpush1.msra.mxu0 0.0
    %2469 = vmatprep.subr.mxu0 0.0
    %2470 = vmatpush1.msra.mxu0 0.0
    %2471 = vmatprep.subr.mxu0 0.0
    %2472 = vmatpush1.msra.mxu0 0.0
    %2473 = vmatprep.subr.mxu0 0.0
    %2474 = vmatpush1.msra.mxu0 0.0
    %2475 = vmatprep.subr.mxu0 0.0
    %2476 = vmatpush1.msra.mxu0 0.0
    %2477 = vmatprep.subr.mxu0 0.0
    %2478 = vmatpush1.msra.mxu0 0.0
    %2479 = vmatprep.subr.mxu0 0.0
    %2480 = vmatpush1.msra.mxu0 %v1981
    %2481 = vmatprep.subr.mxu0 0.0
    %2482 = vmatpush2.msra.mxu0 0.0
    %2483 = vmatprep.subr.mxu0 0.0
    %2484 = vmatpush2.msra.mxu0 0.0
    %2485 = vmatprep.subr.mxu0 0.0
    %2486 = vmatpush2.msra.mxu0 0.0
    %2487 = vmatprep.subr.mxu0 0.0
    %2488 = vmatpush2.msra.mxu0 0.0
    %2489 = vmatprep.subr.mxu0 0.0
    %2490 = vmatpush2.msra.mxu0 0.0
    %2491 = vmatprep.subr.mxu0 0.0
    %2492 = vmatpush2.msra.mxu0 0.0
    %2493 = vmatprep.subr.mxu0 0.0
    %2494 = vmatpush2.msra.mxu0 0.0
    %2495 = vmatprep.subr.mxu0 0.0
    %2496 = vmatpush2.msra.mxu0 0.0
    %2497 = vmatprep.subr.mxu0 0.0
    %2498 = vmatpush2.msra.mxu0 0.0
    %2499 = vmatprep.subr.mxu0 0.0
    %2500 = vmatpush2.msra.mxu0 0.0
    %2501 = vmatprep.subr.mxu0 0.0
    %2502 = vmatpush2.msra.mxu0 0.0
    %2503 = vmatprep.subr.mxu0 0.0
    %2504 = vmatpush2.msra.mxu0 0.0
    %2505 = vmatprep.subr.mxu0 0.0
    %2506 = vmatpush2.msra.mxu0 0.0
    %2507 = vmatprep.subr.mxu0 0.0
    %2508 = vmatpush2.msra.mxu0 0.0
    %2509 = vmatprep.subr.mxu0 0.0
    %2510 = vmatpush2.msra.mxu0 0.0
    %2511 = vmatprep.subr.mxu0 0.0
    %2512 = vmatpush2.msra.mxu0 0.0
    %2513 = vmatprep.mubr.f32.mxu0 0.0
    %2514 = vmatmul.mubr.f32.gmra.mxu0 %v2438
    %v2515 = vpop.f32.mrf.mxu0
    %v2516 = vadd.f32 %v248, %v2515
    %v2517 = vpop.f32.mrf.mxu0
    %2518 = vmatprep.mubr.f32.mxu0 0.0
    %2519 = vmatmul.mubr.f32.gmra.mxu0 %v2441
    %v2520 = vpop.f32.mrf.mxu0
    %v2521 = vadd.f32 %v249, %v2520
    %v2522 = vpop.f32.mrf.mxu0
    %2523 = vmatprep.mubr.f32.mxu0 0.0
    %2524 = vmatmul.mubr.f32.gmra.mxu0 %v2444
    %v2525 = vpop.f32.mrf.mxu0
    %v2526 = vadd.f32 %v248, %v2525
    %v2527 = vpop.f32.mrf.mxu0
    %2528 = vmatprep.mubr.f32.mxu0 0.0
    %2529 = vmatmul.mubr.f32.gmra.mxu0 %v2447
    %v2530 = vpop.f32.mrf.mxu0
    %v2531 = vadd.f32 %v249, %v2530
    %v2532 = vpop.f32.mrf.mxu0
    %2533 = vdwg.mxu0
    %v2535 = vsel %vm538, %v2195, 0
    %v2538 = vsel %vm538, %v2196, 0
    %v2541 = vsel %vm538, %v2227, 0
    %v2544 = vsel %vm538, %v2228, 0
    %2546 = vmatprep.subr.mxu0 0.0
    %2547 = vmatpush1.msra.mxu0 0.0
    %2548 = vmatprep.subr.mxu0 0.0
    %2549 = vmatpush1.msra.mxu0 0.0
    %2550 = vmatprep.subr.mxu0 0.0
    %2551 = vmatpush1.msra.mxu0 0.0
    %2552 = vmatprep.subr.mxu0 0.0
    %2553 = vmatpush1.msra.mxu0 0.0
    %2554 = vmatprep.subr.mxu0 0.0
    %2555 = vmatpush1.msra.mxu0 0.0
    %2556 = vmatprep.subr.mxu0 0.0
    %2557 = vmatpush1.msra.mxu0 0.0
    %2558 = vmatprep.subr.mxu0 0.0
    %2559 = vmatpush1.msra.mxu0 0.0
    %2560 = vmatprep.subr.mxu0 0.0
    %2561 = vmatpush1.msra.mxu0 0.0
    %2562 = vmatprep.subr.mxu0 0.0
    %2563 = vmatpush1.msra.mxu0 0.0
    %2564 = vmatprep.subr.mxu0 0.0
    %2565 = vmatpush1.msra.mxu0 0.0
    %2566 = vmatprep.subr.mxu0 0.0
    %2567 = vmatpush1.msra.mxu0 0.0
    %2568 = vmatprep.subr.mxu0 0.0
    %2569 = vmatpush1.msra.mxu0 0.0
    %2570 = vmatprep.subr.mxu0 0.0
    %2571 = vmatpush1.msra.mxu0 0.0
    %2572 = vmatprep.subr.mxu0 0.0
    %2573 = vmatpush1.msra.mxu0 0.0
    %2574 = vmatprep.subr.mxu0 0.0
    %2575 = vmatpush1.msra.mxu0 0.0
    %2576 = vmatprep.subr.mxu0 0.0
    %2577 = vmatpush1.msra.mxu0 %v1982
    %2578 = vmatprep.subr.mxu0 0.0
    %2579 = vmatpush2.msra.mxu0 0.0
    %2580 = vmatprep.subr.mxu0 0.0
    %2581 = vmatpush2.msra.mxu0 0.0
    %2582 = vmatprep.subr.mxu0 0.0
    %2583 = vmatpush2.msra.mxu0 0.0
    %2584 = vmatprep.subr.mxu0 0.0
    %2585 = vmatpush2.msra.mxu0 0.0
    %2586 = vmatprep.subr.mxu0 0.0
    %2587 = vmatpush2.msra.mxu0 0.0
    %2588 = vmatprep.subr.mxu0 0.0
    %2589 = vmatpush2.msra.mxu0 0.0
    %2590 = vmatprep.subr.mxu0 0.0
    %2591 = vmatpush2.msra.mxu0 0.0
    %2592 = vmatprep.subr.mxu0 0.0
    %2593 = vmatpush2.msra.mxu0 0.0
    %2594 = vmatprep.subr.mxu0 0.0
    %2595 = vmatpush2.msra.mxu0 0.0
    %2596 = vmatprep.subr.mxu0 0.0
    %2597 = vmatpush2.msra.mxu0 0.0
    %2598 = vmatprep.subr.mxu0 0.0
    %2599 = vmatpush2.msra.mxu0 0.0
    %2600 = vmatprep.subr.mxu0 0.0
    %2601 = vmatpush2.msra.mxu0 0.0
    %2602 = vmatprep.subr.mxu0 0.0
    %2603 = vmatpush2.msra.mxu0 0.0
    %2604 = vmatprep.subr.mxu0 0.0
    %2605 = vmatpush2.msra.mxu0 0.0
    %2606 = vmatprep.subr.mxu0 0.0
    %2607 = vmatpush2.msra.mxu0 0.0
    %2608 = vmatprep.subr.mxu0 0.0
    %2609 = vmatpush2.msra.mxu0 0.0
    %2610 = vmatprep.mubr.f32.mxu0 0.0
    %2611 = vmatmul.mubr.f32.gmra.mxu0 %v2535
    %v2612 = vpop.f32.mrf.mxu0
    %v2613 = vadd.f32 %v248, %v2612
    %v2614 = vpop.f32.mrf.mxu0
    %2615 = vmatprep.mubr.f32.mxu0 0.0
    %2616 = vmatmul.mubr.f32.gmra.mxu0 %v2538
    %v2617 = vpop.f32.mrf.mxu0
    %v2618 = vadd.f32 %v249, %v2617
    %v2619 = vpop.f32.mrf.mxu0
    %2620 = vmatprep.mubr.f32.mxu0 0.0
    %2621 = vmatmul.mubr.f32.gmra.mxu0 %v2541
    %v2622 = vpop.f32.mrf.mxu0
    %v2623 = vadd.f32 %v248, %v2622
    %v2624 = vpop.f32.mrf.mxu0
    %2625 = vmatprep.mubr.f32.mxu0 0.0
    %2626 = vmatmul.mubr.f32.gmra.mxu0 %v2544
    %v2627 = vpop.f32.mrf.mxu0
    %v2628 = vadd.f32 %v249, %v2627
    %v2629 = vpop.f32.mrf.mxu0
    %2630 = vdwg.mxu0
    %v2631 = vsel %vm927, %v2322, -inf
    %2632 = vmax.xlane.f32.xlu0 %v2631
    %v2633 = vpop.xlane.xlu0 %2632
    %v2634 = vsel %vm927, %v2327, -inf
    %2635 = vmax.xlane.f32.xlu0 %v2634
    %v2636 = vpop.xlane.xlu0 %2635
    %v2637 = vsel %vm927, %v2332, -inf
    %2638 = vmax.xlane.f32.xlu0 %v2637
    %v2639 = vpop.xlane.xlu0 %2638
    %v2640 = vsel %vm927, %v2337, -inf
    %2641 = vmax.xlane.f32.xlu0 %v2640
    %v2642 = vpop.xlane.xlu0 %2641
    %v2643 = vsel %vm927, %v2419, -inf
    %2644 = vmax.xlane.f32.xlu0 %v2643
    %v2645 = vpop.xlane.xlu0 %2644
    %v2646 = vsel %vm927, %v2424, -inf
    %2647 = vmax.xlane.f32.xlu0 %v2646
    %v2648 = vpop.xlane.xlu0 %2647
    %v2649 = vsel %vm927, %v2429, -inf
    %2650 = vmax.xlane.f32.xlu0 %v2649
    %v2651 = vpop.xlane.xlu0 %2650
    %v2652 = vsel %vm927, %v2434, -inf
    %2653 = vmax.xlane.f32.xlu0 %v2652
    %v2654 = vpop.xlane.xlu0 %2653
    %v2655 = vsel %vm927, %v2516, -inf
    %2656 = vmax.xlane.f32.xlu0 %v2655
    %v2657 = vpop.xlane.xlu0 %2656
    %v2658 = vsel %vm927, %v2521, -inf
    %2659 = vmax.xlane.f32.xlu0 %v2658
    %v2660 = vpop.xlane.xlu0 %2659
    %v2661 = vsel %vm927, %v2526, -inf
    %2662 = vmax.xlane.f32.xlu0 %v2661
    %v2663 = vpop.xlane.xlu0 %2662
    %v2664 = vsel %vm927, %v2531, -inf
    %2665 = vmax.xlane.f32.xlu0 %v2664
    %v2666 = vpop.xlane.xlu0 %2665
    %v2667 = vsel %vm927, %v2613, -inf
    %2668 = vmax.xlane.f32.xlu0 %v2667
    %v2669 = vpop.xlane.xlu0 %2668
    %v2670 = vsel %vm927, %v2618, -inf
    %2671 = vmax.xlane.f32.xlu0 %v2670
    %v2672 = vpop.xlane.xlu0 %2671
    %v2673 = vsel %vm927, %v2623, -inf
    %2674 = vmax.xlane.f32.xlu0 %v2673
    %v2675 = vpop.xlane.xlu0 %2674
    %v2676 = vsel %vm927, %v2628, -inf
    %2677 = vmax.xlane.f32.xlu0 %v2676
    %v2678 = vpop.xlane.xlu0 %2677
    %v2679 = vsub.f32 %v2322, %v2633
    %v2680 = vsub.f32 %v2327, %v2636
    %v2681 = vsub.f32 %v2332, %v2639
    %v2682 = vsub.f32 %v2337, %v2642
    %v2683 = vsub.f32 %v2419, %v2645
    %v2684 = vsub.f32 %v2424, %v2648
    %v2685 = vsub.f32 %v2429, %v2651
    %v2686 = vsub.f32 %v2434, %v2654
    %v2687 = vsub.f32 %v2516, %v2657
    %v2688 = vsub.f32 %v2521, %v2660
    %v2689 = vsub.f32 %v2526, %v2663
    %v2690 = vsub.f32 %v2531, %v2666
    %v2691 = vsub.f32 %v2613, %v2669
    %v2692 = vsub.f32 %v2618, %v2672
    %v2693 = vsub.f32 %v2623, %v2675
    %v2694 = vsub.f32 %v2628, %v2678
    %v2695 = vmul.f32 %v2679, 1.442695
    %v2696 = vpow.pop %v2695
    %v2697 = vmul.f32 %v2680, 1.442695
    %v2698 = vpow.pop %v2697
    %v2699 = vmul.f32 %v2681, 1.442695
    %v2700 = vpow.pop %v2699
    %v2701 = vmul.f32 %v2682, 1.442695
    %v2702 = vpow.pop %v2701
    %v2703 = vmul.f32 %v2683, 1.442695
    %v2704 = vpow.pop %v2703
    %v2705 = vmul.f32 %v2684, 1.442695
    %v2706 = vpow.pop %v2705
    %v2707 = vmul.f32 %v2685, 1.442695
    %v2708 = vpow.pop %v2707
    %v2709 = vmul.f32 %v2686, 1.442695
    %v2710 = vpow.pop %v2709
    %v2711 = vmul.f32 %v2687, 1.442695
    %v2712 = vpow.pop %v2711
    %v2713 = vmul.f32 %v2688, 1.442695
    %v2714 = vpow.pop %v2713
    %v2715 = vmul.f32 %v2689, 1.442695
    %v2716 = vpow.pop %v2715
    %v2717 = vmul.f32 %v2690, 1.442695
    %v2718 = vpow.pop %v2717
    %v2719 = vmul.f32 %v2691, 1.442695
    %v2720 = vpow.pop %v2719
    %v2721 = vmul.f32 %v2692, 1.442695
    %v2722 = vpow.pop %v2721
    %v2723 = vmul.f32 %v2693, 1.442695
    %v2724 = vpow.pop %v2723
    %v2725 = vmul.f32 %v2694, 1.442695
    %v2726 = vpow.pop %v2725
    %v2727 = vsel %vm927, %v2696, 0.0
    %2728 = vadd.xlane.f32.xlu0 %v2727
    %v2729 = vpop.xlane.xlu0 %2728
    %v2730 = vsel %vm927, %v2698, 0.0
    %2731 = vadd.xlane.f32.xlu0 %v2730
    %v2732 = vpop.xlane.xlu0 %2731
    %v2733 = vsel %vm927, %v2700, 0.0
    %2734 = vadd.xlane.f32.xlu0 %v2733
    %v2735 = vpop.xlane.xlu0 %2734
    %v2736 = vsel %vm927, %v2702, 0.0
    %2737 = vadd.xlane.f32.xlu0 %v2736
    %v2738 = vpop.xlane.xlu0 %2737
    %v2739 = vsel %vm927, %v2704, 0.0
    %2740 = vadd.xlane.f32.xlu0 %v2739
    %v2741 = vpop.xlane.xlu0 %2740
    %v2742 = vsel %vm927, %v2706, 0.0
    %2743 = vadd.xlane.f32.xlu0 %v2742
    %v2744 = vpop.xlane.xlu0 %2743
    %v2745 = vsel %vm927, %v2708, 0.0
    %2746 = vadd.xlane.f32.xlu0 %v2745
    %v2747 = vpop.xlane.xlu0 %2746
    %v2748 = vsel %vm927, %v2710, 0.0
    %2749 = vadd.xlane.f32.xlu0 %v2748
    %v2750 = vpop.xlane.xlu0 %2749
    %v2751 = vsel %vm927, %v2712, 0.0
    %2752 = vadd.xlane.f32.xlu0 %v2751
    %v2753 = vpop.xlane.xlu0 %2752
    %v2754 = vsel %vm927, %v2714, 0.0
    %2755 = vadd.xlane.f32.xlu0 %v2754
    %v2756 = vpop.xlane.xlu0 %2755
    %v2757 = vsel %vm927, %v2716, 0.0
    %2758 = vadd.xlane.f32.xlu0 %v2757
    %v2759 = vpop.xlane.xlu0 %2758
    %v2760 = vsel %vm927, %v2718, 0.0
    %2761 = vadd.xlane.f32.xlu0 %v2760
    %v2762 = vpop.xlane.xlu0 %2761
    %v2763 = vsel %vm927, %v2720, 0.0
    %2764 = vadd.xlane.f32.xlu0 %v2763
    %v2765 = vpop.xlane.xlu0 %2764
    %v2766 = vsel %vm927, %v2722, 0.0
    %2767 = vadd.xlane.f32.xlu0 %v2766
    %v2768 = vpop.xlane.xlu0 %2767
    %v2769 = vsel %vm927, %v2724, 0.0
    %2770 = vadd.xlane.f32.xlu0 %v2769
    %v2771 = vpop.xlane.xlu0 %2770
    %v2772 = vsel %vm927, %v2726, 0.0
    %2773 = vadd.xlane.f32.xlu0 %v2772
    %v2774 = vpop.xlane.xlu0 %2773
    %v2775 = vrcp.pop %v2729
    %v2776 = vrcp.pop %v2732
    %v2777 = vrcp.pop %v2735
    %v2778 = vrcp.pop %v2738
    %v2779 = vrcp.pop %v2741
    %v2780 = vrcp.pop %v2744
    %v2781 = vrcp.pop %v2747
    %v2782 = vrcp.pop %v2750
    %v2783 = vrcp.pop %v2753
    %v2784 = vrcp.pop %v2756
    %v2785 = vrcp.pop %v2759
    %v2786 = vrcp.pop %v2762
    %v2787 = vrcp.pop %v2765
    %v2788 = vrcp.pop %v2768
    %v2789 = vrcp.pop %v2771
    %v2790 = vrcp.pop %v2774
    %v2791 = vmul.f32 %v2696, %v2775
    %v2792 = vmul.f32 %v2698, %v2776
    %v2793 = vmul.f32 %v2700, %v2777
    %v2794 = vmul.f32 %v2702, %v2778
    %v2795 = vmul.f32 %v2704, %v2779
    %v2796 = vmul.f32 %v2706, %v2780
    %v2797 = vmul.f32 %v2708, %v2781
    %v2798 = vmul.f32 %v2710, %v2782
    %v2799 = vmul.f32 %v2712, %v2783
    %v2800 = vmul.f32 %v2714, %v2784
    %v2801 = vmul.f32 %v2716, %v2785
    %v2802 = vmul.f32 %v2718, %v2786
    %v2803 = vmul.f32 %v2720, %v2787
    %v2804 = vmul.f32 %v2722, %v2788
    %v2805 = vmul.f32 %v2724, %v2789
    %v2806 = vmul.f32 %v2726, %v2790
    %v2808 = vsel %vm927, %v1983, 0
    %v2811 = vsel %vm927, %v2791, 0
    %v2814 = vsel %vm927, %v2792, 0
    %v2817 = vsel %vm927, %v2793, 0
    %v2820 = vsel %vm927, %v2794, 0
    %2822 = vmatprep.subr.mxu0 0.0
    %2823 = vmatpush1.xpose.msra.mxu0 0.0
    %2824 = vmatprep.subr.mxu0 0.0
    %2825 = vmatpush1.xpose.msra.mxu0 0.0
    %2826 = vmatprep.subr.mxu0 0.0
    %2827 = vmatpush1.xpose.msra.mxu0 0.0
    %2828 = vmatprep.subr.mxu0 0.0
    %2829 = vmatpush1.xpose.msra.mxu0 0.0
    %2830 = vmatprep.subr.mxu0 0.0
    %2831 = vmatpush1.xpose.msra.mxu0 0.0
    %2832 = vmatprep.subr.mxu0 0.0
    %2833 = vmatpush1.xpose.msra.mxu0 0.0
    %2834 = vmatprep.subr.mxu0 0.0
    %2835 = vmatpush1.xpose.msra.mxu0 0.0
    %2836 = vmatprep.subr.mxu0 0.0
    %2837 = vmatpush1.xpose.msra.mxu0 0.0
    %2838 = vmatprep.subr.mxu0 0.0
    %2839 = vmatpush1.xpose.msra.mxu0 0.0
    %2840 = vmatprep.subr.mxu0 0.0
    %2841 = vmatpush1.xpose.msra.mxu0 0.0
    %2842 = vmatprep.subr.mxu0 0.0
    %2843 = vmatpush1.xpose.msra.mxu0 0.0
    %2844 = vmatprep.subr.mxu0 0.0
    %2845 = vmatpush1.xpose.msra.mxu0 0.0
    %2846 = vmatprep.subr.mxu0 0.0
    %2847 = vmatpush1.xpose.msra.mxu0 %v2820
    %2848 = vmatprep.subr.mxu0 0.0
    %2849 = vmatpush1.xpose.msra.mxu0 %v2817
    %2850 = vmatprep.subr.mxu0 0.0
    %2851 = vmatpush1.xpose.msra.mxu0 %v2814
    %2852 = vmatprep.subr.mxu0 0.0
    %2853 = vmatpush1.xpose.msra.mxu0 %v2811
    %2854 = vmatprep.subr.mxu0 0.0
    %2855 = vmatpush2.xpose.msra.mxu0 0.0
    %2856 = vmatprep.subr.mxu0 0.0
    %2857 = vmatpush2.xpose.msra.mxu0 0.0
    %2858 = vmatprep.subr.mxu0 0.0
    %2859 = vmatpush2.xpose.msra.mxu0 0.0
    %2860 = vmatprep.subr.mxu0 0.0
    %2861 = vmatpush2.xpose.msra.mxu0 0.0
    %2862 = vmatprep.subr.mxu0 0.0
    %2863 = vmatpush2.xpose.msra.mxu0 0.0
    %2864 = vmatprep.subr.mxu0 0.0
    %2865 = vmatpush2.xpose.msra.mxu0 0.0
    %2866 = vmatprep.subr.mxu0 0.0
    %2867 = vmatpush2.xpose.msra.mxu0 0.0
    %2868 = vmatprep.subr.mxu0 0.0
    %2869 = vmatpush2.xpose.msra.mxu0 0.0
    %2870 = vmatprep.subr.mxu0 0.0
    %2871 = vmatpush2.xpose.msra.mxu0 0.0
    %2872 = vmatprep.subr.mxu0 0.0
    %2873 = vmatpush2.xpose.msra.mxu0 0.0
    %2874 = vmatprep.subr.mxu0 0.0
    %2875 = vmatpush2.xpose.msra.mxu0 0.0
    %2876 = vmatprep.subr.mxu0 0.0
    %2877 = vmatpush2.xpose.msra.mxu0 0.0
    %2878 = vmatprep.subr.mxu0 0.0
    %2879 = vmatpush2.xpose.msra.mxu0 0.0
    %2880 = vmatprep.subr.mxu0 0.0
    %2881 = vmatpush2.xpose.msra.mxu0 0.0
    %2882 = vmatprep.subr.mxu0 0.0
    %2883 = vmatpush2.xpose.msra.mxu0 0.0
    %2884 = vmatprep.subr.mxu0 0.0
    %2885 = vmatpush2.xpose.msra.mxu0 0.0
    %2886 = vmatprep.mubr.f32.mxu0 0.0
    %2887 = vmatmul.mubr.f32.gmra.mxu0 %v2808
    %v2888 = vpop.f32.mrf.mxu0
    %v2889 = vadd.f32 %v1126, %v2888
    %v2890 = vpop.f32.mrf.mxu0
    %2891 = vdwg.mxu0
    %v2893 = vsel %vm927, %v1984, 0
    %v2896 = vsel %vm927, %v2795, 0
    %v2899 = vsel %vm927, %v2796, 0
    %v2902 = vsel %vm927, %v2797, 0
    %v2905 = vsel %vm927, %v2798, 0
    %2907 = vmatprep.subr.mxu0 0.0
    %2908 = vmatpush1.xpose.msra.mxu0 0.0
    %2909 = vmatprep.subr.mxu0 0.0
    %2910 = vmatpush1.xpose.msra.mxu0 0.0
    %2911 = vmatprep.subr.mxu0 0.0
    %2912 = vmatpush1.xpose.msra.mxu0 0.0
    %2913 = vmatprep.subr.mxu0 0.0
    %2914 = vmatpush1.xpose.msra.mxu0 0.0
    %2915 = vmatprep.subr.mxu0 0.0
    %2916 = vmatpush1.xpose.msra.mxu0 0.0
    %2917 = vmatprep.subr.mxu0 0.0
    %2918 = vmatpush1.xpose.msra.mxu0 0.0
    %2919 = vmatprep.subr.mxu0 0.0
    %2920 = vmatpush1.xpose.msra.mxu0 0.0
    %2921 = vmatprep.subr.mxu0 0.0
    %2922 = vmatpush1.xpose.msra.mxu0 0.0
    %2923 = vmatprep.subr.mxu0 0.0
    %2924 = vmatpush1.xpose.msra.mxu0 0.0
    %2925 = vmatprep.subr.mxu0 0.0
    %2926 = vmatpush1.xpose.msra.mxu0 0.0
    %2927 = vmatprep.subr.mxu0 0.0
    %2928 = vmatpush1.xpose.msra.mxu0 0.0
    %2929 = vmatprep.subr.mxu0 0.0
    %2930 = vmatpush1.xpose.msra.mxu0 0.0
    %2931 = vmatprep.subr.mxu0 0.0
    %2932 = vmatpush1.xpose.msra.mxu0 %v2905
    %2933 = vmatprep.subr.mxu0 0.0
    %2934 = vmatpush1.xpose.msra.mxu0 %v2902
    %2935 = vmatprep.subr.mxu0 0.0
    %2936 = vmatpush1.xpose.msra.mxu0 %v2899
    %2937 = vmatprep.subr.mxu0 0.0
    %2938 = vmatpush1.xpose.msra.mxu0 %v2896
    %2939 = vmatprep.subr.mxu0 0.0
    %2940 = vmatpush2.xpose.msra.mxu0 0.0
    %2941 = vmatprep.subr.mxu0 0.0
    %2942 = vmatpush2.xpose.msra.mxu0 0.0
    %2943 = vmatprep.subr.mxu0 0.0
    %2944 = vmatpush2.xpose.msra.mxu0 0.0
    %2945 = vmatprep.subr.mxu0 0.0
    %2946 = vmatpush2.xpose.msra.mxu0 0.0
    %2947 = vmatprep.subr.mxu0 0.0
    %2948 = vmatpush2.xpose.msra.mxu0 0.0
    %2949 = vmatprep.subr.mxu0 0.0
    %2950 = vmatpush2.xpose.msra.mxu0 0.0
    %2951 = vmatprep.subr.mxu0 0.0
    %2952 = vmatpush2.xpose.msra.mxu0 0.0
    %2953 = vmatprep.subr.mxu0 0.0
    %2954 = vmatpush2.xpose.msra.mxu0 0.0
    %2955 = vmatprep.subr.mxu0 0.0
    %2956 = vmatpush2.xpose.msra.mxu0 0.0
    %2957 = vmatprep.subr.mxu0 0.0
    %2958 = vmatpush2.xpose.msra.mxu0 0.0
    %2959 = vmatprep.subr.mxu0 0.0
    %2960 = vmatpush2.xpose.msra.mxu0 0.0
    %2961 = vmatprep.subr.mxu0 0.0
    %2962 = vmatpush2.xpose.msra.mxu0 0.0
    %2963 = vmatprep.subr.mxu0 0.0
    %2964 = vmatpush2.xpose.msra.mxu0 0.0
    %2965 = vmatprep.subr.mxu0 0.0
    %2966 = vmatpush2.xpose.msra.mxu0 0.0
    %2967 = vmatprep.subr.mxu0 0.0
    %2968 = vmatpush2.xpose.msra.mxu0 0.0
    %2969 = vmatprep.subr.mxu0 0.0
    %2970 = vmatpush2.xpose.msra.mxu0 0.0
    %2971 = vmatprep.mubr.f32.mxu0 0.0
    %2972 = vmatmul.mubr.f32.gmra.mxu0 %v2893
    %v2973 = vpop.f32.mrf.mxu0
    %v2974 = vadd.f32 %v1126, %v2973
    %v2975 = vpop.f32.mrf.mxu0
    %2976 = vdwg.mxu0
    %v2978 = vsel %vm927, %v1985, 0
    %v2981 = vsel %vm927, %v2799, 0
    %v2984 = vsel %vm927, %v2800, 0
    %v2987 = vsel %vm927, %v2801, 0
    %v2990 = vsel %vm927, %v2802, 0
    %2992 = vmatprep.subr.mxu0 0.0
    %2993 = vmatpush1.xpose.msra.mxu0 0.0
    %2994 = vmatprep.subr.mxu0 0.0
    %2995 = vmatpush1.xpose.msra.mxu0 0.0
    %2996 = vmatprep.subr.mxu0 0.0
    %2997 = vmatpush1.xpose.msra.mxu0 0.0
    %2998 = vmatprep.subr.mxu0 0.0
    %2999 = vmatpush1.xpose.msra.mxu0 0.0
    %3000 = vmatprep.subr.mxu0 0.0
    %3001 = vmatpush1.xpose.msra.mxu0 0.0
    %3002 = vmatprep.subr.mxu0 0.0
    %3003 = vmatpush1.xpose.msra.mxu0 0.0
    %3004 = vmatprep.subr.mxu0 0.0
    %3005 = vmatpush1.xpose.msra.mxu0 0.0
    %3006 = vmatprep.subr.mxu0 0.0
    %3007 = vmatpush1.xpose.msra.mxu0 0.0
    %3008 = vmatprep.subr.mxu0 0.0
    %3009 = vmatpush1.xpose.msra.mxu0 0.0
    %3010 = vmatprep.subr.mxu0 0.0
    %3011 = vmatpush1.xpose.msra.mxu0 0.0
    %3012 = vmatprep.subr.mxu0 0.0
    %3013 = vmatpush1.xpose.msra.mxu0 0.0
    %3014 = vmatprep.subr.mxu0 0.0
    %3015 = vmatpush1.xpose.msra.mxu0 0.0
    %3016 = vmatprep.subr.mxu0 0.0
    %3017 = vmatpush1.xpose.msra.mxu0 %v2990
    %3018 = vmatprep.subr.mxu0 0.0
    %3019 = vmatpush1.xpose.msra.mxu0 %v2987
    %3020 = vmatprep.subr.mxu0 0.0
    %3021 = vmatpush1.xpose.msra.mxu0 %v2984
    %3022 = vmatprep.subr.mxu0 0.0
    %3023 = vmatpush1.xpose.msra.mxu0 %v2981
    %3024 = vmatprep.subr.mxu0 0.0
    %3025 = vmatpush2.xpose.msra.mxu0 0.0
    %3026 = vmatprep.subr.mxu0 0.0
    %3027 = vmatpush2.xpose.msra.mxu0 0.0
    %3028 = vmatprep.subr.mxu0 0.0
    %3029 = vmatpush2.xpose.msra.mxu0 0.0
    %3030 = vmatprep.subr.mxu0 0.0
    %3031 = vmatpush2.xpose.msra.mxu0 0.0
    %3032 = vmatprep.subr.mxu0 0.0
    %3033 = vmatpush2.xpose.msra.mxu0 0.0
    %3034 = vmatprep.subr.mxu0 0.0
    %3035 = vmatpush2.xpose.msra.mxu0 0.0
    %3036 = vmatprep.subr.mxu0 0.0
    %3037 = vmatpush2.xpose.msra.mxu0 0.0
    %3038 = vmatprep.subr.mxu0 0.0
    %3039 = vmatpush2.xpose.msra.mxu0 0.0
    %3040 = vmatprep.subr.mxu0 0.0
    %3041 = vmatpush2.xpose.msra.mxu0 0.0
    %3042 = vmatprep.subr.mxu0 0.0
    %3043 = vmatpush2.xpose.msra.mxu0 0.0
    %3044 = vmatprep.subr.mxu0 0.0
    %3045 = vmatpush2.xpose.msra.mxu0 0.0
    %3046 = vmatprep.subr.mxu0 0.0
    %3047 = vmatpush2.xpose.msra.mxu0 0.0
    %3048 = vmatprep.subr.mxu0 0.0
    %3049 = vmatpush2.xpose.msra.mxu0 0.0
    %3050 = vmatprep.subr.mxu0 0.0
    %3051 = vmatpush2.xpose.msra.mxu0 0.0
    %3052 = vmatprep.subr.mxu0 0.0
    %3053 = vmatpush2.xpose.msra.mxu0 0.0
    %3054 = vmatprep.subr.mxu0 0.0
    %3055 = vmatpush2.xpose.msra.mxu0 0.0
    %3056 = vmatprep.mubr.f32.mxu0 0.0
    %3057 = vmatmul.mubr.f32.gmra.mxu0 %v2978
    %v3058 = vpop.f32.mrf.mxu0
    %v3059 = vadd.f32 %v1126, %v3058
    %v3060 = vpop.f32.mrf.mxu0
    %3061 = vdwg.mxu0
    %v3063 = vsel %vm927, %v1986, 0
    %v3066 = vsel %vm927, %v2803, 0
    %v3069 = vsel %vm927, %v2804, 0
    %v3072 = vsel %vm927, %v2805, 0
    %v3075 = vsel %vm927, %v2806, 0
    %3077 = vmatprep.subr.mxu0 0.0
    %3078 = vmatpush1.xpose.msra.mxu0 0.0
    %3079 = vmatprep.subr.mxu0 0.0
    %3080 = vmatpush1.xpose.msra.mxu0 0.0
    %3081 = vmatprep.subr.mxu0 0.0
    %3082 = vmatpush1.xpose.msra.mxu0 0.0
    %3083 = vmatprep.subr.mxu0 0.0
    %3084 = vmatpush1.xpose.msra.mxu0 0.0
    %3085 = vmatprep.subr.mxu0 0.0
    %3086 = vmatpush1.xpose.msra.mxu0 0.0
    %3087 = vmatprep.subr.mxu0 0.0
    %3088 = vmatpush1.xpose.msra.mxu0 0.0
    %3089 = vmatprep.subr.mxu0 0.0
    %3090 = vmatpush1.xpose.msra.mxu0 0.0
    %3091 = vmatprep.subr.mxu0 0.0
    %3092 = vmatpush1.xpose.msra.mxu0 0.0
    %3093 = vmatprep.subr.mxu0 0.0
    %3094 = vmatpush1.xpose.msra.mxu0 0.0
    %3095 = vmatprep.subr.mxu0 0.0
    %3096 = vmatpush1.xpose.msra.mxu0 0.0
    %3097 = vmatprep.subr.mxu0 0.0
    %3098 = vmatpush1.xpose.msra.mxu0 0.0
    %3099 = vmatprep.subr.mxu0 0.0
    %3100 = vmatpush1.xpose.msra.mxu0 0.0
    %3101 = vmatprep.subr.mxu0 0.0
    %3102 = vmatpush1.xpose.msra.mxu0 %v3075
    %3103 = vmatprep.subr.mxu0 0.0
    %3104 = vmatpush1.xpose.msra.mxu0 %v3072
    %3105 = vmatprep.subr.mxu0 0.0
    %3106 = vmatpush1.xpose.msra.mxu0 %v3069
    %3107 = vmatprep.subr.mxu0 0.0
    %3108 = vmatpush1.xpose.msra.mxu0 %v3066
    %3109 = vmatprep.subr.mxu0 0.0
    %3110 = vmatpush2.xpose.msra.mxu0 0.0
    %3111 = vmatprep.subr.mxu0 0.0
    %3112 = vmatpush2.xpose.msra.mxu0 0.0
    %3113 = vmatprep.subr.mxu0 0.0
    %3114 = vmatpush2.xpose.msra.mxu0 0.0
    %3115 = vmatprep.subr.mxu0 0.0
    %3116 = vmatpush2.xpose.msra.mxu0 0.0
    %3117 = vmatprep.subr.mxu0 0.0
    %3118 = vmatpush2.xpose.msra.mxu0 0.0
    %3119 = vmatprep.subr.mxu0 0.0
    %3120 = vmatpush2.xpose.msra.mxu0 0.0
    %3121 = vmatprep.subr.mxu0 0.0
    %3122 = vmatpush2.xpose.msra.mxu0 0.0
    %3123 = vmatprep.subr.mxu0 0.0
    %3124 = vmatpush2.xpose.msra.mxu0 0.0
    %3125 = vmatprep.subr.mxu0 0.0
    %3126 = vmatpush2.xpose.msra.mxu0 0.0
    %3127 = vmatprep.subr.mxu0 0.0
    %3128 = vmatpush2.xpose.msra.mxu0 0.0
    %3129 = vmatprep.subr.mxu0 0.0
    %3130 = vmatpush2.xpose.msra.mxu0 0.0
    %3131 = vmatprep.subr.mxu0 0.0
    %3132 = vmatpush2.xpose.msra.mxu0 0.0
    %3133 = vmatprep.subr.mxu0 0.0
    %3134 = vmatpush2.xpose.msra.mxu0 0.0
    %3135 = vmatprep.subr.mxu0 0.0
    %3136 = vmatpush2.xpose.msra.mxu0 0.0
    %3137 = vmatprep.subr.mxu0 0.0
    %3138 = vmatpush2.xpose.msra.mxu0 0.0
    %3139 = vmatprep.subr.mxu0 0.0
    %3140 = vmatpush2.xpose.msra.mxu0 0.0
    %3141 = vmatprep.mubr.f32.mxu0 0.0
    %3142 = vmatmul.mubr.f32.gmra.mxu0 %v3063
    %v3143 = vpop.f32.mrf.mxu0
    %v3144 = vadd.f32 %v1126, %v3143
    %v3145 = vpop.f32.mrf.mxu0
    %3146 = vdwg.mxu0
    %3151 = vrot.lane.b32.xlu0 %v2889, 112
    %v3152 = vpop.permute.xlu0 %3151
    %3153 = vrot.lane.b32.xlu0 %v2974, 112
    %v3154 = vpop.permute.xlu0 %3153
    %3155 = vrot.lane.b32.xlu0 %v3059, 112
    %v3156 = vpop.permute.xlu0 %3155
    %3157 = vrot.lane.b32.xlu0 %v3144, 112
    %v3158 = vpop.permute.xlu0 %3157
    %v3163 = vcombine.high %v2889, 0.0
    %v3165 = vunpack.c.l.s4 1983009808
    %v3166 = vunpack.c.0.s8 %v3165
    %v3167 = vlaneseq
    %v3168 = vshrl.u32 %v3167, 7
    %v3169 = vsub.s32 %v3166, %v3168
    %v3170 = vrot.slane %v2889, %v3169
    %v3172 = vunpack.c.l.s4 1983009808
    %v3173 = vunpack.c.0.s8 %v3172
    %v3174 = vlaneseq
    %v3175 = vshrl.u32 %v3174, 7
    %v3176 = vsub.s32 %v3173, %v3175
    %v3177 = vrot.slane %v3163, %v3176
    %v3178 = vcombine.high %v3152, 0.0
    %v3180 = vunpack.c.l.s4 1983009808
    %v3181 = vunpack.c.0.s8 %v3180
    %v3182 = vlaneseq
    %v3183 = vshrl.u32 %v3182, 7
    %v3184 = vsub.s32 %v3181, %v3183
    %v3185 = vrot.slane %v3152, %v3184
    %v3187 = vunpack.c.l.s4 1983009808
    %v3188 = vunpack.c.0.s8 %v3187
    %v3189 = vlaneseq
    %v3190 = vshrl.u32 %v3189, 7
    %v3191 = vsub.s32 %v3188, %v3190
    %v3192 = vrot.slane %v3178, %v3191
    %v3193 = vcombine.low %v3170, %v3185
    %v3194 = vcombine.high %v3170, %v3185
    %v3196 = vunpack.c.l.s4 1934713408
    %v3197 = vunpack.c.0.s8 %v3196
    %v3198 = vlaneseq
    %v3199 = vshrl.u32 %v3198, 7
    %v3200 = vsub.s32 %v3197, %v3199
    %v3201 = vrot.slane %v3193, %v3200
    %v3203 = vunpack.c.l.s4 1934713408
    %v3204 = vunpack.c.0.s8 %v3203
    %v3205 = vlaneseq
    %v3206 = vshrl.u32 %v3205, 7
    %v3207 = vsub.s32 %v3204, %v3206
    %v3208 = vrot.slane %v3194, %v3207
    %v3209 = vcombine.low %v3177, %v3192
    %v3210 = vcombine.high %v3177, %v3192
    %v3212 = vunpack.c.l.s4 1934713408
    %v3213 = vunpack.c.0.s8 %v3212
    %v3214 = vlaneseq
    %v3215 = vshrl.u32 %v3214, 7
    %v3216 = vsub.s32 %v3213, %v3215
    %v3217 = vrot.slane %v3209, %v3216
    %v3219 = vunpack.c.l.s4 1934713408
    %v3220 = vunpack.c.0.s8 %v3219
    %v3221 = vlaneseq
    %v3222 = vshrl.u32 %v3221, 7
    %v3223 = vsub.s32 %v3220, %v3222
    %v3224 = vrot.slane %v3210, %v3223
    %v3225 = vcombine.high %v3201, 0.0
    %v3226 = vcombine.high %v3208, 0.0
    %v3227 = vcombine.high %v3217, 0.0
    %v3228 = vcombine.high %v3224, 0.0
    %v3229 = vcombine.high %v2974, 0.0
    %v3231 = vunpack.c.l.s4 1983009808
    %v3232 = vunpack.c.0.s8 %v3231
    %v3233 = vlaneseq
    %v3234 = vshrl.u32 %v3233, 7
    %v3235 = vsub.s32 %v3232, %v3234
    %v3236 = vrot.slane %v2974, %v3235
    %v3238 = vunpack.c.l.s4 1983009808
    %v3239 = vunpack.c.0.s8 %v3238
    %v3240 = vlaneseq
    %v3241 = vshrl.u32 %v3240, 7
    %v3242 = vsub.s32 %v3239, %v3241
    %v3243 = vrot.slane %v3229, %v3242
    %v3244 = vcombine.high %v3154, 0.0
    %v3246 = vunpack.c.l.s4 1983009808
    %v3247 = vunpack.c.0.s8 %v3246
    %v3248 = vlaneseq
    %v3249 = vshrl.u32 %v3248, 7
    %v3250 = vsub.s32 %v3247, %v3249
    %v3251 = vrot.slane %v3154, %v3250
    %v3253 = vunpack.c.l.s4 1983009808
    %v3254 = vunpack.c.0.s8 %v3253
    %v3255 = vlaneseq
    %v3256 = vshrl.u32 %v3255, 7
    %v3257 = vsub.s32 %v3254, %v3256
    %v3258 = vrot.slane %v3244, %v3257
    %v3259 = vcombine.low %v3236, %v3251
    %v3260 = vcombine.high %v3236, %v3251
    %v3262 = vunpack.c.l.s4 1934713408
    %v3263 = vunpack.c.0.s8 %v3262
    %v3264 = vlaneseq
    %v3265 = vshrl.u32 %v3264, 7
    %v3266 = vsub.s32 %v3263, %v3265
    %v3267 = vrot.slane %v3259, %v3266
    %v3269 = vunpack.c.l.s4 1934713408
    %v3270 = vunpack.c.0.s8 %v3269
    %v3271 = vlaneseq
    %v3272 = vshrl.u32 %v3271, 7
    %v3273 = vsub.s32 %v3270, %v3272
    %v3274 = vrot.slane %v3260, %v3273
    %v3275 = vcombine.low %v3243, %v3258
    %v3276 = vcombine.high %v3243, %v3258
    %v3278 = vunpack.c.l.s4 1934713408
    %v3279 = vunpack.c.0.s8 %v3278
    %v3280 = vlaneseq
    %v3281 = vshrl.u32 %v3280, 7
    %v3282 = vsub.s32 %v3279, %v3281
    %v3283 = vrot.slane %v3275, %v3282
    %v3285 = vunpack.c.l.s4 1934713408
    %v3286 = vunpack.c.0.s8 %v3285
    %v3287 = vlaneseq
    %v3288 = vshrl.u32 %v3287, 7
    %v3289 = vsub.s32 %v3286, %v3288
    %v3290 = vrot.slane %v3276, %v3289
    %v3291 = vcombine.high %v3267, 0.0
    %v3292 = vcombine.high %v3274, 0.0
    %v3293 = vcombine.high %v3283, 0.0
    %v3294 = vcombine.high %v3290, 0.0
    %v3295 = vcombine.high %v3059, 0.0
    %v3297 = vunpack.c.l.s4 1983009808
    %v3298 = vunpack.c.0.s8 %v3297
    %v3299 = vlaneseq
    %v3300 = vshrl.u32 %v3299, 7
    %v3301 = vsub.s32 %v3298, %v3300
    %v3302 = vrot.slane %v3059, %v3301
    %v3304 = vunpack.c.l.s4 1983009808
    %v3305 = vunpack.c.0.s8 %v3304
    %v3306 = vlaneseq
    %v3307 = vshrl.u32 %v3306, 7
    %v3308 = vsub.s32 %v3305, %v3307
    %v3309 = vrot.slane %v3295, %v3308
    %v3310 = vcombine.high %v3156, 0.0
    %v3312 = vunpack.c.l.s4 1983009808
    %v3313 = vunpack.c.0.s8 %v3312
    %v3314 = vlaneseq
    %v3315 = vshrl.u32 %v3314, 7
    %v3316 = vsub.s32 %v3313, %v3315
    %v3317 = vrot.slane %v3156, %v3316
    %v3319 = vunpack.c.l.s4 1983009808
    %v3320 = vunpack.c.0.s8 %v3319
    %v3321 = vlaneseq
    %v3322 = vshrl.u32 %v3321, 7
    %v3323 = vsub.s32 %v3320, %v3322
    %v3324 = vrot.slane %v3310, %v3323
    %v3325 = vcombine.low %v3302, %v3317
    %v3326 = vcombine.high %v3302, %v3317
    %v3328 = vunpack.c.l.s4 1934713408
    %v3329 = vunpack.c.0.s8 %v3328
    %v3330 = vlaneseq
    %v3331 = vshrl.u32 %v3330, 7
    %v3332 = vsub.s32 %v3329, %v3331
    %v3333 = vrot.slane %v3325, %v3332
    %v3335 = vunpack.c.l.s4 1934713408
    %v3336 = vunpack.c.0.s8 %v3335
    %v3337 = vlaneseq
    %v3338 = vshrl.u32 %v3337, 7
    %v3339 = vsub.s32 %v3336, %v3338
    %v3340 = vrot.slane %v3326, %v3339
    %v3341 = vcombine.low %v3309, %v3324
    %v3342 = vcombine.high %v3309, %v3324
    %v3344 = vunpack.c.l.s4 1934713408
    %v3345 = vunpack.c.0.s8 %v3344
    %v3346 = vlaneseq
    %v3347 = vshrl.u32 %v3346, 7
    %v3348 = vsub.s32 %v3345, %v3347
    %v3349 = vrot.slane %v3341, %v3348
    %v3351 = vunpack.c.l.s4 1934713408
    %v3352 = vunpack.c.0.s8 %v3351
    %v3353 = vlaneseq
    %v3354 = vshrl.u32 %v3353, 7
    %v3355 = vsub.s32 %v3352, %v3354
    %v3356 = vrot.slane %v3342, %v3355
    %v3357 = vcombine.high %v3333, 0.0
    %v3358 = vcombine.high %v3340, 0.0
    %v3359 = vcombine.high %v3349, 0.0
    %v3360 = vcombine.high %v3356, 0.0
    %v3361 = vcombine.high %v3144, 0.0
    %v3363 = vunpack.c.l.s4 1983009808
    %v3364 = vunpack.c.0.s8 %v3363
    %v3365 = vlaneseq
    %v3366 = vshrl.u32 %v3365, 7
    %v3367 = vsub.s32 %v3364, %v3366
    %v3368 = vrot.slane %v3144, %v3367
    %v3370 = vunpack.c.l.s4 1983009808
    %v3371 = vunpack.c.0.s8 %v3370
    %v3372 = vlaneseq
    %v3373 = vshrl.u32 %v3372, 7
    %v3374 = vsub.s32 %v3371, %v3373
    %v3375 = vrot.slane %v3361, %v3374
    %v3376 = vcombine.high %v3158, 0.0
    %v3378 = vunpack.c.l.s4 1983009808
    %v3379 = vunpack.c.0.s8 %v3378
    %v3380 = vlaneseq
    %v3381 = vshrl.u32 %v3380, 7
    %v3382 = vsub.s32 %v3379, %v3381
    %v3383 = vrot.slane %v3158, %v3382
    %v3385 = vunpack.c.l.s4 1983009808
    %v3386 = vunpack.c.0.s8 %v3385
    %v3387 = vlaneseq
    %v3388 = vshrl.u32 %v3387, 7
    %v3389 = vsub.s32 %v3386, %v3388
    %v3390 = vrot.slane %v3376, %v3389
    %v3391 = vcombine.low %v3368, %v3383
    %v3392 = vcombine.high %v3368, %v3383
    %v3394 = vunpack.c.l.s4 1934713408
    %v3395 = vunpack.c.0.s8 %v3394
    %v3396 = vlaneseq
    %v3397 = vshrl.u32 %v3396, 7
    %v3398 = vsub.s32 %v3395, %v3397
    %v3399 = vrot.slane %v3391, %v3398
    %v3401 = vunpack.c.l.s4 1934713408
    %v3402 = vunpack.c.0.s8 %v3401
    %v3403 = vlaneseq
    %v3404 = vshrl.u32 %v3403, 7
    %v3405 = vsub.s32 %v3402, %v3404
    %v3406 = vrot.slane %v3392, %v3405
    %v3407 = vcombine.low %v3375, %v3390
    %v3408 = vcombine.high %v3375, %v3390
    %v3410 = vunpack.c.l.s4 1934713408
    %v3411 = vunpack.c.0.s8 %v3410
    %v3412 = vlaneseq
    %v3413 = vshrl.u32 %v3412, 7
    %v3414 = vsub.s32 %v3411, %v3413
    %v3415 = vrot.slane %v3407, %v3414
    %v3417 = vunpack.c.l.s4 1934713408
    %v3418 = vunpack.c.0.s8 %v3417
    %v3419 = vlaneseq
    %v3420 = vshrl.u32 %v3419, 7
    %v3421 = vsub.s32 %v3418, %v3420
    %v3422 = vrot.slane %v3408, %v3421
    %v3423 = vcombine.high %v3399, 0.0
    %v3424 = vcombine.high %v3406, 0.0
    %v3425 = vcombine.high %v3415, 0.0
    %v3426 = vcombine.high %v3422, 0.0
    %v3459 = vcombine.low %v3201, %v3225
    %v3460 = vcombine.low %v3208, %v3226
    %v3462 = vunpack.c.l.s4 1983009808
    %v3463 = vunpack.c.0.s8 %v3462
    %v3464 = vlaneseq
    %v3465 = vshrl.u32 %v3464, 7
    %v3466 = vsub.s32 %v3463, %v3465
    %v3467 = vrot.slane %v3459, %v3466
    %v3469 = vunpack.c.l.s4 1983009808
    %v3470 = vunpack.c.0.s8 %v3469
    %v3471 = vlaneseq
    %v3472 = vshrl.u32 %v3471, 7
    %v3473 = vsub.s32 %v3470, %v3472
    %v3474 = vrot.slane %v3460, %v3473
    %v3475 = vcombine.low %v3467, %v3474
    %v3476 = vcombine.low %v3217, %v3227
    %v3477 = vcombine.low %v3224, %v3228
    %v3479 = vunpack.c.l.s4 1983009808
    %v3480 = vunpack.c.0.s8 %v3479
    %v3481 = vlaneseq
    %v3482 = vshrl.u32 %v3481, 7
    %v3483 = vsub.s32 %v3480, %v3482
    %v3484 = vrot.slane %v3476, %v3483
    %v3486 = vunpack.c.l.s4 1983009808
    %v3487 = vunpack.c.0.s8 %v3486
    %v3488 = vlaneseq
    %v3489 = vshrl.u32 %v3488, 7
    %v3490 = vsub.s32 %v3487, %v3489
    %v3491 = vrot.slane %v3477, %v3490
    %v3492 = vcombine.low %v3484, %v3491
    %v3493 = vcombine.low %v3267, %v3291
    %v3494 = vcombine.low %v3274, %v3292
    %v3496 = vunpack.c.l.s4 1983009808
    %v3497 = vunpack.c.0.s8 %v3496
    %v3498 = vlaneseq
    %v3499 = vshrl.u32 %v3498, 7
    %v3500 = vsub.s32 %v3497, %v3499
    %v3501 = vrot.slane %v3493, %v3500
    %v3503 = vunpack.c.l.s4 1983009808
    %v3504 = vunpack.c.0.s8 %v3503
    %v3505 = vlaneseq
    %v3506 = vshrl.u32 %v3505, 7
    %v3507 = vsub.s32 %v3504, %v3506
    %v3508 = vrot.slane %v3494, %v3507
    %v3509 = vcombine.low %v3501, %v3508
    %v3510 = vcombine.low %v3283, %v3293
    %v3511 = vcombine.low %v3290, %v3294
    %v3513 = vunpack.c.l.s4 1983009808
    %v3514 = vunpack.c.0.s8 %v3513
    %v3515 = vlaneseq
    %v3516 = vshrl.u32 %v3515, 7
    %v3517 = vsub.s32 %v3514, %v3516
    %v3518 = vrot.slane %v3510, %v3517
    %v3520 = vunpack.c.l.s4 1983009808
    %v3521 = vunpack.c.0.s8 %v3520
    %v3522 = vlaneseq
    %v3523 = vshrl.u32 %v3522, 7
    %v3524 = vsub.s32 %v3521, %v3523
    %v3525 = vrot.slane %v3511, %v3524
    %v3526 = vcombine.low %v3518, %v3525
    %v3527 = vcombine.low %v3333, %v3357
    %v3528 = vcombine.low %v3340, %v3358
    %v3530 = vunpack.c.l.s4 1983009808
    %v3531 = vunpack.c.0.s8 %v3530
    %v3532 = vlaneseq
    %v3533 = vshrl.u32 %v3532, 7
    %v3534 = vsub.s32 %v3531, %v3533
    %v3535 = vrot.slane %v3527, %v3534
    %v3537 = vunpack.c.l.s4 1983009808
    %v3538 = vunpack.c.0.s8 %v3537
    %v3539 = vlaneseq
    %v3540 = vshrl.u32 %v3539, 7
    %v3541 = vsub.s32 %v3538, %v3540
    %v3542 = vrot.slane %v3528, %v3541
    %v3543 = vcombine.low %v3535, %v3542
    %v3544 = vcombine.low %v3349, %v3359
    %v3545 = vcombine.low %v3356, %v3360
    %v3547 = vunpack.c.l.s4 1983009808
    %v3548 = vunpack.c.0.s8 %v3547
    %v3549 = vlaneseq
    %v3550 = vshrl.u32 %v3549, 7
    %v3551 = vsub.s32 %v3548, %v3550
    %v3552 = vrot.slane %v3544, %v3551
    %v3554 = vunpack.c.l.s4 1983009808
    %v3555 = vunpack.c.0.s8 %v3554
    %v3556 = vlaneseq
    %v3557 = vshrl.u32 %v3556, 7
    %v3558 = vsub.s32 %v3555, %v3557
    %v3559 = vrot.slane %v3545, %v3558
    %v3560 = vcombine.low %v3552, %v3559
    %v3561 = vcombine.low %v3399, %v3423
    %v3562 = vcombine.low %v3406, %v3424
    %v3564 = vunpack.c.l.s4 1983009808
    %v3565 = vunpack.c.0.s8 %v3564
    %v3566 = vlaneseq
    %v3567 = vshrl.u32 %v3566, 7
    %v3568 = vsub.s32 %v3565, %v3567
    %v3569 = vrot.slane %v3561, %v3568
    %v3571 = vunpack.c.l.s4 1983009808
    %v3572 = vunpack.c.0.s8 %v3571
    %v3573 = vlaneseq
    %v3574 = vshrl.u32 %v3573, 7
    %v3575 = vsub.s32 %v3572, %v3574
    %v3576 = vrot.slane %v3562, %v3575
    %v3577 = vcombine.low %v3569, %v3576
    %v3578 = vcombine.low %v3415, %v3425
    %v3579 = vcombine.low %v3422, %v3426
    %v3581 = vunpack.c.l.s4 1983009808
    %v3582 = vunpack.c.0.s8 %v3581
    %v3583 = vlaneseq
    %v3584 = vshrl.u32 %v3583, 7
    %v3585 = vsub.s32 %v3582, %v3584
    %v3586 = vrot.slane %v3578, %v3585
    %v3588 = vunpack.c.l.s4 1983009808
    %v3589 = vunpack.c.0.s8 %v3588
    %v3590 = vlaneseq
    %v3591 = vshrl.u32 %v3590, 7
    %v3592 = vsub.s32 %v3589, %v3591
    %v3593 = vrot.slane %v3579, %v3592
    %v3594 = vcombine.low %v3586, %v3593
    %3603 = vxpose.xlu0.b32.start [1/16] %v3475, 128
    %3604 = vxpose.xlu0.b32.cont [2/16] %v3492, 128
    %3605 = vxpose.xlu0.b32.cont [3/16] %v3509, 128
    %3606 = vxpose.xlu0.b32.cont [4/16] %v3526, 128
    %3607 = vxpose.xlu0.b32.cont [5/16] %v3543, 128
    %3608 = vxpose.xlu0.b32.cont [6/16] %v3560, 128
    %3609 = vxpose.xlu0.b32.cont [7/16] %v3577, 128
    %3610 = vxpose.xlu0.b32.cont [8/16] %v3594, 128
    %3611 = vxpose.xlu0.b32.cont [9/16] 0.0, 128
    %3612 = vxpose.xlu0.b32.cont [10/16] 0.0, 128
    %3613 = vxpose.xlu0.b32.cont [11/16] 0.0, 128
    %3614 = vxpose.xlu0.b32.cont [12/16] 0.0, 128
    %3615 = vxpose.xlu0.b32.cont [13/16] 0.0, 128
    %3616 = vxpose.xlu0.b32.cont [14/16] 0.0, 128
    %3617 = vxpose.xlu0.b32.cont [15/16] 0.0, 128
    %3618 = vxpose.xlu0.b32.end [16/16] 0.0, 128
    %v3619 = vpop.trf.xlu0
    %v3620 = vpop.trf.xlu0
    %v3621 = vpop.trf.xlu0
    %v3622 = vpop.trf.xlu0
    %v3623 = vpop.trf.xlu0
    %v3624 = vpop.trf.xlu0
    %v3625 = vpop.trf.xlu0
    %v3626 = vpop.trf.xlu0
    %v3627 = vpop.trf.xlu0
    %v3628 = vpop.trf.xlu0
    %v3629 = vpop.trf.xlu0
    %v3630 = vpop.trf.xlu0
    %v3631 = vpop.trf.xlu0
    %v3632 = vpop.trf.xlu0
    %v3633 = vpop.trf.xlu0
    %v3634 = vpop.trf.xlu0
    %v3635 = vld [vmem:[%s5] sm:$0xff]
    %v3636 = vld [vmem:[%s5 + $0x8] sm:$0xff]
    %v3637 = vld [vmem:[%s5 + $0x10] sm:$0xff]
    %v3638 = vld [vmem:[%s5 + $0x18] sm:$0xff]
    %v3639 = vld [vmem:[%s5 + $0x20] sm:$0xff]
    %v3640 = vld [vmem:[%s5 + $0x28] sm:$0xff]
    %v3641 = vld [vmem:[%s5 + $0x30] sm:$0xff]
    %v3642 = vld [vmem:[%s5 + $0x38] sm:$0xff]
    %v3643 = vld [vmem:[%s6] sm:$0x1]
    %v3645 = vlaneseq
    %v3646 = vshrl.u32 %v3645, 7
    %v3647 = vsub.s32 0, %v3646
    %v3648 = vrot.slane %v3643, %v3647
    %vm3650 = vcmask 523264
    %v3652 = vsel %vm3650, %v1939, 0
    %v3655 = vsel %vm3650, %v1940, 0
    %v3658 = vsel %vm3650, %v3619, 0
    %v3661 = vsel %vm3650, %v3620, 0
    %3663 = vmatprep.subr.mxu0 0.0
    %3664 = vmatpush1.msra.mxu0 0.0
    %3665 = vmatprep.subr.mxu0 0.0
    %3666 = vmatpush1.msra.mxu0 0.0
    %3667 = vmatprep.subr.mxu0 0.0
    %3668 = vmatpush1.msra.mxu0 0.0
    %3669 = vmatprep.subr.mxu0 0.0
    %3670 = vmatpush1.msra.mxu0 0.0
    %3671 = vmatprep.subr.mxu0 0.0
    %3672 = vmatpush1.msra.mxu0 0.0
    %3673 = vmatprep.subr.mxu0 0.0
    %3674 = vmatpush1.msra.mxu0 0.0
    %3675 = vmatprep.subr.mxu0 0.0
    %3676 = vmatpush1.msra.mxu0 0.0
    %3677 = vmatprep.subr.mxu0 0.0
    %3678 = vmatpush1.msra.mxu0 0.0
    %3679 = vmatprep.subr.mxu0 0.0
    %3680 = vmatpush1.msra.mxu0 %v3642
    %3681 = vmatprep.subr.mxu0 0.0
    %3682 = vmatpush1.msra.mxu0 %v3641
    %3683 = vmatprep.subr.mxu0 0.0
    %3684 = vmatpush1.msra.mxu0 %v3640
    %3685 = vmatprep.subr.mxu0 0.0
    %3686 = vmatpush1.msra.mxu0 %v3639
    %3687 = vmatprep.subr.mxu0 0.0
    %3688 = vmatpush1.msra.mxu0 %v3638
    %3689 = vmatprep.subr.mxu0 0.0
    %3690 = vmatpush1.msra.mxu0 %v3637
    %3691 = vmatprep.subr.mxu0 0.0
    %3692 = vmatpush1.msra.mxu0 %v3636
    %3693 = vmatprep.subr.mxu0 0.0
    %3694 = vmatpush1.msra.mxu0 %v3635
    %3695 = vmatprep.subr.mxu0 0.0
    %3696 = vmatpush2.msra.mxu0 0.0
    %3697 = vmatprep.subr.mxu0 0.0
    %3698 = vmatpush2.msra.mxu0 0.0
    %3699 = vmatprep.subr.mxu0 0.0
    %3700 = vmatpush2.msra.mxu0 0.0
    %3701 = vmatprep.subr.mxu0 0.0
    %3702 = vmatpush2.msra.mxu0 0.0
    %3703 = vmatprep.subr.mxu0 0.0
    %3704 = vmatpush2.msra.mxu0 0.0
    %3705 = vmatprep.subr.mxu0 0.0
    %3706 = vmatpush2.msra.mxu0 0.0
    %3707 = vmatprep.subr.mxu0 0.0
    %3708 = vmatpush2.msra.mxu0 0.0
    %3709 = vmatprep.subr.mxu0 0.0
    %3710 = vmatpush2.msra.mxu0 0.0
    %3711 = vmatprep.subr.mxu0 0.0
    %3712 = vmatpush2.msra.mxu0 0.0
    %3713 = vmatprep.subr.mxu0 0.0
    %3714 = vmatpush2.msra.mxu0 0.0
    %3715 = vmatprep.subr.mxu0 0.0
    %3716 = vmatpush2.msra.mxu0 0.0
    %3717 = vmatprep.subr.mxu0 0.0
    %3718 = vmatpush2.msra.mxu0 0.0
    %3719 = vmatprep.subr.mxu0 0.0
    %3720 = vmatpush2.msra.mxu0 0.0
    %3721 = vmatprep.subr.mxu0 0.0
    %3722 = vmatpush2.msra.mxu0 0.0
    %3723 = vmatprep.subr.mxu0 0.0
    %3724 = vmatpush2.msra.mxu0 0.0
    %3725 = vmatprep.subr.mxu0 0.0
    %3726 = vmatpush2.msra.mxu0 0.0
    %3727 = vmatprep.mubr.f32.mxu0 0.0
    %3728 = vmatmul.mubr.f32.gmra.mxu0 %v3652
    %v3729 = vpop.f32.mrf.mxu0
    %v3730 = vadd.f32 %v3648, %v3729
    %v3731 = vpop.f32.mrf.mxu0
    %3732 = vmatprep.mubr.f32.mxu0 0.0
    %3733 = vmatmul.mubr.f32.gmra.mxu0 %v3655
    %v3734 = vpop.f32.mrf.mxu0
    %v3735 = vadd.f32 %v3648, %v3734
    %v3736 = vpop.f32.mrf.mxu0
    %3737 = vmatprep.mubr.f32.mxu0 0.0
    %3738 = vmatmul.mubr.f32.gmra.mxu0 %v3658
    %v3739 = vpop.f32.mrf.mxu0
    %v3740 = vadd.f32 %v3648, %v3739
    %v3741 = vpop.f32.mrf.mxu0
    %3742 = vmatprep.mubr.f32.mxu0 0.0
    %3743 = vmatmul.mubr.f32.gmra.mxu0 %v3661
    %v3744 = vpop.f32.mrf.mxu0
    %v3745 = vadd.f32 %v3648, %v3744
    %v3746 = vpop.f32.mrf.mxu0
    %3747 = vdwg.mxu0
    %v3748 = vadd.f32 %v97, %v3730
    %v3749 = vadd.f32 %v98, %v3735
    %v3750 = vadd.f32 %v99, %v3740
    %v3751 = vadd.f32 %v100, %v3745
    %v3752 = vmul.f32 %v3748, %v3748
    %v3753 = vmul.f32 %v3749, %v3749
    %v3754 = vmul.f32 %v3750, %v3750
    %v3755 = vmul.f32 %v3751, %v3751
    %3756 = vadd.xlane.f32.xlu0 %v3752
    %v3757 = vpop.xlane.xlu0 %3756
    %3758 = vadd.xlane.f32.xlu0 %v3753
    %v3759 = vpop.xlane.xlu0 %3758
    %3760 = vadd.xlane.f32.xlu0 %v3754
    %v3761 = vpop.xlane.xlu0 %3760
    %3762 = vadd.xlane.f32.xlu0 %v3755
    %v3763 = vpop.xlane.xlu0 %3762
    %v3764 = vmul.f32 %v3757, 0.015625
    %v3765 = vmul.f32 %v3759, 0.015625
    %v3766 = vmul.f32 %v3761, 0.015625
    %v3767 = vmul.f32 %v3763, 0.015625
    %v3768 = vadd.f32 %v3764, 1e-06
    %v3769 = vadd.f32 %v3765, 1e-06
    %v3770 = vadd.f32 %v3766, 1e-06
    %v3771 = vadd.f32 %v3767, 1e-06
    %v3772 = vrsqrt.pop %v3768
    %v3773 = vrsqrt.pop %v3769
    %v3774 = vrsqrt.pop %v3770
    %v3775 = vrsqrt.pop %v3771
    %v3776 = vld [vmem:[%s7] sm:$0x1]
    %v3777 = vmul.f32 %v3748, %v3772
    %v3778 = vmul.f32 %v3749, %v3773
    %v3779 = vmul.f32 %v3750, %v3774
    %v3780 = vmul.f32 %v3751, %v3775
    %v3782 = vlaneseq
    %v3783 = vshrl.u32 %v3782, 7
    %v3784 = vsub.s32 0, %v3783
    %v3785 = vrot.slane %v3776, %v3784
    %v3787 = vmul.f32 %v3785, %v3777
    %v3788 = vmul.f32 %v3785, %v3778
    %v3789 = vmul.f32 %v3785, %v3779
    %v3790 = vmul.f32 %v3785, %v3780
    %v3791 = vld [vmem:[#allocation7] sm:$0xff]
    %v3792 = vld [vmem:[#allocation7 + $0x8] sm:$0xff]
    %v3793 = vld [vmem:[#allocation7 + $0x10] sm:$0xff]
    %v3794 = vld [vmem:[#allocation7 + $0x18] sm:$0xff]
    %v3795 = vld [vmem:[#allocation7 + $0x20] sm:$0xff]
    %v3796 = vld [vmem:[#allocation7 + $0x28] sm:$0xff]
    %v3797 = vld [vmem:[#allocation7 + $0x30] sm:$0xff]
    %v3798 = vld [vmem:[#allocation7 + $0x38] sm:$0xff]
    %v3799 = vld [vmem:[#allocation7 + $0x40] sm:$0xff]
    %v3800 = vld [vmem:[#allocation7 + $0x48] sm:$0xff]
    %v3801 = vld [vmem:[#allocation7 + $0x50] sm:$0xff]
    %v3802 = vld [vmem:[#allocation7 + $0x58] sm:$0xff]
    %v3803 = vld [vmem:[#allocation7 + $0x60] sm:$0xff]
    %v3804 = vld [vmem:[#allocation7 + $0x68] sm:$0xff]
    %v3805 = vld [vmem:[#allocation7 + $0x70] sm:$0xff]
    %v3806 = vld [vmem:[#allocation7 + $0x78] sm:$0xff]
    %v3807 = vld [vmem:[%s9] sm:$0x1]
    %v3809 = vlaneseq
    %v3810 = vshrl.u32 %v3809, 7
    %v3811 = vsub.s32 0, %v3810
    %v3812 = vrot.slane %v3807, %v3811
    %3814 = vmatprep.subr.mxu0 0.0
    %3815 = vmatpush1.msra.mxu0 %v3806
    %3816 = vmatprep.subr.mxu0 0.0
    %3817 = vmatpush1.msra.mxu0 %v3805
    %3818 = vmatprep.subr.mxu0 0.0
    %3819 = vmatpush1.msra.mxu0 %v3804
    %3820 = vmatprep.subr.mxu0 0.0
    %3821 = vmatpush1.msra.mxu0 %v3803
    %3822 = vmatprep.subr.mxu0 0.0
    %3823 = vmatpush1.msra.mxu0 %v3802
    %3824 = vmatprep.subr.mxu0 0.0
    %3825 = vmatpush1.msra.mxu0 %v3801
    %3826 = vmatprep.subr.mxu0 0.0
    %3827 = vmatpush1.msra.mxu0 %v3800
    %3828 = vmatprep.subr.mxu0 0.0
    %3829 = vmatpush1.msra.mxu0 %v3799
    %3830 = vmatprep.subr.mxu0 0.0
    %3831 = vmatpush1.msra.mxu0 %v3798
    %3832 = vmatprep.subr.mxu0 0.0
    %3833 = vmatpush1.msra.mxu0 %v3797
    %3834 = vmatprep.subr.mxu0 0.0
    %3835 = vmatpush1.msra.mxu0 %v3796
    %3836 = vmatprep.subr.mxu0 0.0
    %3837 = vmatpush1.msra.mxu0 %v3795
    %3838 = vmatprep.subr.mxu0 0.0
    %3839 = vmatpush1.msra.mxu0 %v3794
    %3840 = vmatprep.subr.mxu0 0.0
    %3841 = vmatpush1.msra.mxu0 %v3793
    %3842 = vmatprep.subr.mxu0 0.0
    %3843 = vmatpush1.msra.mxu0 %v3792
    %3844 = vmatprep.subr.mxu0 0.0
    %3845 = vmatpush1.msra.mxu0 %v3791
    %3846 = vmatprep.subr.mxu0 0.0
    %3847 = vmatpush2.msra.mxu0 0.0
    %3848 = vmatprep.subr.mxu0 0.0
    %3849 = vmatpush2.msra.mxu0 0.0
    %3850 = vmatprep.subr.mxu0 0.0
    %3851 = vmatpush2.msra.mxu0 0.0
    %3852 = vmatprep.subr.mxu0 0.0
    %3853 = vmatpush2.msra.mxu0 0.0
    %3854 = vmatprep.subr.mxu0 0.0
    %3855 = vmatpush2.msra.mxu0 0.0
    %3856 = vmatprep.subr.mxu0 0.0
    %3857 = vmatpush2.msra.mxu0 0.0
    %3858 = vmatprep.subr.mxu0 0.0
    %3859 = vmatpush2.msra.mxu0 0.0
    %3860 = vmatprep.subr.mxu0 0.0
    %3861 = vmatpush2.msra.mxu0 0.0
    %3862 = vmatprep.subr.mxu0 0.0
    %3863 = vmatpush2.msra.mxu0 0.0
    %3864 = vmatprep.subr.mxu0 0.0
    %3865 = vmatpush2.msra.mxu0 0.0
    %3866 = vmatprep.subr.mxu0 0.0
    %3867 = vmatpush2.msra.mxu0 0.0
    %3868 = vmatprep.subr.mxu0 0.0
    %3869 = vmatpush2.msra.mxu0 0.0
    %3870 = vmatprep.subr.mxu0 0.0
    %3871 = vmatpush2.msra.mxu0 0.0
    %3872 = vmatprep.subr.mxu0 0.0
    %3873 = vmatpush2.msra.mxu0 0.0
    %3874 = vmatprep.subr.mxu0 0.0
    %3875 = vmatpush2.msra.mxu0 0.0
    %3876 = vmatprep.subr.mxu0 0.0
    %3877 = vmatpush2.msra.mxu0 0.0
    %3878 = vmatprep.mubr.f32.mxu0 0.0
    %3879 = vmatmul.mubr.f32.gmra.mxu0 %v3787
    %v3880 = vpop.f32.mrf.mxu0
    %v3881 = vadd.f32 %v3812, %v3880
    %v3882 = vpop.f32.mrf.mxu0
    %3883 = vmatprep.mubr.f32.mxu0 0.0
    %3884 = vmatmul.mubr.f32.gmra.mxu0 %v3788
    %v3885 = vpop.f32.mrf.mxu0
    %v3886 = vadd.f32 %v3812, %v3885
    %v3887 = vpop.f32.mrf.mxu0
    %3888 = vmatprep.mubr.f32.mxu0 0.0
    %3889 = vmatmul.mubr.f32.gmra.mxu0 %v3789
    %v3890 = vpop.f32.mrf.mxu0
    %v3891 = vadd.f32 %v3812, %v3890
    %v3892 = vpop.f32.mrf.mxu0
    %3893 = vmatprep.mubr.f32.mxu0 0.0
    %3894 = vmatmul.mubr.f32.gmra.mxu0 %v3790
    %v3895 = vpop.f32.mrf.mxu0
    %v3896 = vadd.f32 %v3812, %v3895
    %v3897 = vpop.f32.mrf.mxu0
    %3898 = vdwg.mxu0
    %v3899 = vmul.f32 %v3881, 0.5
    %v3900 = vmul.f32 %v3886, 0.5
    %v3901 = vmul.f32 %v3891, 0.5
    %v3902 = vmul.f32 %v3896, 0.5
    %v3903 = vmul.f32 %v3881, 0.70710677
    %v3904 = vmul.f32 %v3886, 0.70710677
    %v3905 = vmul.f32 %v3891, 0.70710677
    %v3906 = vmul.f32 %v3896, 0.70710677
    %v3907 = verf.f32.pop %v3903
    %v3908 = verf.f32.pop %v3904
    %v3909 = verf.f32.pop %v3905
    %v3910 = verf.f32.pop %v3906
    %v3911 = vadd.f32 %v3907, 1.0
    %v3912 = vadd.f32 %v3908, 1.0
    %v3913 = vadd.f32 %v3909, 1.0
    %v3914 = vadd.f32 %v3910, 1.0
    %v3915 = vmul.f32 %v3899, %v3911
    %v3916 = vmul.f32 %v3900, %v3912
    %v3917 = vmul.f32 %v3901, %v3913
    %v3918 = vmul.f32 %v3902, %v3914
    %v3919 = vld [vmem:[#allocation8] sm:$0xff]
    %v3920 = vld [vmem:[#allocation8 + $0x8] sm:$0xff]
    %v3921 = vld [vmem:[#allocation8 + $0x10] sm:$0xff]
    %v3922 = vld [vmem:[#allocation8 + $0x18] sm:$0xff]
    %v3923 = vld [vmem:[#allocation8 + $0x20] sm:$0xff]
    %v3924 = vld [vmem:[#allocation8 + $0x28] sm:$0xff]
    %v3925 = vld [vmem:[#allocation8 + $0x30] sm:$0xff]
    %v3926 = vld [vmem:[#allocation8 + $0x38] sm:$0xff]
    %v3927 = vld [vmem:[#allocation8 + $0x40] sm:$0xff]
    %v3928 = vld [vmem:[#allocation8 + $0x48] sm:$0xff]
    %v3929 = vld [vmem:[#allocation8 + $0x50] sm:$0xff]
    %v3930 = vld [vmem:[#allocation8 + $0x58] sm:$0xff]
    %v3931 = vld [vmem:[#allocation8 + $0x60] sm:$0xff]
    %v3932 = vld [vmem:[#allocation8 + $0x68] sm:$0xff]
    %v3933 = vld [vmem:[#allocation8 + $0x70] sm:$0xff]
    %v3934 = vld [vmem:[#allocation8 + $0x78] sm:$0xff]
    %v3935 = vld [vmem:[%s11] sm:$0x1]
    %v3937 = vlaneseq
    %v3938 = vshrl.u32 %v3937, 7
    %v3939 = vsub.s32 0, %v3938
    %v3940 = vrot.slane %v3935, %v3939
    %3942 = vmatprep.subr.mxu0 0.0
    %3943 = vmatpush1.msra.mxu0 %v3934
    %3944 = vmatprep.subr.mxu0 0.0
    %3945 = vmatpush1.msra.mxu0 %v3933
    %3946 = vmatprep.subr.mxu0 0.0
    %3947 = vmatpush1.msra.mxu0 %v3932
    %3948 = vmatprep.subr.mxu0 0.0
    %3949 = vmatpush1.msra.mxu0 %v3931
    %3950 = vmatprep.subr.mxu0 0.0
    %3951 = vmatpush1.msra.mxu0 %v3930
    %3952 = vmatprep.subr.mxu0 0.0
    %3953 = vmatpush1.msra.mxu0 %v3929
    %3954 = vmatprep.subr.mxu0 0.0
    %3955 = vmatpush1.msra.mxu0 %v3928
    %3956 = vmatprep.subr.mxu0 0.0
    %3957 = vmatpush1.msra.mxu0 %v3927
    %3958 = vmatprep.subr.mxu0 0.0
    %3959 = vmatpush1.msra.mxu0 %v3926
    %3960 = vmatprep.subr.mxu0 0.0
    %3961 = vmatpush1.msra.mxu0 %v3925
    %3962 = vmatprep.subr.mxu0 0.0
    %3963 = vmatpush1.msra.mxu0 %v3924
    %3964 = vmatprep.subr.mxu0 0.0
    %3965 = vmatpush1.msra.mxu0 %v3923
    %3966 = vmatprep.subr.mxu0 0.0
    %3967 = vmatpush1.msra.mxu0 %v3922
    %3968 = vmatprep.subr.mxu0 0.0
    %3969 = vmatpush1.msra.mxu0 %v3921
    %3970 = vmatprep.subr.mxu0 0.0
    %3971 = vmatpush1.msra.mxu0 %v3920
    %3972 = vmatprep.subr.mxu0 0.0
    %3973 = vmatpush1.msra.mxu0 %v3919
    %3974 = vmatprep.subr.mxu0 0.0
    %3975 = vmatpush2.msra.mxu0 0.0
    %3976 = vmatprep.subr.mxu0 0.0
    %3977 = vmatpush2.msra.mxu0 0.0
    %3978 = vmatprep.subr.mxu0 0.0
    %3979 = vmatpush2.msra.mxu0 0.0
    %3980 = vmatprep.subr.mxu0 0.0
    %3981 = vmatpush2.msra.mxu0 0.0
    %3982 = vmatprep.subr.mxu0 0.0
    %3983 = vmatpush2.msra.mxu0 0.0
    %3984 = vmatprep.subr.mxu0 0.0
    %3985 = vmatpush2.msra.mxu0 0.0
    %3986 = vmatprep.subr.mxu0 0.0
    %3987 = vmatpush2.msra.mxu0 0.0
    %3988 = vmatprep.subr.mxu0 0.0
    %3989 = vmatpush2.msra.mxu0 0.0
    %3990 = vmatprep.subr.mxu0 0.0
    %3991 = vmatpush2.msra.mxu0 0.0
    %3992 = vmatprep.subr.mxu0 0.0
    %3993 = vmatpush2.msra.mxu0 0.0
    %3994 = vmatprep.subr.mxu0 0.0
    %3995 = vmatpush2.msra.mxu0 0.0
    %3996 = vmatprep.subr.mxu0 0.0
    %3997 = vmatpush2.msra.mxu0 0.0
    %3998 = vmatprep.subr.mxu0 0.0
    %3999 = vmatpush2.msra.mxu0 0.0
    %4000 = vmatprep.subr.mxu0 0.0
    %4001 = vmatpush2.msra.mxu0 0.0
    %4002 = vmatprep.subr.mxu0 0.0
    %4003 = vmatpush2.msra.mxu0 0.0
    %4004 = vmatprep.subr.mxu0 0.0
    %4005 = vmatpush2.msra.mxu0 0.0
    %4006 = vmatprep.mubr.f32.mxu0 0.0
    %4007 = vmatmul.mubr.f32.gmra.mxu0 %v3915
    %v4008 = vpop.f32.mrf.mxu0
    %v4009 = vadd.f32 %v3940, %v4008
    %v4010 = vpop.f32.mrf.mxu0
    %4011 = vmatprep.mubr.f32.mxu0 0.0
    %4012 = vmatmul.mubr.f32.gmra.mxu0 %v3916
    %v4013 = vpop.f32.mrf.mxu0
    %v4014 = vadd.f32 %v3940, %v4013
    %v4015 = vpop.f32.mrf.mxu0
    %4016 = vmatprep.mubr.f32.mxu0 0.0
    %4017 = vmatmul.mubr.f32.gmra.mxu0 %v3917
    %v4018 = vpop.f32.mrf.mxu0
    %v4019 = vadd.f32 %v3940, %v4018
    %v4020 = vpop.f32.mrf.mxu0
    %4021 = vmatprep.mubr.f32.mxu0 0.0
    %4022 = vmatmul.mubr.f32.gmra.mxu0 %v3918
    %v4023 = vpop.f32.mrf.mxu0
    %v4024 = vadd.f32 %v3940, %v4023
    %v4025 = vpop.f32.mrf.mxu0
    %4026 = vdwg.mxu0
    %v4027 = vadd.f32 %v3748, %v4009
    %v4028 = vadd.f32 %v3749, %v4014
    %v4029 = vadd.f32 %v3750, %v4019
    %v4030 = vadd.f32 %v3751, %v4024
    %4031 = vst [vmem:[#allocation10] sm:$0xff] %v4027
    %4032 = vst [vmem:[#allocation10 + $0x8] sm:$0xff] %v4028
    %4033 = vst [vmem:[#allocation10 + $0x10] sm:$0xff] %v4029
    %4034 = vst [vmem:[#allocation10 + $0x18] sm:$0xff] %v4030
    // Predicated region
    $region66: #{forward.1} parent=1 // pred_check
      _
    $region67: #{forward.1} parent=1 // pred_check_branch
      %4036 = sbr.rel (0) target = $region69
    $region68: #{forward.1} parent=1 // pred_region
      %s4038 = ssub.s32 512, 512
      %4039 = vsyncadd [#allocation4], %s4038
      %s4040 = sshll.u32 [#allocation10], 4
      %s4041 = int_to_ptr.vmem [resolvable:$true] %s4040
      %4046 = dma.vmem_to_hbm [thread:$0]  %s4041, 512, %s12, [#allocation4], 128, 128, 8
    $region69: #{forward.1} parent=1 // pred_fallthru
      _
    // Predicated region
    $region70: #{forward.1} parent=1 // pred_check
      _
    $region71: #{forward.1} parent=1 // pred_check_branch
      %4048 = sbr.rel (0) target = $region73
    $region72: #{forward.1} parent=1 // pred_region
      %4049 = dma.done [#allocation4], 512
    $region73: #{forward.1} parent=1 // pred_fallthru
      _
    %4050 = vsyncpa [#allocation3], 1
    %4051 = vsyncpa [#allocation6], 1
    %4052 = vsyncpa [#allocation9], 1
    %4053 = vsyncpa [#allocation4], 1

</llo_original>
